<compile_context>
chip_gen: v6e
topology: v6e:2x2x1
jax: 0.10.0
libtpu: 0.0.40
codegen_flags: <defaults>
</compile_context>

<pallas_src>
import functools

import jax
import jax.numpy as jnp
from jax.experimental import pallas as pl
from jax.experimental.pallas import tpu as pltpu


def _conv_bn_act_upsample_kernel(x_ref, w_ref, u_ref, b_ref, o_ref):
    """Fused 1x1 conv + BN(folded) + LeakyReLU + 2x nearest upsample.

    x_ref: (C_in, th, W)       input rows for this block (NCHW native)
    w_ref: (C_out, C_in)       conv weight with BN scale folded in
    u_ref: (W, 2W)             one-hot nearest-neighbor W-duplication matrix
    b_ref: (C_out, 1)          folded BN bias (f32)
    o_ref: (C_out, 2*th, 2*W)  upsampled output rows for this block
    """
    w = w_ref[...]
    u = u_ref[...]
    b = b_ref[...]
    th = x_ref.shape[1]
    for r in range(th):                                   # static unroll over rows
        xr = x_ref[:, r, :]                               # (C_in, W)
        y = jnp.dot(w, xr, preferred_element_type=jnp.float32)   # (C_out, W)
        y = y + b                                          # folded BN bias
        y = jnp.where(y > 0, y, 0.1 * y)                   # LeakyReLU(0.1)
        yu = jnp.dot(y, u, preferred_element_type=jnp.float32)   # (C_out, 2W) W-dup
        yu = yu.astype(o_ref.dtype)
        o_ref[:, 2 * r, :] = yu                            # H-dup: write row twice
        o_ref[:, 2 * r + 1, :] = yu


def _pick_row_tile(H):
    """Largest multiple-of-8 divisor of H (capped) so block sublane dims are legal."""
    for th in (32, 24, 16, 8):
        if H % th == 0:
            return th
    return H  # fall back to full H (block dim == full array dim is always legal)


def upsample_modules_forward(x_nchw, params):
    """Full forward pass matching the PyTorch module. x_nchw: (N, C_in, H, W) -> (N, C_in//2, 2H, 2W)."""
    N, C_in, H, W = x_nchw.shape
    w_conv = params["conv_w"]            # (C_out, C_in, 1, 1) -- PyTorch layout
    gamma = params["bn_gamma"]
    beta = params["bn_beta"]
    mean = params["bn_mean"]
    var = params["bn_var"]
    eps = 1e-5
    C_out = w_conv.shape[0]

    # Fold BN (eval mode) into the conv weight + a bias.
    scale = gamma / jnp.sqrt(var + eps)                            # (C_out,)
    bias = (beta - mean * scale).reshape(C_out, 1).astype(jnp.float32)
    w_folded = (w_conv[:, :, 0, 0] * scale[:, None]).astype(x_nchw.dtype)  # (C_out, C_in)

    # One-hot nearest-neighbor duplication matrix along W: dup[i, 2i] = dup[i, 2i+1] = 1.
    dup = jnp.repeat(jnp.eye(W, dtype=jnp.float32), 2, axis=1)     # (W, 2W)

    th = _pick_row_tile(H)
    grid = (N, H // th)

    return pl.pallas_call(
        _conv_bn_act_upsample_kernel,
        out_shape=jax.ShapeDtypeStruct((N, C_out, 2 * H, 2 * W), x_nchw.dtype),
        grid_spec=pltpu.PrefetchScalarGridSpec(
            num_scalar_prefetch=0,
            grid=grid,
            in_specs=[
                pl.BlockSpec((None, C_in, th, W), lambda n, h: (n, 0, h, 0)),
                pl.BlockSpec((C_out, C_in), lambda n, h: (0, 0)),      # resident
                pl.BlockSpec((W, 2 * W), lambda n, h: (0, 0)),         # resident
                pl.BlockSpec((C_out, 1), lambda n, h: (0, 0)),         # resident
            ],
            out_specs=pl.BlockSpec((None, C_out, 2 * th, 2 * W),
                                   lambda n, h: (n, 0, h, 0)),
        ),
        compiler_params=pltpu.CompilerParams(
            dimension_semantics=("parallel", "parallel")),
    )(x_nchw, w_folded, dup, bias)


def init_params(key, in_channels):
    out_channels = in_channels // 2
    k_w, k_g, k_b, k_m, k_v = jax.random.split(key, 5)
    return {
        "conv_w": jax.random.normal(k_w, (out_channels, in_channels, 1, 1),
                                    jnp.float32) * 0.1,
        "bn_gamma": 1.0 + 0.1 * jax.random.normal(k_g, (out_channels,), jnp.float32),
        "bn_beta": 0.1 * jax.random.normal(k_b, (out_channels,), jnp.float32),
        "bn_mean": 0.1 * jax.random.normal(k_m, (out_channels,), jnp.float32),
        "bn_var": jnp.abs(jax.random.normal(k_v, (out_channels,), jnp.float32)) + 0.5,
    }


if __name__ == "__main__":
    key = jax.random.PRNGKey(0)
    k_x, k_p = jax.random.split(key)

    N, C_in, H, W = 2, 4, 16, 16
    x = jax.random.normal(k_x, (N, C_in, H, W), jnp.float32)
    params = init_params(k_p, C_in)

    fwd = jax.jit(functools.partial(upsample_modules_forward, params=params))
    out = jax.block_until_ready(fwd(x))

    assert out.shape == (N, C_in // 2, 2 * H, 2 * W), out.shape

    # Pure-JAX reference (unfused math) for a numerical sanity check.
    w_mat = params["conv_w"][:, :, 0, 0]                              # (C_out, C_in)
    scale = params["bn_gamma"] / jnp.sqrt(params["bn_var"] + 1e-5)
    bias = params["bn_beta"] - params["bn_mean"] * scale
    y_ref = jnp.einsum("oc,nchw->nohw", w_mat, x,
                       precision=jax.lax.Precision.HIGHEST)
    y_ref = y_ref * scale[None, :, None, None] + bias[None, :, None, None]
    y_ref = jnp.where(y_ref > 0, y_ref, 0.1 * y_ref)
    y_ref = jnp.repeat(jnp.repeat(y_ref, 2, axis=2), 2, axis=3)
    assert jnp.allclose(out, y_ref, atol=1e-4, rtol=1e-4)

    print("KERNEL_OK")
</pallas_src>

<mosaic_0001>
module attributes {stable_mosaic.version = 11 : i64} {
  func.func @_conv_bn_act_upsample_kernel(%arg0: i32, %arg1: i32, %arg2: memref<1x4x16x16xf32, #tpu.memory_space<vmem>>, %arg3: memref<2x4xf32, #tpu.memory_space<vmem>>, %arg4: memref<16x32xf32, #tpu.memory_space<vmem>>, %arg5: memref<2x1xf32, #tpu.memory_space<vmem>>, %arg6: memref<1x2x32x32xf32, #tpu.memory_space<vmem>>) attributes {dimension_semantics = [#tpu.dimension_semantics<parallel>, #tpu.dimension_semantics<parallel>], iteration_bounds = array<i64: 2, 1>, scalar_prefetch = 0 : i64, scratch_operands = 0 : i64, tpu.core_type = #tpu.core_type<tc>, window_params = [{transform_indices = @transform_0, window_bounds = array<i64: 1, 4, 16, 16>}, {pipeline_mode = #tpu.pipeline_mode<synchronous>, transform_indices = @transform_1, window_bounds = array<i64: 2, 4>}, {pipeline_mode = #tpu.pipeline_mode<synchronous>, transform_indices = @transform_2, window_bounds = array<i64: 16, 32>}, {pipeline_mode = #tpu.pipeline_mode<synchronous>, transform_indices = @transform_3, window_bounds = array<i64: 2, 1>}, {transform_indices = @transform_4, window_bounds = array<i64: 1, 2, 32, 32>}]} {
    %c0 = arith.constant 0 : index
    %c0_0 = arith.constant 0 : index
    %0 = vector.load %arg3[%c0, %c0_0] : memref<2x4xf32, #tpu.memory_space<vmem>>, vector<2x4xf32>
    %c0_1 = arith.constant 0 : index
    %c0_2 = arith.constant 0 : index
    %1 = vector.load %arg4[%c0_1, %c0_2] : memref<16x32xf32, #tpu.memory_space<vmem>>, vector<16x32xf32>
    %c0_3 = arith.constant 0 : index
    %c0_4 = arith.constant 0 : index
    %2 = vector.load %arg5[%c0_3, %c0_4] : memref<2x1xf32, #tpu.memory_space<vmem>>, vector<2x1xf32>
    %c0_5 = arith.constant 0 : index
    %c0_6 = arith.constant 0 : index
    %c0_7 = arith.constant 0 : index
    %c0_8 = arith.constant 0 : index
    %3 = vector.load %arg2[%c0_5, %c0_6, %c0_7, %c0_8] : memref<1x4x16x16xf32, #tpu.memory_space<vmem>>, vector<1x4x1x16xf32>
    %4 = vector.shape_cast %3 : vector<1x4x1x16xf32> to vector<4x16xf32>
    %cst = arith.constant dense<0.000000e+00> : vector<2x16xf32>
    %5 = tpu.matmul %0, %4, %cst {dimension_numbers = #tpu.dot_dimension_numbers<[1], [0], [0], [1], [0, 0, 1, 1], [], []>} : vector<2x4xf32>, vector<4x16xf32>, vector<2x16xf32> -> vector<2x16xf32>
    %6 = vector.broadcast %2 : vector<2x1xf32> to vector<2x16xf32>
    %7 = arith.addf %5, %6 : vector<2x16xf32>
    %cst_9 = arith.constant 0.000000e+00 : f32
    %8 = vector.broadcast %cst_9 : f32 to vector<2x16xf32>
    %9 = arith.cmpf ogt, %7, %8 : vector<2x16xf32>
    %cst_10 = arith.constant 1.000000e-01 : f32
    %10 = vector.broadcast %cst_10 : f32 to vector<2x16xf32>
    %11 = arith.mulf %10, %7 : vector<2x16xf32>
    %12 = arith.select %9, %7, %11 : vector<2x16xi1>, vector<2x16xf32>
    %cst_11 = arith.constant dense<0.000000e+00> : vector<2x32xf32>
    %13 = tpu.matmul %12, %1, %cst_11 {dimension_numbers = #tpu.dot_dimension_numbers<[1], [0], [0], [1], [0, 0, 1, 1], [], []>} : vector<2x16xf32>, vector<16x32xf32>, vector<2x32xf32> -> vector<2x32xf32>
    %c0_12 = arith.constant 0 : index
    %c0_13 = arith.constant 0 : index
    %c0_14 = arith.constant 0 : index
    %c0_15 = arith.constant 0 : index
    %14 = vector.load %arg6[%c0_12, %c0_13, %c0_14, %c0_15] : memref<1x2x32x32xf32, #tpu.memory_space<vmem>>, vector<1x2x1x32xf32>
    %15 = vector.shape_cast %14 : vector<1x2x1x32xf32> to vector<2x32xf32>
    %16 = vector.shape_cast %13 : vector<2x32xf32> to vector<1x2x1x32xf32>
    tpu.vector_store %arg6[%c0_12, %c0_13, %c0_14, %c0_15], %16 {strides = array<i32>} : memref<1x2x32x32xf32, #tpu.memory_space<vmem>>, vector<1x2x1x32xf32>,
    %c0_16 = arith.constant 0 : index
    %c0_17 = arith.constant 0 : index
    %c1 = arith.constant 1 : index
    %c0_18 = arith.constant 0 : index
    %17 = vector.load %arg6[%c0_16, %c0_17, %c1, %c0_18] : memref<1x2x32x32xf32, #tpu.memory_space<vmem>>, vector<1x2x1x32xf32>
    %18 = vector.shape_cast %17 : vector<1x2x1x32xf32> to vector<2x32xf32>
    %19 = vector.shape_cast %13 : vector<2x32xf32> to vector<1x2x1x32xf32>
    tpu.vector_store %arg6[%c0_16, %c0_17, %c1, %c0_18], %19 {strides = array<i32>} : memref<1x2x32x32xf32, #tpu.memory_space<vmem>>, vector<1x2x1x32xf32>,
    %c0_19 = arith.constant 0 : index
    %c0_20 = arith.constant 0 : index
    %c1_21 = arith.constant 1 : index
    %c0_22 = arith.constant 0 : index
    %20 = vector.load %arg2[%c0_19, %c0_20, %c1_21, %c0_22] : memref<1x4x16x16xf32, #tpu.memory_space<vmem>>, vector<1x4x1x16xf32>
    %21 = vector.shape_cast %20 : vector<1x4x1x16xf32> to vector<4x16xf32>
    %cst_23 = arith.constant dense<0.000000e+00> : vector<2x16xf32>
    %22 = tpu.matmul %0, %21, %cst_23 {dimension_numbers = #tpu.dot_dimension_numbers<[1], [0], [0], [1], [0, 0, 1, 1], [], []>} : vector<2x4xf32>, vector<4x16xf32>, vector<2x16xf32> -> vector<2x16xf32>
    %23 = vector.broadcast %2 : vector<2x1xf32> to vector<2x16xf32>
    %24 = arith.addf %22, %23 : vector<2x16xf32>
    %cst_24 = arith.constant 0.000000e+00 : f32
    %25 = vector.broadcast %cst_24 : f32 to vector<2x16xf32>
    %26 = arith.cmpf ogt, %24, %25 : vector<2x16xf32>
    %cst_25 = arith.constant 1.000000e-01 : f32
    %27 = vector.broadcast %cst_25 : f32 to vector<2x16xf32>
    %28 = arith.mulf %27, %24 : vector<2x16xf32>
    %29 = arith.select %26, %24, %28 : vector<2x16xi1>, vector<2x16xf32>
    %cst_26 = arith.constant dense<0.000000e+00> : vector<2x32xf32>
    %30 = tpu.matmul %29, %1, %cst_26 {dimension_numbers = #tpu.dot_dimension_numbers<[1], [0], [0], [1], [0, 0, 1, 1], [], []>} : vector<2x16xf32>, vector<16x32xf32>, vector<2x32xf32> -> vector<2x32xf32>
    %c0_27 = arith.constant 0 : index
    %c0_28 = arith.constant 0 : index
    %c2 = arith.constant 2 : index
    %c0_29 = arith.constant 0 : index
    %31 = vector.load %arg6[%c0_27, %c0_28, %c2, %c0_29] : memref<1x2x32x32xf32, #tpu.memory_space<vmem>>, vector<1x2x1x32xf32>
    %32 = vector.shape_cast %31 : vector<1x2x1x32xf32> to vector<2x32xf32>
    %33 = vector.shape_cast %30 : vector<2x32xf32> to vector<1x2x1x32xf32>
    tpu.vector_store %arg6[%c0_27, %c0_28, %c2, %c0_29], %33 {strides = array<i32>} : memref<1x2x32x32xf32, #tpu.memory_space<vmem>>, vector<1x2x1x32xf32>,
    %c0_30 = arith.constant 0 : index
    %c0_31 = arith.constant 0 : index
    %c3 = arith.constant 3 : index
    %c0_32 = arith.constant 0 : index
    %34 = vector.load %arg6[%c0_30, %c0_31, %c3, %c0_32] : memref<1x2x32x32xf32, #tpu.memory_space<vmem>>, vector<1x2x1x32xf32>
    %35 = vector.shape_cast %34 : vector<1x2x1x32xf32> to vector<2x32xf32>
    %36 = vector.shape_cast %30 : vector<2x32xf32> to vector<1x2x1x32xf32>
    tpu.vector_store %arg6[%c0_30, %c0_31, %c3, %c0_32], %36 {strides = array<i32>} : memref<1x2x32x32xf32, #tpu.memory_space<vmem>>, vector<1x2x1x32xf32>,
    %c0_33 = arith.constant 0 : index
    %c0_34 = arith.constant 0 : index
    %c2_35 = arith.constant 2 : index
    %c0_36 = arith.constant 0 : index
    %37 = vector.load %arg2[%c0_33, %c0_34, %c2_35, %c0_36] : memref<1x4x16x16xf32, #tpu.memory_space<vmem>>, vector<1x4x1x16xf32>
    %38 = vector.shape_cast %37 : vector<1x4x1x16xf32> to vector<4x16xf32>
    %cst_37 = arith.constant dense<0.000000e+00> : vector<2x16xf32>
    %39 = tpu.matmul %0, %38, %cst_37 {dimension_numbers = #tpu.dot_dimension_numbers<[1], [0], [0], [1], [0, 0, 1, 1], [], []>} : vector<2x4xf32>, vector<4x16xf32>, vector<2x16xf32> -> vector<2x16xf32>
    %40 = vector.broadcast %2 : vector<2x1xf32> to vector<2x16xf32>
    %41 = arith.addf %39, %40 : vector<2x16xf32>
    %cst_38 = arith.constant 0.000000e+00 : f32
    %42 = vector.broadcast %cst_38 : f32 to vector<2x16xf32>
    %43 = arith.cmpf ogt, %41, %42 : vector<2x16xf32>
    %cst_39 = arith.constant 1.000000e-01 : f32
    %44 = vector.broadcast %cst_39 : f32 to vector<2x16xf32>
    %45 = arith.mulf %44, %41 : vector<2x16xf32>
    %46 = arith.select %43, %41, %45 : vector<2x16xi1>, vector<2x16xf32>
    %cst_40 = arith.constant dense<0.000000e+00> : vector<2x32xf32>
    %47 = tpu.matmul %46, %1, %cst_40 {dimension_numbers = #tpu.dot_dimension_numbers<[1], [0], [0], [1], [0, 0, 1, 1], [], []>} : vector<2x16xf32>, vector<16x32xf32>, vector<2x32xf32> -> vector<2x32xf32>
    %c0_41 = arith.constant 0 : index
    %c0_42 = arith.constant 0 : index
    %c4 = arith.constant 4 : index
    %c0_43 = arith.constant 0 : index
    %48 = vector.load %arg6[%c0_41, %c0_42, %c4, %c0_43] : memref<1x2x32x32xf32, #tpu.memory_space<vmem>>, vector<1x2x1x32xf32>
    %49 = vector.shape_cast %48 : vector<1x2x1x32xf32> to vector<2x32xf32>
    %50 = vector.shape_cast %47 : vector<2x32xf32> to vector<1x2x1x32xf32>
    tpu.vector_store %arg6[%c0_41, %c0_42, %c4, %c0_43], %50 {strides = array<i32>} : memref<1x2x32x32xf32, #tpu.memory_space<vmem>>, vector<1x2x1x32xf32>,
    %c0_44 = arith.constant 0 : index
    %c0_45 = arith.constant 0 : index
    %c5 = arith.constant 5 : index
    %c0_46 = arith.constant 0 : index
    %51 = vector.load %arg6[%c0_44, %c0_45, %c5, %c0_46] : memref<1x2x32x32xf32, #tpu.memory_space<vmem>>, vector<1x2x1x32xf32>
    %52 = vector.shape_cast %51 : vector<1x2x1x32xf32> to vector<2x32xf32>
    %53 = vector.shape_cast %47 : vector<2x32xf32> to vector<1x2x1x32xf32>
    tpu.vector_store %arg6[%c0_44, %c0_45, %c5, %c0_46], %53 {strides = array<i32>} : memref<1x2x32x32xf32, #tpu.memory_space<vmem>>, vector<1x2x1x32xf32>,
    %c0_47 = arith.constant 0 : index
    %c0_48 = arith.constant 0 : index
    %c3_49 = arith.constant 3 : index
    %c0_50 = arith.constant 0 : index
    %54 = vector.load %arg2[%c0_47, %c0_48, %c3_49, %c0_50] : memref<1x4x16x16xf32, #tpu.memory_space<vmem>>, vector<1x4x1x16xf32>
    %55 = vector.shape_cast %54 : vector<1x4x1x16xf32> to vector<4x16xf32>
    %cst_51 = arith.constant dense<0.000000e+00> : vector<2x16xf32>
    %56 = tpu.matmul %0, %55, %cst_51 {dimension_numbers = #tpu.dot_dimension_numbers<[1], [0], [0], [1], [0, 0, 1, 1], [], []>} : vector<2x4xf32>, vector<4x16xf32>, vector<2x16xf32> -> vector<2x16xf32>
    %57 = vector.broadcast %2 : vector<2x1xf32> to vector<2x16xf32>
    %58 = arith.addf %56, %57 : vector<2x16xf32>
    %cst_52 = arith.constant 0.000000e+00 : f32
    %59 = vector.broadcast %cst_52 : f32 to vector<2x16xf32>
    %60 = arith.cmpf ogt, %58, %59 : vector<2x16xf32>
    %cst_53 = arith.constant 1.000000e-01 : f32
    %61 = vector.broadcast %cst_53 : f32 to vector<2x16xf32>
    %62 = arith.mulf %61, %58 : vector<2x16xf32>
    %63 = arith.select %60, %58, %62 : vector<2x16xi1>, vector<2x16xf32>
    %cst_54 = arith.constant dense<0.000000e+00> : vector<2x32xf32>
    %64 = tpu.matmul %63, %1, %cst_54 {dimension_numbers = #tpu.dot_dimension_numbers<[1], [0], [0], [1], [0, 0, 1, 1], [], []>} : vector<2x16xf32>, vector<16x32xf32>, vector<2x32xf32> -> vector<2x32xf32>
    %c0_55 = arith.constant 0 : index
    %c0_56 = arith.constant 0 : index
    %c6 = arith.constant 6 : index
    %c0_57 = arith.constant 0 : index
    %65 = vector.load %arg6[%c0_55, %c0_56, %c6, %c0_57] : memref<1x2x32x32xf32, #tpu.memory_space<vmem>>, vector<1x2x1x32xf32>
    %66 = vector.shape_cast %65 : vector<1x2x1x32xf32> to vector<2x32xf32>
    %67 = vector.shape_cast %64 : vector<2x32xf32> to vector<1x2x1x32xf32>
    tpu.vector_store %arg6[%c0_55, %c0_56, %c6, %c0_57], %67 {strides = array<i32>} : memref<1x2x32x32xf32, #tpu.memory_space<vmem>>, vector<1x2x1x32xf32>,
    %c0_58 = arith.constant 0 : index
    %c0_59 = arith.constant 0 : index
    %c7 = arith.constant 7 : index
    %c0_60 = arith.constant 0 : index
    %68 = vector.load %arg6[%c0_58, %c0_59, %c7, %c0_60] : memref<1x2x32x32xf32, #tpu.memory_space<vmem>>, vector<1x2x1x32xf32>
    %69 = vector.shape_cast %68 : vector<1x2x1x32xf32> to vector<2x32xf32>
    %70 = vector.shape_cast %64 : vector<2x32xf32> to vector<1x2x1x32xf32>
    tpu.vector_store %arg6[%c0_58, %c0_59, %c7, %c0_60], %70 {strides = array<i32>} : memref<1x2x32x32xf32, #tpu.memory_space<vmem>>, vector<1x2x1x32xf32>,
    %c0_61 = arith.constant 0 : index
    %c0_62 = arith.constant 0 : index
    %c4_63 = arith.constant 4 : index
    %c0_64 = arith.constant 0 : index
    %71 = vector.load %arg2[%c0_61, %c0_62, %c4_63, %c0_64] : memref<1x4x16x16xf32, #tpu.memory_space<vmem>>, vector<1x4x1x16xf32>
    %72 = vector.shape_cast %71 : vector<1x4x1x16xf32> to vector<4x16xf32>
    %cst_65 = arith.constant dense<0.000000e+00> : vector<2x16xf32>
    %73 = tpu.matmul %0, %72, %cst_65 {dimension_numbers = #tpu.dot_dimension_numbers<[1], [0], [0], [1], [0, 0, 1, 1], [], []>} : vector<2x4xf32>, vector<4x16xf32>, vector<2x16xf32> -> vector<2x16xf32>
    %74 = vector.broadcast %2 : vector<2x1xf32> to vector<2x16xf32>
    %75 = arith.addf %73, %74 : vector<2x16xf32>
    %cst_66 = arith.constant 0.000000e+00 : f32
    %76 = vector.broadcast %cst_66 : f32 to vector<2x16xf32>
    %77 = arith.cmpf ogt, %75, %76 : vector<2x16xf32>
    %cst_67 = arith.constant 1.000000e-01 : f32
    %78 = vector.broadcast %cst_67 : f32 to vector<2x16xf32>
    %79 = arith.mulf %78, %75 : vector<2x16xf32>
    %80 = arith.select %77, %75, %79 : vector<2x16xi1>, vector<2x16xf32>
    %cst_68 = arith.constant dense<0.000000e+00> : vector<2x32xf32>
    %81 = tpu.matmul %80, %1, %cst_68 {dimension_numbers = #tpu.dot_dimension_numbers<[1], [0], [0], [1], [0, 0, 1, 1], [], []>} : vector<2x16xf32>, vector<16x32xf32>, vector<2x32xf32> -> vector<2x32xf32>
    %c0_69 = arith.constant 0 : index
    %c0_70 = arith.constant 0 : index
    %c8 = arith.constant 8 : index
    %c0_71 = arith.constant 0 : index
    %82 = vector.load %arg6[%c0_69, %c0_70, %c8, %c0_71] : memref<1x2x32x32xf32, #tpu.memory_space<vmem>>, vector<1x2x1x32xf32>
    %83 = vector.shape_cast %82 : vector<1x2x1x32xf32> to vector<2x32xf32>
    %84 = vector.shape_cast %81 : vector<2x32xf32> to vector<1x2x1x32xf32>
    tpu.vector_store %arg6[%c0_69, %c0_70, %c8, %c0_71], %84 {strides = array<i32>} : memref<1x2x32x32xf32, #tpu.memory_space<vmem>>, vector<1x2x1x32xf32>,
    %c0_72 = arith.constant 0 : index
    %c0_73 = arith.constant 0 : index
    %c9 = arith.constant 9 : index
    %c0_74 = arith.constant 0 : index
    %85 = vector.load %arg6[%c0_72, %c0_73, %c9, %c0_74] : memref<1x2x32x32xf32, #tpu.memory_space<vmem>>, vector<1x2x1x32xf32>
    %86 = vector.shape_cast %85 : vector<1x2x1x32xf32> to vector<2x32xf32>
    %87 = vector.shape_cast %81 : vector<2x32xf32> to vector<1x2x1x32xf32>
    tpu.vector_store %arg6[%c0_72, %c0_73, %c9, %c0_74], %87 {strides = array<i32>} : memref<1x2x32x32xf32, #tpu.memory_space<vmem>>, vector<1x2x1x32xf32>,
    %c0_75 = arith.constant 0 : index
    %c0_76 = arith.constant 0 : index
    %c5_77 = arith.constant 5 : index
    %c0_78 = arith.constant 0 : index
    %88 = vector.load %arg2[%c0_75, %c0_76, %c5_77, %c0_78] : memref<1x4x16x16xf32, #tpu.memory_space<vmem>>, vector<1x4x1x16xf32>
    %89 = vector.shape_cast %88 : vector<1x4x1x16xf32> to vector<4x16xf32>
    %cst_79 = arith.constant dense<0.000000e+00> : vector<2x16xf32>
    %90 = tpu.matmul %0, %89, %cst_79 {dimension_numbers = #tpu.dot_dimension_numbers<[1], [0], [0], [1], [0, 0, 1, 1], [], []>} : vector<2x4xf32>, vector<4x16xf32>, vector<2x16xf32> -> vector<2x16xf32>
    %91 = vector.broadcast %2 : vector<2x1xf32> to vector<2x16xf32>
    %92 = arith.addf %90, %91 : vector<2x16xf32>
    %cst_80 = arith.constant 0.000000e+00 : f32
    %93 = vector.broadcast %cst_80 : f32 to vector<2x16xf32>
    %94 = arith.cmpf ogt, %92, %93 : vector<2x16xf32>
    %cst_81 = arith.constant 1.000000e-01 : f32
    %95 = vector.broadcast %cst_81 : f32 to vector<2x16xf32>
    %96 = arith.mulf %95, %92 : vector<2x16xf32>
    %97 = arith.select %94, %92, %96 : vector<2x16xi1>, vector<2x16xf32>
    %cst_82 = arith.constant dense<0.000000e+00> : vector<2x32xf32>
    %98 = tpu.matmul %97, %1, %cst_82 {dimension_numbers = #tpu.dot_dimension_numbers<[1], [0], [0], [1], [0, 0, 1, 1], [], []>} : vector<2x16xf32>, vector<16x32xf32>, vector<2x32xf32> -> vector<2x32xf32>
    %c0_83 = arith.constant 0 : index
    %c0_84 = arith.constant 0 : index
    %c10 = arith.constant 10 : index
    %c0_85 = arith.constant 0 : index
    %99 = vector.load %arg6[%c0_83, %c0_84, %c10, %c0_85] : memref<1x2x32x32xf32, #tpu.memory_space<vmem>>, vector<1x2x1x32xf32>
    %100 = vector.shape_cast %99 : vector<1x2x1x32xf32> to vector<2x32xf32>
    %101 = vector.shape_cast %98 : vector<2x32xf32> to vector<1x2x1x32xf32>
    tpu.vector_store %arg6[%c0_83, %c0_84, %c10, %c0_85], %101 {strides = array<i32>} : memref<1x2x32x32xf32, #tpu.memory_space<vmem>>, vector<1x2x1x32xf32>,
    %c0_86 = arith.constant 0 : index
    %c0_87 = arith.constant 0 : index
    %c11 = arith.constant 11 : index
    %c0_88 = arith.constant 0 : index
    %102 = vector.load %arg6[%c0_86, %c0_87, %c11, %c0_88] : memref<1x2x32x32xf32, #tpu.memory_space<vmem>>, vector<1x2x1x32xf32>
    %103 = vector.shape_cast %102 : vector<1x2x1x32xf32> to vector<2x32xf32>
    %104 = vector.shape_cast %98 : vector<2x32xf32> to vector<1x2x1x32xf32>
    tpu.vector_store %arg6[%c0_86, %c0_87, %c11, %c0_88], %104 {strides = array<i32>} : memref<1x2x32x32xf32, #tpu.memory_space<vmem>>, vector<1x2x1x32xf32>,
    %c0_89 = arith.constant 0 : index
    %c0_90 = arith.constant 0 : index
    %c6_91 = arith.constant 6 : index
    %c0_92 = arith.constant 0 : index
    %105 = vector.load %arg2[%c0_89, %c0_90, %c6_91, %c0_92] : memref<1x4x16x16xf32, #tpu.memory_space<vmem>>, vector<1x4x1x16xf32>
    %106 = vector.shape_cast %105 : vector<1x4x1x16xf32> to vector<4x16xf32>
    %cst_93 = arith.constant dense<0.000000e+00> : vector<2x16xf32>
    %107 = tpu.matmul %0, %106, %cst_93 {dimension_numbers = #tpu.dot_dimension_numbers<[1], [0], [0], [1], [0, 0, 1, 1], [], []>} : vector<2x4xf32>, vector<4x16xf32>, vector<2x16xf32> -> vector<2x16xf32>
    %108 = vector.broadcast %2 : vector<2x1xf32> to vector<2x16xf32>
    %109 = arith.addf %107, %108 : vector<2x16xf32>
    %cst_94 = arith.constant 0.000000e+00 : f32
    %110 = vector.broadcast %cst_94 : f32 to vector<2x16xf32>
    %111 = arith.cmpf ogt, %109, %110 : vector<2x16xf32>
    %cst_95 = arith.constant 1.000000e-01 : f32
    %112 = vector.broadcast %cst_95 : f32 to vector<2x16xf32>
    %113 = arith.mulf %112, %109 : vector<2x16xf32>
    %114 = arith.select %111, %109, %113 : vector<2x16xi1>, vector<2x16xf32>
    %cst_96 = arith.constant dense<0.000000e+00> : vector<2x32xf32>
    %115 = tpu.matmul %114, %1, %cst_96 {dimension_numbers = #tpu.dot_dimension_numbers<[1], [0], [0], [1], [0, 0, 1, 1], [], []>} : vector<2x16xf32>, vector<16x32xf32>, vector<2x32xf32> -> vector<2x32xf32>
    %c0_97 = arith.constant 0 : index
    %c0_98 = arith.constant 0 : index
    %c12 = arith.constant 12 : index
    %c0_99 = arith.constant 0 : index
    %116 = vector.load %arg6[%c0_97, %c0_98, %c12, %c0_99] : memref<1x2x32x32xf32, #tpu.memory_space<vmem>>, vector<1x2x1x32xf32>
    %117 = vector.shape_cast %116 : vector<1x2x1x32xf32> to vector<2x32xf32>
    %118 = vector.shape_cast %115 : vector<2x32xf32> to vector<1x2x1x32xf32>
    tpu.vector_store %arg6[%c0_97, %c0_98, %c12, %c0_99], %118 {strides = array<i32>} : memref<1x2x32x32xf32, #tpu.memory_space<vmem>>, vector<1x2x1x32xf32>,
    %c0_100 = arith.constant 0 : index
    %c0_101 = arith.constant 0 : index
    %c13 = arith.constant 13 : index
    %c0_102 = arith.constant 0 : index
    %119 = vector.load %arg6[%c0_100, %c0_101, %c13, %c0_102] : memref<1x2x32x32xf32, #tpu.memory_space<vmem>>, vector<1x2x1x32xf32>
    %120 = vector.shape_cast %119 : vector<1x2x1x32xf32> to vector<2x32xf32>
    %121 = vector.shape_cast %115 : vector<2x32xf32> to vector<1x2x1x32xf32>
    tpu.vector_store %arg6[%c0_100, %c0_101, %c13, %c0_102], %121 {strides = array<i32>} : memref<1x2x32x32xf32, #tpu.memory_space<vmem>>, vector<1x2x1x32xf32>,
    %c0_103 = arith.constant 0 : index
    %c0_104 = arith.constant 0 : index
    %c7_105 = arith.constant 7 : index
    %c0_106 = arith.constant 0 : index
    %122 = vector.load %arg2[%c0_103, %c0_104, %c7_105, %c0_106] : memref<1x4x16x16xf32, #tpu.memory_space<vmem>>, vector<1x4x1x16xf32>
    %123 = vector.shape_cast %122 : vector<1x4x1x16xf32> to vector<4x16xf32>
    %cst_107 = arith.constant dense<0.000000e+00> : vector<2x16xf32>
    %124 = tpu.matmul %0, %123, %cst_107 {dimension_numbers = #tpu.dot_dimension_numbers<[1], [0], [0], [1], [0, 0, 1, 1], [], []>} : vector<2x4xf32>, vector<4x16xf32>, vector<2x16xf32> -> vector<2x16xf32>
    %125 = vector.broadcast %2 : vector<2x1xf32> to vector<2x16xf32>
    %126 = arith.addf %124, %125 : vector<2x16xf32>
    %cst_108 = arith.constant 0.000000e+00 : f32
    %127 = vector.broadcast %cst_108 : f32 to vector<2x16xf32>
    %128 = arith.cmpf ogt, %126, %127 : vector<2x16xf32>
    %cst_109 = arith.constant 1.000000e-01 : f32
    %129 = vector.broadcast %cst_109 : f32 to vector<2x16xf32>
    %130 = arith.mulf %129, %126 : vector<2x16xf32>
    %131 = arith.select %128, %126, %130 : vector<2x16xi1>, vector<2x16xf32>
    %cst_110 = arith.constant dense<0.000000e+00> : vector<2x32xf32>
    %132 = tpu.matmul %131, %1, %cst_110 {dimension_numbers = #tpu.dot_dimension_numbers<[1], [0], [0], [1], [0, 0, 1, 1], [], []>} : vector<2x16xf32>, vector<16x32xf32>, vector<2x32xf32> -> vector<2x32xf32>
    %c0_111 = arith.constant 0 : index
    %c0_112 = arith.constant 0 : index
    %c14 = arith.constant 14 : index
    %c0_113 = arith.constant 0 : index
    %133 = vector.load %arg6[%c0_111, %c0_112, %c14, %c0_113] : memref<1x2x32x32xf32, #tpu.memory_space<vmem>>, vector<1x2x1x32xf32>
    %134 = vector.shape_cast %133 : vector<1x2x1x32xf32> to vector<2x32xf32>
    %135 = vector.shape_cast %132 : vector<2x32xf32> to vector<1x2x1x32xf32>
    tpu.vector_store %arg6[%c0_111, %c0_112, %c14, %c0_113], %135 {strides = array<i32>} : memref<1x2x32x32xf32, #tpu.memory_space<vmem>>, vector<1x2x1x32xf32>,
    %c0_114 = arith.constant 0 : index
    %c0_115 = arith.constant 0 : index
    %c15 = arith.constant 15 : index
    %c0_116 = arith.constant 0 : index
    %136 = vector.load %arg6[%c0_114, %c0_115, %c15, %c0_116] : memref<1x2x32x32xf32, #tpu.memory_space<vmem>>, vector<1x2x1x32xf32>
    %137 = vector.shape_cast %136 : vector<1x2x1x32xf32> to vector<2x32xf32>
    %138 = vector.shape_cast %132 : vector<2x32xf32> to vector<1x2x1x32xf32>
    tpu.vector_store %arg6[%c0_114, %c0_115, %c15, %c0_116], %138 {strides = array<i32>} : memref<1x2x32x32xf32, #tpu.memory_space<vmem>>, vector<1x2x1x32xf32>,
    %c0_117 = arith.constant 0 : index
    %c0_118 = arith.constant 0 : index
    %c8_119 = arith.constant 8 : index
    %c0_120 = arith.constant 0 : index
    %139 = vector.load %arg2[%c0_117, %c0_118, %c8_119, %c0_120] : memref<1x4x16x16xf32, #tpu.memory_space<vmem>>, vector<1x4x1x16xf32>
    %140 = vector.shape_cast %139 : vector<1x4x1x16xf32> to vector<4x16xf32>
    %cst_121 = arith.constant dense<0.000000e+00> : vector<2x16xf32>
    %141 = tpu.matmul %0, %140, %cst_121 {dimension_numbers = #tpu.dot_dimension_numbers<[1], [0], [0], [1], [0, 0, 1, 1], [], []>} : vector<2x4xf32>, vector<4x16xf32>, vector<2x16xf32> -> vector<2x16xf32>
    %142 = vector.broadcast %2 : vector<2x1xf32> to vector<2x16xf32>
    %143 = arith.addf %141, %142 : vector<2x16xf32>
    %cst_122 = arith.constant 0.000000e+00 : f32
    %144 = vector.broadcast %cst_122 : f32 to vector<2x16xf32>
    %145 = arith.cmpf ogt, %143, %144 : vector<2x16xf32>
    %cst_123 = arith.constant 1.000000e-01 : f32
    %146 = vector.broadcast %cst_123 : f32 to vector<2x16xf32>
    %147 = arith.mulf %146, %143 : vector<2x16xf32>
    %148 = arith.select %145, %143, %147 : vector<2x16xi1>, vector<2x16xf32>
    %cst_124 = arith.constant dense<0.000000e+00> : vector<2x32xf32>
    %149 = tpu.matmul %148, %1, %cst_124 {dimension_numbers = #tpu.dot_dimension_numbers<[1], [0], [0], [1], [0, 0, 1, 1], [], []>} : vector<2x16xf32>, vector<16x32xf32>, vector<2x32xf32> -> vector<2x32xf32>
    %c0_125 = arith.constant 0 : index
    %c0_126 = arith.constant 0 : index
    %c16 = arith.constant 16 : index
    %c0_127 = arith.constant 0 : index
    %150 = vector.load %arg6[%c0_125, %c0_126, %c16, %c0_127] : memref<1x2x32x32xf32, #tpu.memory_space<vmem>>, vector<1x2x1x32xf32>
    %151 = vector.shape_cast %150 : vector<1x2x1x32xf32> to vector<2x32xf32>
    %152 = vector.shape_cast %149 : vector<2x32xf32> to vector<1x2x1x32xf32>
    tpu.vector_store %arg6[%c0_125, %c0_126, %c16, %c0_127], %152 {strides = array<i32>} : memref<1x2x32x32xf32, #tpu.memory_space<vmem>>, vector<1x2x1x32xf32>,
    %c0_128 = arith.constant 0 : index
    %c0_129 = arith.constant 0 : index
    %c17 = arith.constant 17 : index
    %c0_130 = arith.constant 0 : index
    %153 = vector.load %arg6[%c0_128, %c0_129, %c17, %c0_130] : memref<1x2x32x32xf32, #tpu.memory_space<vmem>>, vector<1x2x1x32xf32>
    %154 = vector.shape_cast %153 : vector<1x2x1x32xf32> to vector<2x32xf32>
    %155 = vector.shape_cast %149 : vector<2x32xf32> to vector<1x2x1x32xf32>
    tpu.vector_store %arg6[%c0_128, %c0_129, %c17, %c0_130], %155 {strides = array<i32>} : memref<1x2x32x32xf32, #tpu.memory_space<vmem>>, vector<1x2x1x32xf32>,
    %c0_131 = arith.constant 0 : index
    %c0_132 = arith.constant 0 : index
    %c9_133 = arith.constant 9 : index
    %c0_134 = arith.constant 0 : index
    %156 = vector.load %arg2[%c0_131, %c0_132, %c9_133, %c0_134] : memref<1x4x16x16xf32, #tpu.memory_space<vmem>>, vector<1x4x1x16xf32>
    %157 = vector.shape_cast %156 : vector<1x4x1x16xf32> to vector<4x16xf32>
    %cst_135 = arith.constant dense<0.000000e+00> : vector<2x16xf32>
    %158 = tpu.matmul %0, %157, %cst_135 {dimension_numbers = #tpu.dot_dimension_numbers<[1], [0], [0], [1], [0, 0, 1, 1], [], []>} : vector<2x4xf32>, vector<4x16xf32>, vector<2x16xf32> -> vector<2x16xf32>
    %159 = vector.broadcast %2 : vector<2x1xf32> to vector<2x16xf32>
    %160 = arith.addf %158, %159 : vector<2x16xf32>
    %cst_136 = arith.constant 0.000000e+00 : f32
    %161 = vector.broadcast %cst_136 : f32 to vector<2x16xf32>
    %162 = arith.cmpf ogt, %160, %161 : vector<2x16xf32>
    %cst_137 = arith.constant 1.000000e-01 : f32
    %163 = vector.broadcast %cst_137 : f32 to vector<2x16xf32>
    %164 = arith.mulf %163, %160 : vector<2x16xf32>
    %165 = arith.select %162, %160, %164 : vector<2x16xi1>, vector<2x16xf32>
    %cst_138 = arith.constant dense<0.000000e+00> : vector<2x32xf32>
    %166 = tpu.matmul %165, %1, %cst_138 {dimension_numbers = #tpu.dot_dimension_numbers<[1], [0], [0], [1], [0, 0, 1, 1], [], []>} : vector<2x16xf32>, vector<16x32xf32>, vector<2x32xf32> -> vector<2x32xf32>
    %c0_139 = arith.constant 0 : index
    %c0_140 = arith.constant 0 : index
    %c18 = arith.constant 18 : index
    %c0_141 = arith.constant 0 : index
    %167 = vector.load %arg6[%c0_139, %c0_140, %c18, %c0_141] : memref<1x2x32x32xf32, #tpu.memory_space<vmem>>, vector<1x2x1x32xf32>
    %168 = vector.shape_cast %167 : vector<1x2x1x32xf32> to vector<2x32xf32>
    %169 = vector.shape_cast %166 : vector<2x32xf32> to vector<1x2x1x32xf32>
    tpu.vector_store %arg6[%c0_139, %c0_140, %c18, %c0_141], %169 {strides = array<i32>} : memref<1x2x32x32xf32, #tpu.memory_space<vmem>>, vector<1x2x1x32xf32>,
    %c0_142 = arith.constant 0 : index
    %c0_143 = arith.constant 0 : index
    %c19 = arith.constant 19 : index
    %c0_144 = arith.constant 0 : index
    %170 = vector.load %arg6[%c0_142, %c0_143, %c19, %c0_144] : memref<1x2x32x32xf32, #tpu.memory_space<vmem>>, vector<1x2x1x32xf32>
    %171 = vector.shape_cast %170 : vector<1x2x1x32xf32> to vector<2x32xf32>
    %172 = vector.shape_cast %166 : vector<2x32xf32> to vector<1x2x1x32xf32>
    tpu.vector_store %arg6[%c0_142, %c0_143, %c19, %c0_144], %172 {strides = array<i32>} : memref<1x2x32x32xf32, #tpu.memory_space<vmem>>, vector<1x2x1x32xf32>,
    %c0_145 = arith.constant 0 : index
    %c0_146 = arith.constant 0 : index
    %c10_147 = arith.constant 10 : index
    %c0_148 = arith.constant 0 : index
    %173 = vector.load %arg2[%c0_145, %c0_146, %c10_147, %c0_148] : memref<1x4x16x16xf32, #tpu.memory_space<vmem>>, vector<1x4x1x16xf32>
    %174 = vector.shape_cast %173 : vector<1x4x1x16xf32> to vector<4x16xf32>
    %cst_149 = arith.constant dense<0.000000e+00> : vector<2x16xf32>
    %175 = tpu.matmul %0, %174, %cst_149 {dimension_numbers = #tpu.dot_dimension_numbers<[1], [0], [0], [1], [0, 0, 1, 1], [], []>} : vector<2x4xf32>, vector<4x16xf32>, vector<2x16xf32> -> vector<2x16xf32>
    %176 = vector.broadcast %2 : vector<2x1xf32> to vector<2x16xf32>
    %177 = arith.addf %175, %176 : vector<2x16xf32>
    %cst_150 = arith.constant 0.000000e+00 : f32
    %178 = vector.broadcast %cst_150 : f32 to vector<2x16xf32>
    %179 = arith.cmpf ogt, %177, %178 : vector<2x16xf32>
    %cst_151 = arith.constant 1.000000e-01 : f32
    %180 = vector.broadcast %cst_151 : f32 to vector<2x16xf32>
    %181 = arith.mulf %180, %177 : vector<2x16xf32>
    %182 = arith.select %179, %177, %181 : vector<2x16xi1>, vector<2x16xf32>
    %cst_152 = arith.constant dense<0.000000e+00> : vector<2x32xf32>
    %183 = tpu.matmul %182, %1, %cst_152 {dimension_numbers = #tpu.dot_dimension_numbers<[1], [0], [0], [1], [0, 0, 1, 1], [], []>} : vector<2x16xf32>, vector<16x32xf32>, vector<2x32xf32> -> vector<2x32xf32>
    %c0_153 = arith.constant 0 : index
    %c0_154 = arith.constant 0 : index
    %c20 = arith.constant 20 : index
    %c0_155 = arith.constant 0 : index
    %184 = vector.load %arg6[%c0_153, %c0_154, %c20, %c0_155] : memref<1x2x32x32xf32, #tpu.memory_space<vmem>>, vector<1x2x1x32xf32>
    %185 = vector.shape_cast %184 : vector<1x2x1x32xf32> to vector<2x32xf32>
    %186 = vector.shape_cast %183 : vector<2x32xf32> to vector<1x2x1x32xf32>
    tpu.vector_store %arg6[%c0_153, %c0_154, %c20, %c0_155], %186 {strides = array<i32>} : memref<1x2x32x32xf32, #tpu.memory_space<vmem>>, vector<1x2x1x32xf32>,
    %c0_156 = arith.constant 0 : index
    %c0_157 = arith.constant 0 : index
    %c21 = arith.constant 21 : index
    %c0_158 = arith.constant 0 : index
    %187 = vector.load %arg6[%c0_156, %c0_157, %c21, %c0_158] : memref<1x2x32x32xf32, #tpu.memory_space<vmem>>, vector<1x2x1x32xf32>
    %188 = vector.shape_cast %187 : vector<1x2x1x32xf32> to vector<2x32xf32>
    %189 = vector.shape_cast %183 : vector<2x32xf32> to vector<1x2x1x32xf32>
    tpu.vector_store %arg6[%c0_156, %c0_157, %c21, %c0_158], %189 {strides = array<i32>} : memref<1x2x32x32xf32, #tpu.memory_space<vmem>>, vector<1x2x1x32xf32>,
    %c0_159 = arith.constant 0 : index
    %c0_160 = arith.constant 0 : index
    %c11_161 = arith.constant 11 : index
    %c0_162 = arith.constant 0 : index
    %190 = vector.load %arg2[%c0_159, %c0_160, %c11_161, %c0_162] : memref<1x4x16x16xf32, #tpu.memory_space<vmem>>, vector<1x4x1x16xf32>
    %191 = vector.shape_cast %190 : vector<1x4x1x16xf32> to vector<4x16xf32>
    %cst_163 = arith.constant dense<0.000000e+00> : vector<2x16xf32>
    %192 = tpu.matmul %0, %191, %cst_163 {dimension_numbers = #tpu.dot_dimension_numbers<[1], [0], [0], [1], [0, 0, 1, 1], [], []>} : vector<2x4xf32>, vector<4x16xf32>, vector<2x16xf32> -> vector<2x16xf32>
    %193 = vector.broadcast %2 : vector<2x1xf32> to vector<2x16xf32>
    %194 = arith.addf %192, %193 : vector<2x16xf32>
    %cst_164 = arith.constant 0.000000e+00 : f32
    %195 = vector.broadcast %cst_164 : f32 to vector<2x16xf32>
    %196 = arith.cmpf ogt, %194, %195 : vector<2x16xf32>
    %cst_165 = arith.constant 1.000000e-01 : f32
    %197 = vector.broadcast %cst_165 : f32 to vector<2x16xf32>
    %198 = arith.mulf %197, %194 : vector<2x16xf32>
    %199 = arith.select %196, %194, %198 : vector<2x16xi1>, vector<2x16xf32>
    %cst_166 = arith.constant dense<0.000000e+00> : vector<2x32xf32>
    %200 = tpu.matmul %199, %1, %cst_166 {dimension_numbers = #tpu.dot_dimension_numbers<[1], [0], [0], [1], [0, 0, 1, 1], [], []>} : vector<2x16xf32>, vector<16x32xf32>, vector<2x32xf32> -> vector<2x32xf32>
    %c0_167 = arith.constant 0 : index
    %c0_168 = arith.constant 0 : index
    %c22 = arith.constant 22 : index
    %c0_169 = arith.constant 0 : index
    %201 = vector.load %arg6[%c0_167, %c0_168, %c22, %c0_169] : memref<1x2x32x32xf32, #tpu.memory_space<vmem>>, vector<1x2x1x32xf32>
    %202 = vector.shape_cast %201 : vector<1x2x1x32xf32> to vector<2x32xf32>
    %203 = vector.shape_cast %200 : vector<2x32xf32> to vector<1x2x1x32xf32>
    tpu.vector_store %arg6[%c0_167, %c0_168, %c22, %c0_169], %203 {strides = array<i32>} : memref<1x2x32x32xf32, #tpu.memory_space<vmem>>, vector<1x2x1x32xf32>,
    %c0_170 = arith.constant 0 : index
    %c0_171 = arith.constant 0 : index
    %c23 = arith.constant 23 : index
    %c0_172 = arith.constant 0 : index
    %204 = vector.load %arg6[%c0_170, %c0_171, %c23, %c0_172] : memref<1x2x32x32xf32, #tpu.memory_space<vmem>>, vector<1x2x1x32xf32>
    %205 = vector.shape_cast %204 : vector<1x2x1x32xf32> to vector<2x32xf32>
    %206 = vector.shape_cast %200 : vector<2x32xf32> to vector<1x2x1x32xf32>
    tpu.vector_store %arg6[%c0_170, %c0_171, %c23, %c0_172], %206 {strides = array<i32>} : memref<1x2x32x32xf32, #tpu.memory_space<vmem>>, vector<1x2x1x32xf32>,
    %c0_173 = arith.constant 0 : index
    %c0_174 = arith.constant 0 : index
    %c12_175 = arith.constant 12 : index
    %c0_176 = arith.constant 0 : index
    %207 = vector.load %arg2[%c0_173, %c0_174, %c12_175, %c0_176] : memref<1x4x16x16xf32, #tpu.memory_space<vmem>>, vector<1x4x1x16xf32>
    %208 = vector.shape_cast %207 : vector<1x4x1x16xf32> to vector<4x16xf32>
    %cst_177 = arith.constant dense<0.000000e+00> : vector<2x16xf32>
    %209 = tpu.matmul %0, %208, %cst_177 {dimension_numbers = #tpu.dot_dimension_numbers<[1], [0], [0], [1], [0, 0, 1, 1], [], []>} : vector<2x4xf32>, vector<4x16xf32>, vector<2x16xf32> -> vector<2x16xf32>
    %210 = vector.broadcast %2 : vector<2x1xf32> to vector<2x16xf32>
    %211 = arith.addf %209, %210 : vector<2x16xf32>
    %cst_178 = arith.constant 0.000000e+00 : f32
    %212 = vector.broadcast %cst_178 : f32 to vector<2x16xf32>
    %213 = arith.cmpf ogt, %211, %212 : vector<2x16xf32>
    %cst_179 = arith.constant 1.000000e-01 : f32
    %214 = vector.broadcast %cst_179 : f32 to vector<2x16xf32>
    %215 = arith.mulf %214, %211 : vector<2x16xf32>
    %216 = arith.select %213, %211, %215 : vector<2x16xi1>, vector<2x16xf32>
    %cst_180 = arith.constant dense<0.000000e+00> : vector<2x32xf32>
    %217 = tpu.matmul %216, %1, %cst_180 {dimension_numbers = #tpu.dot_dimension_numbers<[1], [0], [0], [1], [0, 0, 1, 1], [], []>} : vector<2x16xf32>, vector<16x32xf32>, vector<2x32xf32> -> vector<2x32xf32>
    %c0_181 = arith.constant 0 : index
    %c0_182 = arith.constant 0 : index
    %c24 = arith.constant 24 : index
    %c0_183 = arith.constant 0 : index
    %218 = vector.load %arg6[%c0_181, %c0_182, %c24, %c0_183] : memref<1x2x32x32xf32, #tpu.memory_space<vmem>>, vector<1x2x1x32xf32>
    %219 = vector.shape_cast %218 : vector<1x2x1x32xf32> to vector<2x32xf32>
    %220 = vector.shape_cast %217 : vector<2x32xf32> to vector<1x2x1x32xf32>
    tpu.vector_store %arg6[%c0_181, %c0_182, %c24, %c0_183], %220 {strides = array<i32>} : memref<1x2x32x32xf32, #tpu.memory_space<vmem>>, vector<1x2x1x32xf32>,
    %c0_184 = arith.constant 0 : index
    %c0_185 = arith.constant 0 : index
    %c25 = arith.constant 25 : index
    %c0_186 = arith.constant 0 : index
    %221 = vector.load %arg6[%c0_184, %c0_185, %c25, %c0_186] : memref<1x2x32x32xf32, #tpu.memory_space<vmem>>, vector<1x2x1x32xf32>
    %222 = vector.shape_cast %221 : vector<1x2x1x32xf32> to vector<2x32xf32>
    %223 = vector.shape_cast %217 : vector<2x32xf32> to vector<1x2x1x32xf32>
    tpu.vector_store %arg6[%c0_184, %c0_185, %c25, %c0_186], %223 {strides = array<i32>} : memref<1x2x32x32xf32, #tpu.memory_space<vmem>>, vector<1x2x1x32xf32>,
    %c0_187 = arith.constant 0 : index
    %c0_188 = arith.constant 0 : index
    %c13_189 = arith.constant 13 : index
    %c0_190 = arith.constant 0 : index
    %224 = vector.load %arg2[%c0_187, %c0_188, %c13_189, %c0_190] : memref<1x4x16x16xf32, #tpu.memory_space<vmem>>, vector<1x4x1x16xf32>
    %225 = vector.shape_cast %224 : vector<1x4x1x16xf32> to vector<4x16xf32>
    %cst_191 = arith.constant dense<0.000000e+00> : vector<2x16xf32>
    %226 = tpu.matmul %0, %225, %cst_191 {dimension_numbers = #tpu.dot_dimension_numbers<[1], [0], [0], [1], [0, 0, 1, 1], [], []>} : vector<2x4xf32>, vector<4x16xf32>, vector<2x16xf32> -> vector<2x16xf32>
    %227 = vector.broadcast %2 : vector<2x1xf32> to vector<2x16xf32>
    %228 = arith.addf %226, %227 : vector<2x16xf32>
    %cst_192 = arith.constant 0.000000e+00 : f32
    %229 = vector.broadcast %cst_192 : f32 to vector<2x16xf32>
    %230 = arith.cmpf ogt, %228, %229 : vector<2x16xf32>
    %cst_193 = arith.constant 1.000000e-01 : f32
    %231 = vector.broadcast %cst_193 : f32 to vector<2x16xf32>
    %232 = arith.mulf %231, %228 : vector<2x16xf32>
    %233 = arith.select %230, %228, %232 : vector<2x16xi1>, vector<2x16xf32>
    %cst_194 = arith.constant dense<0.000000e+00> : vector<2x32xf32>
    %234 = tpu.matmul %233, %1, %cst_194 {dimension_numbers = #tpu.dot_dimension_numbers<[1], [0], [0], [1], [0, 0, 1, 1], [], []>} : vector<2x16xf32>, vector<16x32xf32>, vector<2x32xf32> -> vector<2x32xf32>
    %c0_195 = arith.constant 0 : index
    %c0_196 = arith.constant 0 : index
    %c26 = arith.constant 26 : index
    %c0_197 = arith.constant 0 : index
    %235 = vector.load %arg6[%c0_195, %c0_196, %c26, %c0_197] : memref<1x2x32x32xf32, #tpu.memory_space<vmem>>, vector<1x2x1x32xf32>
    %236 = vector.shape_cast %235 : vector<1x2x1x32xf32> to vector<2x32xf32>
    %237 = vector.shape_cast %234 : vector<2x32xf32> to vector<1x2x1x32xf32>
    tpu.vector_store %arg6[%c0_195, %c0_196, %c26, %c0_197], %237 {strides = array<i32>} : memref<1x2x32x32xf32, #tpu.memory_space<vmem>>, vector<1x2x1x32xf32>,
    %c0_198 = arith.constant 0 : index
    %c0_199 = arith.constant 0 : index
    %c27 = arith.constant 27 : index
    %c0_200 = arith.constant 0 : index
    %238 = vector.load %arg6[%c0_198, %c0_199, %c27, %c0_200] : memref<1x2x32x32xf32, #tpu.memory_space<vmem>>, vector<1x2x1x32xf32>
    %239 = vector.shape_cast %238 : vector<1x2x1x32xf32> to vector<2x32xf32>
    %240 = vector.shape_cast %234 : vector<2x32xf32> to vector<1x2x1x32xf32>
    tpu.vector_store %arg6[%c0_198, %c0_199, %c27, %c0_200], %240 {strides = array<i32>} : memref<1x2x32x32xf32, #tpu.memory_space<vmem>>, vector<1x2x1x32xf32>,
    %c0_201 = arith.constant 0 : index
    %c0_202 = arith.constant 0 : index
    %c14_203 = arith.constant 14 : index
    %c0_204 = arith.constant 0 : index
    %241 = vector.load %arg2[%c0_201, %c0_202, %c14_203, %c0_204] : memref<1x4x16x16xf32, #tpu.memory_space<vmem>>, vector<1x4x1x16xf32>
    %242 = vector.shape_cast %241 : vector<1x4x1x16xf32> to vector<4x16xf32>
    %cst_205 = arith.constant dense<0.000000e+00> : vector<2x16xf32>
    %243 = tpu.matmul %0, %242, %cst_205 {dimension_numbers = #tpu.dot_dimension_numbers<[1], [0], [0], [1], [0, 0, 1, 1], [], []>} : vector<2x4xf32>, vector<4x16xf32>, vector<2x16xf32> -> vector<2x16xf32>
    %244 = vector.broadcast %2 : vector<2x1xf32> to vector<2x16xf32>
    %245 = arith.addf %243, %244 : vector<2x16xf32>
    %cst_206 = arith.constant 0.000000e+00 : f32
    %246 = vector.broadcast %cst_206 : f32 to vector<2x16xf32>
    %247 = arith.cmpf ogt, %245, %246 : vector<2x16xf32>
    %cst_207 = arith.constant 1.000000e-01 : f32
    %248 = vector.broadcast %cst_207 : f32 to vector<2x16xf32>
    %249 = arith.mulf %248, %245 : vector<2x16xf32>
    %250 = arith.select %247, %245, %249 : vector<2x16xi1>, vector<2x16xf32>
    %cst_208 = arith.constant dense<0.000000e+00> : vector<2x32xf32>
    %251 = tpu.matmul %250, %1, %cst_208 {dimension_numbers = #tpu.dot_dimension_numbers<[1], [0], [0], [1], [0, 0, 1, 1], [], []>} : vector<2x16xf32>, vector<16x32xf32>, vector<2x32xf32> -> vector<2x32xf32>
    %c0_209 = arith.constant 0 : index
    %c0_210 = arith.constant 0 : index
    %c28 = arith.constant 28 : index
    %c0_211 = arith.constant 0 : index
    %252 = vector.load %arg6[%c0_209, %c0_210, %c28, %c0_211] : memref<1x2x32x32xf32, #tpu.memory_space<vmem>>, vector<1x2x1x32xf32>
    %253 = vector.shape_cast %252 : vector<1x2x1x32xf32> to vector<2x32xf32>
    %254 = vector.shape_cast %251 : vector<2x32xf32> to vector<1x2x1x32xf32>
    tpu.vector_store %arg6[%c0_209, %c0_210, %c28, %c0_211], %254 {strides = array<i32>} : memref<1x2x32x32xf32, #tpu.memory_space<vmem>>, vector<1x2x1x32xf32>,
    %c0_212 = arith.constant 0 : index
    %c0_213 = arith.constant 0 : index
    %c29 = arith.constant 29 : index
    %c0_214 = arith.constant 0 : index
    %255 = vector.load %arg6[%c0_212, %c0_213, %c29, %c0_214] : memref<1x2x32x32xf32, #tpu.memory_space<vmem>>, vector<1x2x1x32xf32>
    %256 = vector.shape_cast %255 : vector<1x2x1x32xf32> to vector<2x32xf32>
    %257 = vector.shape_cast %251 : vector<2x32xf32> to vector<1x2x1x32xf32>
    tpu.vector_store %arg6[%c0_212, %c0_213, %c29, %c0_214], %257 {strides = array<i32>} : memref<1x2x32x32xf32, #tpu.memory_space<vmem>>, vector<1x2x1x32xf32>,
    %c0_215 = arith.constant 0 : index
    %c0_216 = arith.constant 0 : index
    %c15_217 = arith.constant 15 : index
    %c0_218 = arith.constant 0 : index
    %258 = vector.load %arg2[%c0_215, %c0_216, %c15_217, %c0_218] : memref<1x4x16x16xf32, #tpu.memory_space<vmem>>, vector<1x4x1x16xf32>
    %259 = vector.shape_cast %258 : vector<1x4x1x16xf32> to vector<4x16xf32>
    %cst_219 = arith.constant dense<0.000000e+00> : vector<2x16xf32>
    %260 = tpu.matmul %0, %259, %cst_219 {dimension_numbers = #tpu.dot_dimension_numbers<[1], [0], [0], [1], [0, 0, 1, 1], [], []>} : vector<2x4xf32>, vector<4x16xf32>, vector<2x16xf32> -> vector<2x16xf32>
    %261 = vector.broadcast %2 : vector<2x1xf32> to vector<2x16xf32>
    %262 = arith.addf %260, %261 : vector<2x16xf32>
    %cst_220 = arith.constant 0.000000e+00 : f32
    %263 = vector.broadcast %cst_220 : f32 to vector<2x16xf32>
    %264 = arith.cmpf ogt, %262, %263 : vector<2x16xf32>
    %cst_221 = arith.constant 1.000000e-01 : f32
    %265 = vector.broadcast %cst_221 : f32 to vector<2x16xf32>
    %266 = arith.mulf %265, %262 : vector<2x16xf32>
    %267 = arith.select %264, %262, %266 : vector<2x16xi1>, vector<2x16xf32>
    %cst_222 = arith.constant dense<0.000000e+00> : vector<2x32xf32>
    %268 = tpu.matmul %267, %1, %cst_222 {dimension_numbers = #tpu.dot_dimension_numbers<[1], [0], [0], [1], [0, 0, 1, 1], [], []>} : vector<2x16xf32>, vector<16x32xf32>, vector<2x32xf32> -> vector<2x32xf32>
    %c0_223 = arith.constant 0 : index
    %c0_224 = arith.constant 0 : index
    %c30 = arith.constant 30 : index
    %c0_225 = arith.constant 0 : index
    %269 = vector.load %arg6[%c0_223, %c0_224, %c30, %c0_225] : memref<1x2x32x32xf32, #tpu.memory_space<vmem>>, vector<1x2x1x32xf32>
    %270 = vector.shape_cast %269 : vector<1x2x1x32xf32> to vector<2x32xf32>
    %271 = vector.shape_cast %268 : vector<2x32xf32> to vector<1x2x1x32xf32>
    tpu.vector_store %arg6[%c0_223, %c0_224, %c30, %c0_225], %271 {strides = array<i32>} : memref<1x2x32x32xf32, #tpu.memory_space<vmem>>, vector<1x2x1x32xf32>,
    %c0_226 = arith.constant 0 : index
    %c0_227 = arith.constant 0 : index
    %c31 = arith.constant 31 : index
    %c0_228 = arith.constant 0 : index
    %272 = vector.load %arg6[%c0_226, %c0_227, %c31, %c0_228] : memref<1x2x32x32xf32, #tpu.memory_space<vmem>>, vector<1x2x1x32xf32>
    %273 = vector.shape_cast %272 : vector<1x2x1x32xf32> to vector<2x32xf32>
    %274 = vector.shape_cast %268 : vector<2x32xf32> to vector<1x2x1x32xf32>
    tpu.vector_store %arg6[%c0_226, %c0_227, %c31, %c0_228], %274 {strides = array<i32>} : memref<1x2x32x32xf32, #tpu.memory_space<vmem>>, vector<1x2x1x32xf32>,
    return
  }
  func.func @transform_0(%arg0: i32, %arg1: i32) -> (i32, i32, i32, i32) {
    %c0_i32 = arith.constant 0 : i32
    %c0_i32_0 = arith.constant 0 : i32
    %c0_i32_1 = arith.constant 0 : i32
    return %arg0, %c0_i32, %arg1, %c0_i32_0 : i32, i32, i32, i32
  }
  func.func @transform_1(%arg0: i32, %arg1: i32) -> (i32, i32) {
    %c0_i32 = arith.constant 0 : i32
    %c0_i32_0 = arith.constant 0 : i32
    %c0_i32_1 = arith.constant 0 : i32
    return %c0_i32, %c0_i32_0 : i32, i32
  }
  func.func @transform_2(%arg0: i32, %arg1: i32) -> (i32, i32) {
    %c0_i32 = arith.constant 0 : i32
    %c0_i32_0 = arith.constant 0 : i32
    %c0_i32_1 = arith.constant 0 : i32
    return %c0_i32, %c0_i32_0 : i32, i32
  }
  func.func @transform_3(%arg0: i32, %arg1: i32) -> (i32, i32) {
    %c0_i32 = arith.constant 0 : i32
    %c0_i32_0 = arith.constant 0 : i32
    %c0_i32_1 = arith.constant 0 : i32
    return %c0_i32, %c0_i32_0 : i32, i32
  }
  func.func @transform_4(%arg0: i32, %arg1: i32) -> (i32, i32, i32, i32) {
    %c0_i32 = arith.constant 0 : i32
    %c0_i32_0 = arith.constant 0 : i32
    %c0_i32_1 = arith.constant 0 : i32
    return %arg0, %c0_i32, %arg1, %c0_i32_0 : i32, i32, i32, i32
  }
}

</mosaic_0001>

<llo_original>
// kernel: upsample_modules_forward.1
$region0: #{upsample_modules_forward.1}
  #allocation0 [shape = 'u32[]', space=smem, size = 0x4, offset = 0x4, fixed_abs, tag = 'smem constant byte address 0x4 - core index']
  #allocation1 [shape = 'u32[144,128]{1,0:T(1,128)}', space=vmem, size = 0x12000, scoped, tag = 'internal scratch']
  %s0 = inlined_call_operand.hbm [shape: f32[2,4,16,16], index: 0, kind: input, shape index: {}]
  %s1 = inlined_call_operand.vmem [shape: f32[2,4], index: 1, kind: input, shape index: {}]
  %s2 = inlined_call_operand.vmem [shape: f32[16,32], index: 2, kind: input, shape index: {}]
  %s3 = inlined_call_operand.vmem [shape: f32[2,1], index: 3, kind: input, shape index: {}]
  %s4 = inlined_call_operand.hbm [shape: f32[2,2,32,32], index: 4, kind: output, shape index: {}]
  %s5 = sld [smem:[#allocation0]]
  $region53: #{upsample_modules_forward.1} parent=0
    _
  %s7 = ssub.s32 1, %s5
  %s8 = scalar_select 0, %s7, %s5
  $region1: #{upsample_modules_forward.1} parent=0
    #allocation2 [shape = 'u8[65536]{0}', space=vmem, size = 0x10000, scoped, tag = 'input window, operand 0']
    #allocation3 [shape = 's32[2]{0}', space=sflag, size = 0x8, scoped, tag = 'scoped memory for upsample_modules_forward.1']
    #allocation4 [shape = 's32[2]{0}', space=sflag, size = 0x8, scoped, tag = 'scoped memory for upsample_modules_forward.1']
    #allocation5 [shape = 'u8[65536]{0}', space=vmem, size = 0x10000, scoped, tag = 'output window, operand 0']
    %9 = vsyncpa [#allocation3], 0
    %s10 = scalar_lea.sflag [#allocation3], 1
    %11 = vsyncpa %s10, 0
    %12 = vsyncpa [#allocation4], 0
    %s13 = scalar_lea.sflag [#allocation4], 1
    %14 = vsyncpa %s13, 0
    loop: start=0, step=1, limit=4
    $region2: #{upsample_modules_forward.1} parent=1 // loop_pre_header
      _
    $region3: #{upsample_modules_forward.1} parent=1 // loop_header
      %s16 = sphi 0, %s20
      %p17 = scmp.ge.s32.totalorder %s16, 4
      %s23 = sphi 0, %s35
      %s24 = sphi 0, %s31
      %s25 = sphi 0, %s23
      %s26 = sphi 0, %s24
      %s27 = sphi 0, %s25
      %s28 = sphi 0, %s26
      %s40 = sphi 0, %s42
      %s43 = sphi 0, %s40
      %s44 = sphi 0, %s43
      %s60 = sphi 0, %s44
      %s64 = sphi 0, %s64
      %s66 = sphi 0, %s64
      %s67 = sphi 0, %s66
      %s81 = sphi 0, %s67
      %s85 = sphi 0, %s85
      %s87 = sphi 0, %s85
      %s88 = sphi 0, %s87
      %s102 = sphi 0, %s88
      %s106 = sphi 0, %s106
      %s108 = sphi 0, %s106
      %s109 = sphi 0, %s108
      %s123 = sphi 0, %s109
      %s131 = sphi 0, %s133
      %s134 = sphi 0, %s131
      %s135 = sphi 0, %s134
      %s151 = sphi 0, %s135
    $region4: #{upsample_modules_forward.1} parent=1 // loop_header_branch
      %19 = sbr.rel (%p17) target = $region8
    $region5: #{upsample_modules_forward.1} parent=1 // loop_body
      %s21 = ssub.s32 %s16, 1
      %s22 = ssub.s32 %s16, 2
      %s29 = sadd.s32 1, %s24
      %p30 = scmp.ge.s32.totalorder %s29, 1
      %s31 = scalar_select %p30, 0, %s29
      %s32 = sadd.s32 1, %s23
      %s33 = scalar_select %p30, %s32, %s23
      %p34 = scmp.ge.s32.totalorder %s33, 2
      %s35 = scalar_select %p34, 0, %s33
      %s36 = ssub.s32 %s23, %s35
      %s37 = ssub.s32 %s24, %s31
      %s38 = sor.u32 %s36, %s37
      %p39 = scmp.eq.s32.totalorder %s38, 0
      %s41 = sadd.s32 %s40, 1
      %s42 = scalar_select %p39, %s40, %s41
      %p45 = pneg %p39
      %p46 = scmp.eq.s32.totalorder %s16, 1
      %p47 = por %p45, %p46
      %p48 = scmp.ne.s32.totalorder %s40, %s43
      %p49 = scmp.eq.s32.totalorder %s16, 0
      %p50 = por %p48, %p49
      %p51 = scmp.ne.s32.totalorder %s40, %s43
      %p52 = scmp.eq.s32.totalorder %s21, 1
      %p53 = por %p51, %p52
      %p54 = scmp.ne.s32.totalorder %s43, %s44
      %p55 = scmp.eq.s32.totalorder %s21, 0
      %p56 = por %p54, %p55
      %p57 = scmp.ne.s32.totalorder %s43, %s44
      %p58 = scmp.eq.s32.totalorder %s22, 1
      %p59 = por %p57, %p58
      %p61 = scmp.ne.s32.totalorder %s44, %s60
      %p62 = scmp.eq.s32.totalorder %s22, 0
      %p63 = por %p61, %p62
      %s65 = sadd.s32 %s64, 1
      %p68 = scmp.eq.s32.totalorder %s16, 1
      %p69 = scmp.ne.s32.totalorder %s64, %s66
      %p70 = scmp.eq.s32.totalorder %s16, 0
      %p71 = por %p69, %p70
      %p72 = scmp.ne.s32.totalorder %s64, %s66
      %p73 = scmp.eq.s32.totalorder %s21, 1
      %p74 = por %p72, %p73
      %p75 = scmp.ne.s32.totalorder %s66, %s67
      %p76 = scmp.eq.s32.totalorder %s21, 0
      %p77 = por %p75, %p76
      %p78 = scmp.ne.s32.totalorder %s66, %s67
      %p79 = scmp.eq.s32.totalorder %s22, 1
      %p80 = por %p78, %p79
      %p82 = scmp.ne.s32.totalorder %s67, %s81
      %p83 = scmp.eq.s32.totalorder %s22, 0
      %p84 = por %p82, %p83
      %s86 = sadd.s32 %s85, 1
      %p89 = scmp.eq.s32.totalorder %s16, 1
      %p90 = scmp.ne.s32.totalorder %s85, %s87
      %p91 = scmp.eq.s32.totalorder %s16, 0
      %p92 = por %p90, %p91
      %p93 = scmp.ne.s32.totalorder %s85, %s87
      %p94 = scmp.eq.s32.totalorder %s21, 1
      %p95 = por %p93, %p94
      %p96 = scmp.ne.s32.totalorder %s87, %s88
      %p97 = scmp.eq.s32.totalorder %s21, 0
      %p98 = por %p96, %p97
      %p99 = scmp.ne.s32.totalorder %s87, %s88
      %p100 = scmp.eq.s32.totalorder %s22, 1
      %p101 = por %p99, %p100
      %p103 = scmp.ne.s32.totalorder %s88, %s102
      %p104 = scmp.eq.s32.totalorder %s22, 0
      %p105 = por %p103, %p104
      %s107 = sadd.s32 %s106, 1
      %p110 = scmp.eq.s32.totalorder %s16, 1
      %p111 = scmp.ne.s32.totalorder %s106, %s108
      %p112 = scmp.eq.s32.totalorder %s16, 0
      %p113 = por %p111, %p112
      %p114 = scmp.ne.s32.totalorder %s106, %s108
      %p115 = scmp.eq.s32.totalorder %s21, 1
      %p116 = por %p114, %p115
      %p117 = scmp.ne.s32.totalorder %s108, %s109
      %p118 = scmp.eq.s32.totalorder %s21, 0
      %p119 = por %p117, %p118
      %p120 = scmp.ne.s32.totalorder %s108, %s109
      %p121 = scmp.eq.s32.totalorder %s22, 1
      %p122 = por %p120, %p121
      %p124 = scmp.ne.s32.totalorder %s109, %s123
      %p125 = scmp.eq.s32.totalorder %s22, 0
      %p126 = por %p124, %p125
      %s127 = ssub.s32 %s23, %s35
      %s128 = ssub.s32 %s24, %s31
      %s129 = sor.u32 %s127, %s128
      %p130 = scmp.eq.s32.totalorder %s129, 0
      %s132 = sadd.s32 %s131, 1
      %s133 = scalar_select %p130, %s131, %s132
      %p136 = pneg %p130
      %p137 = scmp.eq.s32.totalorder %s16, 1
      %p138 = por %p136, %p137
      %p139 = scmp.ne.s32.totalorder %s131, %s134
      %p140 = scmp.eq.s32.totalorder %s16, 0
      %p141 = por %p139, %p140
      %p142 = scmp.ne.s32.totalorder %s131, %s134
      %p143 = scmp.eq.s32.totalorder %s21, 1
      %p144 = por %p142, %p143
      %p145 = scmp.ne.s32.totalorder %s134, %s135
      %p146 = scmp.eq.s32.totalorder %s21, 0
      %p147 = por %p145, %p146
      %p148 = scmp.ne.s32.totalorder %s134, %s135
      %p149 = scmp.eq.s32.totalorder %s22, 1
      %p150 = por %p148, %p149
      %p152 = scmp.ne.s32.totalorder %s135, %s151
      %p153 = scmp.eq.s32.totalorder %s22, 0
      %p154 = por %p152, %p153
      %p155 = scmp.le.s32.totalorder 1, %s16
      %p156 = scmp.lt.s32.totalorder %s16, 3
      %p157 = pnand %p155, %p156
      %p158 = pneg %p157
      // Predicated region
      $region9: #{upsample_modules_forward.1} parent=5 // pred_check
        _
      $region10: #{upsample_modules_forward.1} parent=5 // pred_check_branch
        %160 = sbr.rel (%p157) target = $region12
      $region11: #{upsample_modules_forward.1} parent=5 // pred_region
        %s161 = ssub.s32 %s16, 1
        // Predicated region
        $region13: #{upsample_modules_forward.1} parent=11 // pred_check
          %p162 = pneg %p77
        $region14: #{upsample_modules_forward.1} parent=11 // pred_check_branch
          %164 = sbr.rel (%p162) target = $region16
        $region15: #{upsample_modules_forward.1} parent=11 // pred_region
          _
        $region16: #{upsample_modules_forward.1} parent=11 // pred_fallthru
          _
        // Predicated region
        $region17: #{upsample_modules_forward.1} parent=11 // pred_check
          %p165 = pneg %p98
        $region18: #{upsample_modules_forward.1} parent=11 // pred_check_branch
          %167 = sbr.rel (%p165) target = $region20
        $region19: #{upsample_modules_forward.1} parent=11 // pred_region
          _
        $region20: #{upsample_modules_forward.1} parent=11 // pred_fallthru
          _
        // Predicated region
        $region21: #{upsample_modules_forward.1} parent=11 // pred_check
          %p168 = pneg %p119
        $region22: #{upsample_modules_forward.1} parent=11 // pred_check_branch
          %170 = sbr.rel (%p168) target = $region24
        $region23: #{upsample_modules_forward.1} parent=11 // pred_region
          _
        $region24: #{upsample_modules_forward.1} parent=11 // pred_fallthru
          _
      $region12: #{upsample_modules_forward.1} parent=5 // pred_fallthru
        _
      %p171 = scmp.lt.s32.totalorder %s16, 2
      // Predicated region
      $region25: #{upsample_modules_forward.1} parent=5 // pred_check
        %p172 = pneg %p171
      $region26: #{upsample_modules_forward.1} parent=5 // pred_check_branch
        %174 = sbr.rel (%p172) target = $region28
      $region27: #{upsample_modules_forward.1} parent=5 // pred_region
        // Predicated region
        $region29: #{upsample_modules_forward.1} parent=27 // pred_check
          %p175 = pneg %p50
        $region30: #{upsample_modules_forward.1} parent=27 // pred_check_branch
          %177 = sbr.rel (%p175) target = $region32
        $region31: #{upsample_modules_forward.1} parent=27 // pred_region
          %s178 = sand.u32 %s40, 1
          %s179 = scalar_lea.sflag [#allocation3], %s178
          %s180 = sand.u32 %s40, 1
          %s181 = smul.addr %s180, 64
          %s182 = scalar_lea.vmem [#allocation2], %s181
          %s183 = smul.u32 2, %s24
          %s185 = ssub.s32 1024, 1024
          %186 = vsyncadd %s179, %s185
          %s187 = smul.addr %s23, 8
          %s188 = sadd.s32 %s183, %s187
          %s189 = smul.addr %s188, 128
          %s190 = scalar_lea.hbm %s0, %s189
          %s191 = sshll.u32 %s182, 4
          %s192 = int_to_ptr.vmem [resolvable:$true] %s191
          %197 = dma.hbm_to_vmem [thread:$0]  %s190, 1024, %s192, %s179, 128, 128, 8
        $region32: #{upsample_modules_forward.1} parent=27 // pred_fallthru
          _
      $region28: #{upsample_modules_forward.1} parent=5 // pred_fallthru
        _
      %p198 = scmp.le.s32.totalorder 1, %s16
      %p199 = scmp.lt.s32.totalorder %s16, 3
      %p200 = pnand %p198, %p199
      %p201 = pneg %p200
      // Predicated region
      $region33: #{upsample_modules_forward.1} parent=5 // pred_check
        _
      $region34: #{upsample_modules_forward.1} parent=5 // pred_check_branch
        %203 = sbr.rel (%p200) target = $region36
      $region35: #{upsample_modules_forward.1} parent=5 // pred_region
        %s204 = ssub.s32 %s16, 1
        %s205 = sand.u32 %s43, 1
        %s206 = scalar_lea.sflag [#allocation3], %s205
        %s207 = sand.u32 %s43, 1
        %s208 = smul.addr %s207, 64
        %s209 = scalar_lea.vmem [#allocation2], %s208
        // Predicated region
        $region37: #{upsample_modules_forward.1} parent=35 // pred_check
          %p210 = pneg %p56
        $region38: #{upsample_modules_forward.1} parent=35 // pred_check_branch
          %212 = sbr.rel (%p210) target = $region40
        $region39: #{upsample_modules_forward.1} parent=35 // pred_region
          %213 = dma.done %s206, 1024
        $region40: #{upsample_modules_forward.1} parent=35 // pred_fallthru
          _
        %s214 = sand.u32 %s43, 1
        %s215 = scalar_lea.sflag [#allocation3], %s214
        %s216 = sand.u32 %s43, 1
        %s217 = smul.addr %s216, 64
        %s218 = scalar_lea.vmem [#allocation2], %s217
        %p219 = pneg %p56
        %p220 = pneg %p53
        %p221 = pneg %p77
        %p222 = pneg %p74
        %p223 = pneg %p98
        %p224 = pneg %p95
        %p225 = pneg %p119
        %p226 = pneg %p116
        %p227 = pneg %p147
        %p228 = pneg %p144
        %s229 = sand.u32 %s134, 1
        %s230 = scalar_lea.sflag [#allocation4], %s229
        %s231 = sand.u32 %s134, 1
        %s232 = smul.addr %s231, 64
        %s233 = scalar_lea.vmem [#allocation5], %s232
        %s234 = smul.u32 2, %s26
        %s235 = smul.u32 4, %s26
        %v236 = vld [vmem:[%s1] sm:$0x3]
        %v237 = vld [vmem:[%s2] sm:$0xff]
        %v238 = vld [vmem:[%s2 + $0x8] sm:$0xff]
        %v239 = vld [vmem:[%s3] sm:$0x3]
        %v240 = vld [vmem:[%s209] sm:$0x1]
        %v241 = vld [vmem:[%s209 + $0x10] sm:$0x1]
        %v242 = vld [vmem:[%s209 + $0x20] sm:$0x1]
        %v243 = vld [vmem:[%s209 + $0x30] sm:$0x1]
        %245 = vset.pattern.permute.xlu0 0
        %246 = vperm.xlu0 %245, %v239
        %v247 = vpop.permute.xlu0 %246
        %v253 = vrot.slane %v241, 7
        %vm254 = vcmask 1041409
        %v255 = vsel %vm254, %v253, %v240
        %v256 = vrot.slane %v242, 6
        %vm257 = vcmask 1042434
        %v258 = vsel %vm257, %v256, %v255
        %v259 = vrot.slane %v243, 5
        %vm260 = vcmask 1043459
        %v261 = vsel %vm260, %v259, %v258
        %vm262 = vcmask 31744
        %v264 = vsel %vm262, %v236, 0
        %vm266 = vcmask 1043456
        %v267 = vsel %vm266, %v261, 0
        %269 = vmatprep.subr.mxu0 0.0
        %270 = vmatpush1.msra.mxu0 0.0
        %271 = vmatprep.subr.mxu0 0.0
        %272 = vmatpush1.msra.mxu0 0.0
        %273 = vmatprep.subr.mxu0 0.0
        %274 = vmatpush1.msra.mxu0 0.0
        %275 = vmatprep.subr.mxu0 0.0
        %276 = vmatpush1.msra.mxu0 0.0
        %277 = vmatprep.subr.mxu0 0.0
        %278 = vmatpush1.msra.mxu0 0.0
        %279 = vmatprep.subr.mxu0 0.0
        %280 = vmatpush1.msra.mxu0 0.0
        %281 = vmatprep.subr.mxu0 0.0
        %282 = vmatpush1.msra.mxu0 0.0
        %283 = vmatprep.subr.mxu0 0.0
        %284 = vmatpush1.msra.mxu0 0.0
        %285 = vmatprep.subr.mxu0 0.0
        %286 = vmatpush1.msra.mxu0 0.0
        %287 = vmatprep.subr.mxu0 0.0
        %288 = vmatpush1.msra.mxu0 0.0
        %289 = vmatprep.subr.mxu0 0.0
        %290 = vmatpush1.msra.mxu0 0.0
        %291 = vmatprep.subr.mxu0 0.0
        %292 = vmatpush1.msra.mxu0 0.0
        %293 = vmatprep.subr.mxu0 0.0
        %294 = vmatpush1.msra.mxu0 0.0
        %295 = vmatprep.subr.mxu0 0.0
        %296 = vmatpush1.msra.mxu0 0.0
        %297 = vmatprep.subr.mxu0 0.0
        %298 = vmatpush1.msra.mxu0 0.0
        %299 = vmatprep.subr.mxu0 0.0
        %300 = vmatpush1.msra.mxu0 %v267
        %301 = vmatprep.subr.mxu0 0.0
        %302 = vmatpush2.msra.mxu0 0.0
        %303 = vmatprep.subr.mxu0 0.0
        %304 = vmatpush2.msra.mxu0 0.0
        %305 = vmatprep.subr.mxu0 0.0
        %306 = vmatpush2.msra.mxu0 0.0
        %307 = vmatprep.subr.mxu0 0.0
        %308 = vmatpush2.msra.mxu0 0.0
        %309 = vmatprep.subr.mxu0 0.0
        %310 = vmatpush2.msra.mxu0 0.0
        %311 = vmatprep.subr.mxu0 0.0
        %312 = vmatpush2.msra.mxu0 0.0
        %313 = vmatprep.subr.mxu0 0.0
        %314 = vmatpush2.msra.mxu0 0.0
        %315 = vmatprep.subr.mxu0 0.0
        %316 = vmatpush2.msra.mxu0 0.0
        %317 = vmatprep.subr.mxu0 0.0
        %318 = vmatpush2.msra.mxu0 0.0
        %319 = vmatprep.subr.mxu0 0.0
        %320 = vmatpush2.msra.mxu0 0.0
        %321 = vmatprep.subr.mxu0 0.0
        %322 = vmatpush2.msra.mxu0 0.0
        %323 = vmatprep.subr.mxu0 0.0
        %324 = vmatpush2.msra.mxu0 0.0
        %325 = vmatprep.subr.mxu0 0.0
        %326 = vmatpush2.msra.mxu0 0.0
        %327 = vmatprep.subr.mxu0 0.0
        %328 = vmatpush2.msra.mxu0 0.0
        %329 = vmatprep.subr.mxu0 0.0
        %330 = vmatpush2.msra.mxu0 0.0
        %331 = vmatprep.subr.mxu0 0.0
        %332 = vmatpush2.msra.mxu0 0.0
        %333 = vmatprep.mubr.f32.mxu0 0.0
        %334 = vmatmul.mubr.f32.gmra.mxu0 %v264
        %v335 = vpop.f32.mrf.mxu0
        %v336 = vadd.f32 %v247, %v335
        %v337 = vpop.f32.mrf.mxu0
        %338 = vdwg.mxu0
        %vm339 = vcmp.gt.f32.partialorder %v336, 0.0
        %v340 = vmul.f32 %v336, 0.1
        %v341 = vsel %vm339, %v336, %v340
        %vm342 = vcmask 130048
        %v344 = vsel %vm342, %v341, 0
        %346 = vmatprep.subr.mxu0 0.0
        %347 = vmatpush1.msra.mxu0 0.0
        %348 = vmatprep.subr.mxu0 0.0
        %349 = vmatpush1.msra.mxu0 0.0
        %350 = vmatprep.subr.mxu0 0.0
        %351 = vmatpush1.msra.mxu0 0.0
        %352 = vmatprep.subr.mxu0 0.0
        %353 = vmatpush1.msra.mxu0 0.0
        %354 = vmatprep.subr.mxu0 0.0
        %355 = vmatpush1.msra.mxu0 0.0
        %356 = vmatprep.subr.mxu0 0.0
        %357 = vmatpush1.msra.mxu0 0.0
        %358 = vmatprep.subr.mxu0 0.0
        %359 = vmatpush1.msra.mxu0 0.0
        %360 = vmatprep.subr.mxu0 0.0
        %361 = vmatpush1.msra.mxu0 0.0
        %362 = vmatprep.subr.mxu0 0.0
        %363 = vmatpush1.msra.mxu0 0.0
        %364 = vmatprep.subr.mxu0 0.0
        %365 = vmatpush1.msra.mxu0 0.0
        %366 = vmatprep.subr.mxu0 0.0
        %367 = vmatpush1.msra.mxu0 0.0
        %368 = vmatprep.subr.mxu0 0.0
        %369 = vmatpush1.msra.mxu0 0.0
        %370 = vmatprep.subr.mxu0 0.0
        %371 = vmatpush1.msra.mxu0 0.0
        %372 = vmatprep.subr.mxu0 0.0
        %373 = vmatpush1.msra.mxu0 0.0
        %374 = vmatprep.subr.mxu0 0.0
        %375 = vmatpush1.msra.mxu0 %v238
        %376 = vmatprep.subr.mxu0 0.0
        %377 = vmatpush1.msra.mxu0 %v237
        %378 = vmatprep.subr.mxu0 0.0
        %379 = vmatpush2.msra.mxu0 0.0
        %380 = vmatprep.subr.mxu0 0.0
        %381 = vmatpush2.msra.mxu0 0.0
        %382 = vmatprep.subr.mxu0 0.0
        %383 = vmatpush2.msra.mxu0 0.0
        %384 = vmatprep.subr.mxu0 0.0
        %385 = vmatpush2.msra.mxu0 0.0
        %386 = vmatprep.subr.mxu0 0.0
        %387 = vmatpush2.msra.mxu0 0.0
        %388 = vmatprep.subr.mxu0 0.0
        %389 = vmatpush2.msra.mxu0 0.0
        %390 = vmatprep.subr.mxu0 0.0
        %391 = vmatpush2.msra.mxu0 0.0
        %392 = vmatprep.subr.mxu0 0.0
        %393 = vmatpush2.msra.mxu0 0.0
        %394 = vmatprep.subr.mxu0 0.0
        %395 = vmatpush2.msra.mxu0 0.0
        %396 = vmatprep.subr.mxu0 0.0
        %397 = vmatpush2.msra.mxu0 0.0
        %398 = vmatprep.subr.mxu0 0.0
        %399 = vmatpush2.msra.mxu0 0.0
        %400 = vmatprep.subr.mxu0 0.0
        %401 = vmatpush2.msra.mxu0 0.0
        %402 = vmatprep.subr.mxu0 0.0
        %403 = vmatpush2.msra.mxu0 0.0
        %404 = vmatprep.subr.mxu0 0.0
        %405 = vmatpush2.msra.mxu0 0.0
        %406 = vmatprep.subr.mxu0 0.0
        %407 = vmatpush2.msra.mxu0 0.0
        %408 = vmatprep.subr.mxu0 0.0
        %409 = vmatpush2.msra.mxu0 0.0
        %410 = vmatprep.mubr.f32.mxu0 0.0
        %411 = vmatmul.mubr.f32.gmra.mxu0 %v344
        %v412 = vpop.f32.mrf.mxu0
        %v413 = vadd.f32 0.0, %v412
        %v414 = vpop.f32.mrf.mxu0
        %415 = vdwg.mxu0
        %v418 = vunpack.c.l.s4 1966171168
        %v419 = vunpack.c.0.s8 %v418
        %v420 = vlaneseq
        %v421 = vshrl.u32 %v420, 7
        %v422 = vsub.s32 %v419, %v421
        %v423 = vrot.slane %v413, %v422
        %v424 = vcombine.high %v423, %v423
        %v426 = vunpack.c.l.s4 1966171168
        %v427 = vunpack.c.0.s8 %v426
        %v428 = vlaneseq
        %v429 = vshrl.u32 %v428, 7
        %v430 = vsub.s32 %v427, %v429
        %v431 = vrot.slane %v423, %v430
        %v433 = vunpack.c.l.s4 1966171168
        %v434 = vunpack.c.0.s8 %v433
        %v435 = vlaneseq
        %v436 = vshrl.u32 %v435, 7
        %v437 = vsub.s32 %v434, %v436
        %v438 = vrot.slane %v424, %v437
        %vm441 = vcmask 253952
        %442 = vst.msk [vmem:[%s233] sm:$0x1] %vm441, %v431
        %443 = vst.msk [vmem:[%s233 + $0x20] sm:$0x1] %vm441, %v438
        %444 = vst.msk [vmem:[%s233 + $0x1] sm:$0x1] %vm441, %v431
        %445 = vst.msk [vmem:[%s233 + $0x21] sm:$0x1] %vm441, %v438
        %v446 = vld [vmem:[%s209 + $0x1] sm:$0x1]
        %v447 = vld [vmem:[%s209 + $0x11] sm:$0x1]
        %v448 = vld [vmem:[%s209 + $0x21] sm:$0x1]
        %v449 = vld [vmem:[%s209 + $0x31] sm:$0x1]
        %v454 = vrot.slane %v447, 7
        %v455 = vsel %vm254, %v454, %v446
        %v456 = vrot.slane %v448, 6
        %v457 = vsel %vm257, %v456, %v455
        %v458 = vrot.slane %v449, 5
        %v459 = vsel %vm260, %v458, %v457
        %v460 = vsel %vm266, %v459, 0
        %462 = vmatprep.subr.mxu0 0.0
        %463 = vmatpush1.msra.mxu0 0.0
        %464 = vmatprep.subr.mxu0 0.0
        %465 = vmatpush1.msra.mxu0 0.0
        %466 = vmatprep.subr.mxu0 0.0
        %467 = vmatpush1.msra.mxu0 0.0
        %468 = vmatprep.subr.mxu0 0.0
        %469 = vmatpush1.msra.mxu0 0.0
        %470 = vmatprep.subr.mxu0 0.0
        %471 = vmatpush1.msra.mxu0 0.0
        %472 = vmatprep.subr.mxu0 0.0
        %473 = vmatpush1.msra.mxu0 0.0
        %474 = vmatprep.subr.mxu0 0.0
        %475 = vmatpush1.msra.mxu0 0.0
        %476 = vmatprep.subr.mxu0 0.0
        %477 = vmatpush1.msra.mxu0 0.0
        %478 = vmatprep.subr.mxu0 0.0
        %479 = vmatpush1.msra.mxu0 0.0
        %480 = vmatprep.subr.mxu0 0.0
        %481 = vmatpush1.msra.mxu0 0.0
        %482 = vmatprep.subr.mxu0 0.0
        %483 = vmatpush1.msra.mxu0 0.0
        %484 = vmatprep.subr.mxu0 0.0
        %485 = vmatpush1.msra.mxu0 0.0
        %486 = vmatprep.subr.mxu0 0.0
        %487 = vmatpush1.msra.mxu0 0.0
        %488 = vmatprep.subr.mxu0 0.0
        %489 = vmatpush1.msra.mxu0 0.0
        %490 = vmatprep.subr.mxu0 0.0
        %491 = vmatpush1.msra.mxu0 0.0
        %492 = vmatprep.subr.mxu0 0.0
        %493 = vmatpush1.msra.mxu0 %v460
        %494 = vmatprep.subr.mxu0 0.0
        %495 = vmatpush2.msra.mxu0 0.0
        %496 = vmatprep.subr.mxu0 0.0
        %497 = vmatpush2.msra.mxu0 0.0
        %498 = vmatprep.subr.mxu0 0.0
        %499 = vmatpush2.msra.mxu0 0.0
        %500 = vmatprep.subr.mxu0 0.0
        %501 = vmatpush2.msra.mxu0 0.0
        %502 = vmatprep.subr.mxu0 0.0
        %503 = vmatpush2.msra.mxu0 0.0
        %504 = vmatprep.subr.mxu0 0.0
        %505 = vmatpush2.msra.mxu0 0.0
        %506 = vmatprep.subr.mxu0 0.0
        %507 = vmatpush2.msra.mxu0 0.0
        %508 = vmatprep.subr.mxu0 0.0
        %509 = vmatpush2.msra.mxu0 0.0
        %510 = vmatprep.subr.mxu0 0.0
        %511 = vmatpush2.msra.mxu0 0.0
        %512 = vmatprep.subr.mxu0 0.0
        %513 = vmatpush2.msra.mxu0 0.0
        %514 = vmatprep.subr.mxu0 0.0
        %515 = vmatpush2.msra.mxu0 0.0
        %516 = vmatprep.subr.mxu0 0.0
        %517 = vmatpush2.msra.mxu0 0.0
        %518 = vmatprep.subr.mxu0 0.0
        %519 = vmatpush2.msra.mxu0 0.0
        %520 = vmatprep.subr.mxu0 0.0
        %521 = vmatpush2.msra.mxu0 0.0
        %522 = vmatprep.subr.mxu0 0.0
        %523 = vmatpush2.msra.mxu0 0.0
        %524 = vmatprep.subr.mxu0 0.0
        %525 = vmatpush2.msra.mxu0 0.0
        %526 = vmatprep.mubr.f32.mxu0 0.0
        %527 = vmatmul.mubr.f32.gmra.mxu0 %v264
        %v528 = vpop.f32.mrf.mxu0
        %v529 = vadd.f32 %v247, %v528
        %v530 = vpop.f32.mrf.mxu0
        %531 = vdwg.mxu0
        %vm532 = vcmp.gt.f32.partialorder %v529, 0.0
        %v533 = vmul.f32 %v529, 0.1
        %v534 = vsel %vm532, %v529, %v533
        %v536 = vsel %vm342, %v534, 0
        %538 = vmatprep.subr.mxu0 0.0
        %539 = vmatpush1.msra.mxu0 0.0
        %540 = vmatprep.subr.mxu0 0.0
        %541 = vmatpush1.msra.mxu0 0.0
        %542 = vmatprep.subr.mxu0 0.0
        %543 = vmatpush1.msra.mxu0 0.0
        %544 = vmatprep.subr.mxu0 0.0
        %545 = vmatpush1.msra.mxu0 0.0
        %546 = vmatprep.subr.mxu0 0.0
        %547 = vmatpush1.msra.mxu0 0.0
        %548 = vmatprep.subr.mxu0 0.0
        %549 = vmatpush1.msra.mxu0 0.0
        %550 = vmatprep.subr.mxu0 0.0
        %551 = vmatpush1.msra.mxu0 0.0
        %552 = vmatprep.subr.mxu0 0.0
        %553 = vmatpush1.msra.mxu0 0.0
        %554 = vmatprep.subr.mxu0 0.0
        %555 = vmatpush1.msra.mxu0 0.0
        %556 = vmatprep.subr.mxu0 0.0
        %557 = vmatpush1.msra.mxu0 0.0
        %558 = vmatprep.subr.mxu0 0.0
        %559 = vmatpush1.msra.mxu0 0.0
        %560 = vmatprep.subr.mxu0 0.0
        %561 = vmatpush1.msra.mxu0 0.0
        %562 = vmatprep.subr.mxu0 0.0
        %563 = vmatpush1.msra.mxu0 0.0
        %564 = vmatprep.subr.mxu0 0.0
        %565 = vmatpush1.msra.mxu0 0.0
        %566 = vmatprep.subr.mxu0 0.0
        %567 = vmatpush1.msra.mxu0 %v238
        %568 = vmatprep.subr.mxu0 0.0
        %569 = vmatpush1.msra.mxu0 %v237
        %570 = vmatprep.subr.mxu0 0.0
        %571 = vmatpush2.msra.mxu0 0.0
        %572 = vmatprep.subr.mxu0 0.0
        %573 = vmatpush2.msra.mxu0 0.0
        %574 = vmatprep.subr.mxu0 0.0
        %575 = vmatpush2.msra.mxu0 0.0
        %576 = vmatprep.subr.mxu0 0.0
        %577 = vmatpush2.msra.mxu0 0.0
        %578 = vmatprep.subr.mxu0 0.0
        %579 = vmatpush2.msra.mxu0 0.0
        %580 = vmatprep.subr.mxu0 0.0
        %581 = vmatpush2.msra.mxu0 0.0
        %582 = vmatprep.subr.mxu0 0.0
        %583 = vmatpush2.msra.mxu0 0.0
        %584 = vmatprep.subr.mxu0 0.0
        %585 = vmatpush2.msra.mxu0 0.0
        %586 = vmatprep.subr.mxu0 0.0
        %587 = vmatpush2.msra.mxu0 0.0
        %588 = vmatprep.subr.mxu0 0.0
        %589 = vmatpush2.msra.mxu0 0.0
        %590 = vmatprep.subr.mxu0 0.0
        %591 = vmatpush2.msra.mxu0 0.0
        %592 = vmatprep.subr.mxu0 0.0
        %593 = vmatpush2.msra.mxu0 0.0
        %594 = vmatprep.subr.mxu0 0.0
        %595 = vmatpush2.msra.mxu0 0.0
        %596 = vmatprep.subr.mxu0 0.0
        %597 = vmatpush2.msra.mxu0 0.0
        %598 = vmatprep.subr.mxu0 0.0
        %599 = vmatpush2.msra.mxu0 0.0
        %600 = vmatprep.subr.mxu0 0.0
        %601 = vmatpush2.msra.mxu0 0.0
        %602 = vmatprep.mubr.f32.mxu0 0.0
        %603 = vmatmul.mubr.f32.gmra.mxu0 %v536
        %v604 = vpop.f32.mrf.mxu0
        %v605 = vadd.f32 0.0, %v604
        %v606 = vpop.f32.mrf.mxu0
        %607 = vdwg.mxu0
        %v610 = vunpack.c.l.s4 1966171168
        %v611 = vunpack.c.0.s8 %v610
        %v612 = vlaneseq
        %v613 = vshrl.u32 %v612, 7
        %v614 = vsub.s32 %v611, %v613
        %v615 = vrot.slane %v605, %v614
        %v616 = vcombine.high %v615, %v615
        %v618 = vunpack.c.l.s4 1966171168
        %v619 = vunpack.c.0.s8 %v618
        %v620 = vlaneseq
        %v621 = vshrl.u32 %v620, 7
        %v622 = vsub.s32 %v619, %v621
        %v623 = vrot.slane %v615, %v622
        %v625 = vunpack.c.l.s4 1966171168
        %v626 = vunpack.c.0.s8 %v625
        %v627 = vlaneseq
        %v628 = vshrl.u32 %v627, 7
        %v629 = vsub.s32 %v626, %v628
        %v630 = vrot.slane %v616, %v629
        %633 = vst.msk [vmem:[%s233 + $0x2] sm:$0x1] %vm441, %v623
        %634 = vst.msk [vmem:[%s233 + $0x22] sm:$0x1] %vm441, %v630
        %635 = vst.msk [vmem:[%s233 + $0x3] sm:$0x1] %vm441, %v623
        %636 = vst.msk [vmem:[%s233 + $0x23] sm:$0x1] %vm441, %v630
        %v637 = vld [vmem:[%s209 + $0x2] sm:$0x1]
        %v638 = vld [vmem:[%s209 + $0x12] sm:$0x1]
        %v639 = vld [vmem:[%s209 + $0x22] sm:$0x1]
        %v640 = vld [vmem:[%s209 + $0x32] sm:$0x1]
        %v645 = vrot.slane %v638, 7
        %v646 = vsel %vm254, %v645, %v637
        %v647 = vrot.slane %v639, 6
        %v648 = vsel %vm257, %v647, %v646
        %v649 = vrot.slane %v640, 5
        %v650 = vsel %vm260, %v649, %v648
        %v651 = vsel %vm266, %v650, 0
        %653 = vmatprep.subr.mxu0 0.0
        %654 = vmatpush1.msra.mxu0 0.0
        %655 = vmatprep.subr.mxu0 0.0
        %656 = vmatpush1.msra.mxu0 0.0
        %657 = vmatprep.subr.mxu0 0.0
        %658 = vmatpush1.msra.mxu0 0.0
        %659 = vmatprep.subr.mxu0 0.0
        %660 = vmatpush1.msra.mxu0 0.0
        %661 = vmatprep.subr.mxu0 0.0
        %662 = vmatpush1.msra.mxu0 0.0
        %663 = vmatprep.subr.mxu0 0.0
        %664 = vmatpush1.msra.mxu0 0.0
        %665 = vmatprep.subr.mxu0 0.0
        %666 = vmatpush1.msra.mxu0 0.0
        %667 = vmatprep.subr.mxu0 0.0
        %668 = vmatpush1.msra.mxu0 0.0
        %669 = vmatprep.subr.mxu0 0.0
        %670 = vmatpush1.msra.mxu0 0.0
        %671 = vmatprep.subr.mxu0 0.0
        %672 = vmatpush1.msra.mxu0 0.0
        %673 = vmatprep.subr.mxu0 0.0
        %674 = vmatpush1.msra.mxu0 0.0
        %675 = vmatprep.subr.mxu0 0.0
        %676 = vmatpush1.msra.mxu0 0.0
        %677 = vmatprep.subr.mxu0 0.0
        %678 = vmatpush1.msra.mxu0 0.0
        %679 = vmatprep.subr.mxu0 0.0
        %680 = vmatpush1.msra.mxu0 0.0
        %681 = vmatprep.subr.mxu0 0.0
        %682 = vmatpush1.msra.mxu0 0.0
        %683 = vmatprep.subr.mxu0 0.0
        %684 = vmatpush1.msra.mxu0 %v651
        %685 = vmatprep.subr.mxu0 0.0
        %686 = vmatpush2.msra.mxu0 0.0
        %687 = vmatprep.subr.mxu0 0.0
        %688 = vmatpush2.msra.mxu0 0.0
        %689 = vmatprep.subr.mxu0 0.0
        %690 = vmatpush2.msra.mxu0 0.0
        %691 = vmatprep.subr.mxu0 0.0
        %692 = vmatpush2.msra.mxu0 0.0
        %693 = vmatprep.subr.mxu0 0.0
        %694 = vmatpush2.msra.mxu0 0.0
        %695 = vmatprep.subr.mxu0 0.0
        %696 = vmatpush2.msra.mxu0 0.0
        %697 = vmatprep.subr.mxu0 0.0
        %698 = vmatpush2.msra.mxu0 0.0
        %699 = vmatprep.subr.mxu0 0.0
        %700 = vmatpush2.msra.mxu0 0.0
        %701 = vmatprep.subr.mxu0 0.0
        %702 = vmatpush2.msra.mxu0 0.0
        %703 = vmatprep.subr.mxu0 0.0
        %704 = vmatpush2.msra.mxu0 0.0
        %705 = vmatprep.subr.mxu0 0.0
        %706 = vmatpush2.msra.mxu0 0.0
        %707 = vmatprep.subr.mxu0 0.0
        %708 = vmatpush2.msra.mxu0 0.0
        %709 = vmatprep.subr.mxu0 0.0
        %710 = vmatpush2.msra.mxu0 0.0
        %711 = vmatprep.subr.mxu0 0.0
        %712 = vmatpush2.msra.mxu0 0.0
        %713 = vmatprep.subr.mxu0 0.0
        %714 = vmatpush2.msra.mxu0 0.0
        %715 = vmatprep.subr.mxu0 0.0
        %716 = vmatpush2.msra.mxu0 0.0
        %717 = vmatprep.mubr.f32.mxu0 0.0
        %718 = vmatmul.mubr.f32.gmra.mxu0 %v264
        %v719 = vpop.f32.mrf.mxu0
        %v720 = vadd.f32 %v247, %v719
        %v721 = vpop.f32.mrf.mxu0
        %722 = vdwg.mxu0
        %vm723 = vcmp.gt.f32.partialorder %v720, 0.0
        %v724 = vmul.f32 %v720, 0.1
        %v725 = vsel %vm723, %v720, %v724
        %v727 = vsel %vm342, %v725, 0
        %729 = vmatprep.subr.mxu0 0.0
        %730 = vmatpush1.msra.mxu0 0.0
        %731 = vmatprep.subr.mxu0 0.0
        %732 = vmatpush1.msra.mxu0 0.0
        %733 = vmatprep.subr.mxu0 0.0
        %734 = vmatpush1.msra.mxu0 0.0
        %735 = vmatprep.subr.mxu0 0.0
        %736 = vmatpush1.msra.mxu0 0.0
        %737 = vmatprep.subr.mxu0 0.0
        %738 = vmatpush1.msra.mxu0 0.0
        %739 = vmatprep.subr.mxu0 0.0
        %740 = vmatpush1.msra.mxu0 0.0
        %741 = vmatprep.subr.mxu0 0.0
        %742 = vmatpush1.msra.mxu0 0.0
        %743 = vmatprep.subr.mxu0 0.0
        %744 = vmatpush1.msra.mxu0 0.0
        %745 = vmatprep.subr.mxu0 0.0
        %746 = vmatpush1.msra.mxu0 0.0
        %747 = vmatprep.subr.mxu0 0.0
        %748 = vmatpush1.msra.mxu0 0.0
        %749 = vmatprep.subr.mxu0 0.0
        %750 = vmatpush1.msra.mxu0 0.0
        %751 = vmatprep.subr.mxu0 0.0
        %752 = vmatpush1.msra.mxu0 0.0
        %753 = vmatprep.subr.mxu0 0.0
        %754 = vmatpush1.msra.mxu0 0.0
        %755 = vmatprep.subr.mxu0 0.0
        %756 = vmatpush1.msra.mxu0 0.0
        %757 = vmatprep.subr.mxu0 0.0
        %758 = vmatpush1.msra.mxu0 %v238
        %759 = vmatprep.subr.mxu0 0.0
        %760 = vmatpush1.msra.mxu0 %v237
        %761 = vmatprep.subr.mxu0 0.0
        %762 = vmatpush2.msra.mxu0 0.0
        %763 = vmatprep.subr.mxu0 0.0
        %764 = vmatpush2.msra.mxu0 0.0
        %765 = vmatprep.subr.mxu0 0.0
        %766 = vmatpush2.msra.mxu0 0.0
        %767 = vmatprep.subr.mxu0 0.0
        %768 = vmatpush2.msra.mxu0 0.0
        %769 = vmatprep.subr.mxu0 0.0
        %770 = vmatpush2.msra.mxu0 0.0
        %771 = vmatprep.subr.mxu0 0.0
        %772 = vmatpush2.msra.mxu0 0.0
        %773 = vmatprep.subr.mxu0 0.0
        %774 = vmatpush2.msra.mxu0 0.0
        %775 = vmatprep.subr.mxu0 0.0
        %776 = vmatpush2.msra.mxu0 0.0
        %777 = vmatprep.subr.mxu0 0.0
        %778 = vmatpush2.msra.mxu0 0.0
        %779 = vmatprep.subr.mxu0 0.0
        %780 = vmatpush2.msra.mxu0 0.0
        %781 = vmatprep.subr.mxu0 0.0
        %782 = vmatpush2.msra.mxu0 0.0
        %783 = vmatprep.subr.mxu0 0.0
        %784 = vmatpush2.msra.mxu0 0.0
        %785 = vmatprep.subr.mxu0 0.0
        %786 = vmatpush2.msra.mxu0 0.0
        %787 = vmatprep.subr.mxu0 0.0
        %788 = vmatpush2.msra.mxu0 0.0
        %789 = vmatprep.subr.mxu0 0.0
        %790 = vmatpush2.msra.mxu0 0.0
        %791 = vmatprep.subr.mxu0 0.0
        %792 = vmatpush2.msra.mxu0 0.0
        %793 = vmatprep.mubr.f32.mxu0 0.0
        %794 = vmatmul.mubr.f32.gmra.mxu0 %v727
        %v795 = vpop.f32.mrf.mxu0
        %v796 = vadd.f32 0.0, %v795
        %v797 = vpop.f32.mrf.mxu0
        %798 = vdwg.mxu0
        %v801 = vunpack.c.l.s4 1966171168
        %v802 = vunpack.c.0.s8 %v801
        %v803 = vlaneseq
        %v804 = vshrl.u32 %v803, 7
        %v805 = vsub.s32 %v802, %v804
        %v806 = vrot.slane %v796, %v805
        %v807 = vcombine.high %v806, %v806
        %v809 = vunpack.c.l.s4 1966171168
        %v810 = vunpack.c.0.s8 %v809
        %v811 = vlaneseq
        %v812 = vshrl.u32 %v811, 7
        %v813 = vsub.s32 %v810, %v812
        %v814 = vrot.slane %v806, %v813
        %v816 = vunpack.c.l.s4 1966171168
        %v817 = vunpack.c.0.s8 %v816
        %v818 = vlaneseq
        %v819 = vshrl.u32 %v818, 7
        %v820 = vsub.s32 %v817, %v819
        %v821 = vrot.slane %v807, %v820
        %824 = vst.msk [vmem:[%s233 + $0x4] sm:$0x1] %vm441, %v814
        %825 = vst.msk [vmem:[%s233 + $0x24] sm:$0x1] %vm441, %v821
        %826 = vst.msk [vmem:[%s233 + $0x5] sm:$0x1] %vm441, %v814
        %827 = vst.msk [vmem:[%s233 + $0x25] sm:$0x1] %vm441, %v821
        %v828 = vld [vmem:[%s209 + $0x3] sm:$0x1]
        %v829 = vld [vmem:[%s209 + $0x13] sm:$0x1]
        %v830 = vld [vmem:[%s209 + $0x23] sm:$0x1]
        %v831 = vld [vmem:[%s209 + $0x33] sm:$0x1]
        %v836 = vrot.slane %v829, 7
        %v837 = vsel %vm254, %v836, %v828
        %v838 = vrot.slane %v830, 6
        %v839 = vsel %vm257, %v838, %v837
        %v840 = vrot.slane %v831, 5
        %v841 = vsel %vm260, %v840, %v839
        %v842 = vsel %vm266, %v841, 0
        %844 = vmatprep.subr.mxu0 0.0
        %845 = vmatpush1.msra.mxu0 0.0
        %846 = vmatprep.subr.mxu0 0.0
        %847 = vmatpush1.msra.mxu0 0.0
        %848 = vmatprep.subr.mxu0 0.0
        %849 = vmatpush1.msra.mxu0 0.0
        %850 = vmatprep.subr.mxu0 0.0
        %851 = vmatpush1.msra.mxu0 0.0
        %852 = vmatprep.subr.mxu0 0.0
        %853 = vmatpush1.msra.mxu0 0.0
        %854 = vmatprep.subr.mxu0 0.0
        %855 = vmatpush1.msra.mxu0 0.0
        %856 = vmatprep.subr.mxu0 0.0
        %857 = vmatpush1.msra.mxu0 0.0
        %858 = vmatprep.subr.mxu0 0.0
        %859 = vmatpush1.msra.mxu0 0.0
        %860 = vmatprep.subr.mxu0 0.0
        %861 = vmatpush1.msra.mxu0 0.0
        %862 = vmatprep.subr.mxu0 0.0
        %863 = vmatpush1.msra.mxu0 0.0
        %864 = vmatprep.subr.mxu0 0.0
        %865 = vmatpush1.msra.mxu0 0.0
        %866 = vmatprep.subr.mxu0 0.0
        %867 = vmatpush1.msra.mxu0 0.0
        %868 = vmatprep.subr.mxu0 0.0
        %869 = vmatpush1.msra.mxu0 0.0
        %870 = vmatprep.subr.mxu0 0.0
        %871 = vmatpush1.msra.mxu0 0.0
        %872 = vmatprep.subr.mxu0 0.0
        %873 = vmatpush1.msra.mxu0 0.0
        %874 = vmatprep.subr.mxu0 0.0
        %875 = vmatpush1.msra.mxu0 %v842
        %876 = vmatprep.subr.mxu0 0.0
        %877 = vmatpush2.msra.mxu0 0.0
        %878 = vmatprep.subr.mxu0 0.0
        %879 = vmatpush2.msra.mxu0 0.0
        %880 = vmatprep.subr.mxu0 0.0
        %881 = vmatpush2.msra.mxu0 0.0
        %882 = vmatprep.subr.mxu0 0.0
        %883 = vmatpush2.msra.mxu0 0.0
        %884 = vmatprep.subr.mxu0 0.0
        %885 = vmatpush2.msra.mxu0 0.0
        %886 = vmatprep.subr.mxu0 0.0
        %887 = vmatpush2.msra.mxu0 0.0
        %888 = vmatprep.subr.mxu0 0.0
        %889 = vmatpush2.msra.mxu0 0.0
        %890 = vmatprep.subr.mxu0 0.0
        %891 = vmatpush2.msra.mxu0 0.0
        %892 = vmatprep.subr.mxu0 0.0
        %893 = vmatpush2.msra.mxu0 0.0
        %894 = vmatprep.subr.mxu0 0.0
        %895 = vmatpush2.msra.mxu0 0.0
        %896 = vmatprep.subr.mxu0 0.0
        %897 = vmatpush2.msra.mxu0 0.0
        %898 = vmatprep.subr.mxu0 0.0
        %899 = vmatpush2.msra.mxu0 0.0
        %900 = vmatprep.subr.mxu0 0.0
        %901 = vmatpush2.msra.mxu0 0.0
        %902 = vmatprep.subr.mxu0 0.0
        %903 = vmatpush2.msra.mxu0 0.0
        %904 = vmatprep.subr.mxu0 0.0
        %905 = vmatpush2.msra.mxu0 0.0
        %906 = vmatprep.subr.mxu0 0.0
        %907 = vmatpush2.msra.mxu0 0.0
        %908 = vmatprep.mubr.f32.mxu0 0.0
        %909 = vmatmul.mubr.f32.gmra.mxu0 %v264
        %v910 = vpop.f32.mrf.mxu0
        %v911 = vadd.f32 %v247, %v910
        %v912 = vpop.f32.mrf.mxu0
        %913 = vdwg.mxu0
        %vm914 = vcmp.gt.f32.partialorder %v911, 0.0
        %v915 = vmul.f32 %v911, 0.1
        %v916 = vsel %vm914, %v911, %v915
        %v918 = vsel %vm342, %v916, 0
        %920 = vmatprep.subr.mxu0 0.0
        %921 = vmatpush1.msra.mxu0 0.0
        %922 = vmatprep.subr.mxu0 0.0
        %923 = vmatpush1.msra.mxu0 0.0
        %924 = vmatprep.subr.mxu0 0.0
        %925 = vmatpush1.msra.mxu0 0.0
        %926 = vmatprep.subr.mxu0 0.0
        %927 = vmatpush1.msra.mxu0 0.0
        %928 = vmatprep.subr.mxu0 0.0
        %929 = vmatpush1.msra.mxu0 0.0
        %930 = vmatprep.subr.mxu0 0.0
        %931 = vmatpush1.msra.mxu0 0.0
        %932 = vmatprep.subr.mxu0 0.0
        %933 = vmatpush1.msra.mxu0 0.0
        %934 = vmatprep.subr.mxu0 0.0
        %935 = vmatpush1.msra.mxu0 0.0
        %936 = vmatprep.subr.mxu0 0.0
        %937 = vmatpush1.msra.mxu0 0.0
        %938 = vmatprep.subr.mxu0 0.0
        %939 = vmatpush1.msra.mxu0 0.0
        %940 = vmatprep.subr.mxu0 0.0
        %941 = vmatpush1.msra.mxu0 0.0
        %942 = vmatprep.subr.mxu0 0.0
        %943 = vmatpush1.msra.mxu0 0.0
        %944 = vmatprep.subr.mxu0 0.0
        %945 = vmatpush1.msra.mxu0 0.0
        %946 = vmatprep.subr.mxu0 0.0
        %947 = vmatpush1.msra.mxu0 0.0
        %948 = vmatprep.subr.mxu0 0.0
        %949 = vmatpush1.msra.mxu0 %v238
        %950 = vmatprep.subr.mxu0 0.0
        %951 = vmatpush1.msra.mxu0 %v237
        %952 = vmatprep.subr.mxu0 0.0
        %953 = vmatpush2.msra.mxu0 0.0
        %954 = vmatprep.subr.mxu0 0.0
        %955 = vmatpush2.msra.mxu0 0.0
        %956 = vmatprep.subr.mxu0 0.0
        %957 = vmatpush2.msra.mxu0 0.0
        %958 = vmatprep.subr.mxu0 0.0
        %959 = vmatpush2.msra.mxu0 0.0
        %960 = vmatprep.subr.mxu0 0.0
        %961 = vmatpush2.msra.mxu0 0.0
        %962 = vmatprep.subr.mxu0 0.0
        %963 = vmatpush2.msra.mxu0 0.0
        %964 = vmatprep.subr.mxu0 0.0
        %965 = vmatpush2.msra.mxu0 0.0
        %966 = vmatprep.subr.mxu0 0.0
        %967 = vmatpush2.msra.mxu0 0.0
        %968 = vmatprep.subr.mxu0 0.0
        %969 = vmatpush2.msra.mxu0 0.0
        %970 = vmatprep.subr.mxu0 0.0
        %971 = vmatpush2.msra.mxu0 0.0
        %972 = vmatprep.subr.mxu0 0.0
        %973 = vmatpush2.msra.mxu0 0.0
        %974 = vmatprep.subr.mxu0 0.0
        %975 = vmatpush2.msra.mxu0 0.0
        %976 = vmatprep.subr.mxu0 0.0
        %977 = vmatpush2.msra.mxu0 0.0
        %978 = vmatprep.subr.mxu0 0.0
        %979 = vmatpush2.msra.mxu0 0.0
        %980 = vmatprep.subr.mxu0 0.0
        %981 = vmatpush2.msra.mxu0 0.0
        %982 = vmatprep.subr.mxu0 0.0
        %983 = vmatpush2.msra.mxu0 0.0
        %984 = vmatprep.mubr.f32.mxu0 0.0
        %985 = vmatmul.mubr.f32.gmra.mxu0 %v918
        %v986 = vpop.f32.mrf.mxu0
        %v987 = vadd.f32 0.0, %v986
        %v988 = vpop.f32.mrf.mxu0
        %989 = vdwg.mxu0
        %v992 = vunpack.c.l.s4 1966171168
        %v993 = vunpack.c.0.s8 %v992
        %v994 = vlaneseq
        %v995 = vshrl.u32 %v994, 7
        %v996 = vsub.s32 %v993, %v995
        %v997 = vrot.slane %v987, %v996
        %v998 = vcombine.high %v997, %v997
        %v1000 = vunpack.c.l.s4 1966171168
        %v1001 = vunpack.c.0.s8 %v1000
        %v1002 = vlaneseq
        %v1003 = vshrl.u32 %v1002, 7
        %v1004 = vsub.s32 %v1001, %v1003
        %v1005 = vrot.slane %v997, %v1004
        %v1007 = vunpack.c.l.s4 1966171168
        %v1008 = vunpack.c.0.s8 %v1007
        %v1009 = vlaneseq
        %v1010 = vshrl.u32 %v1009, 7
        %v1011 = vsub.s32 %v1008, %v1010
        %v1012 = vrot.slane %v998, %v1011
        %1015 = vst.msk [vmem:[%s233 + $0x6] sm:$0x1] %vm441, %v1005
        %1016 = vst.msk [vmem:[%s233 + $0x26] sm:$0x1] %vm441, %v1012
        %1017 = vst.msk [vmem:[%s233 + $0x7] sm:$0x1] %vm441, %v1005
        %1018 = vst.msk [vmem:[%s233 + $0x27] sm:$0x1] %vm441, %v1012
        %v1019 = vld [vmem:[%s209 + $0x4] sm:$0x1]
        %v1020 = vld [vmem:[%s209 + $0x14] sm:$0x1]
        %v1021 = vld [vmem:[%s209 + $0x24] sm:$0x1]
        %v1022 = vld [vmem:[%s209 + $0x34] sm:$0x1]
        %v1027 = vrot.slane %v1020, 7
        %v1028 = vsel %vm254, %v1027, %v1019
        %v1029 = vrot.slane %v1021, 6
        %v1030 = vsel %vm257, %v1029, %v1028
        %v1031 = vrot.slane %v1022, 5
        %v1032 = vsel %vm260, %v1031, %v1030
        %v1033 = vsel %vm266, %v1032, 0
        %1035 = vmatprep.subr.mxu0 0.0
        %1036 = vmatpush1.msra.mxu0 0.0
        %1037 = vmatprep.subr.mxu0 0.0
        %1038 = vmatpush1.msra.mxu0 0.0
        %1039 = vmatprep.subr.mxu0 0.0
        %1040 = vmatpush1.msra.mxu0 0.0
        %1041 = vmatprep.subr.mxu0 0.0
        %1042 = vmatpush1.msra.mxu0 0.0
        %1043 = vmatprep.subr.mxu0 0.0
        %1044 = vmatpush1.msra.mxu0 0.0
        %1045 = vmatprep.subr.mxu0 0.0
        %1046 = vmatpush1.msra.mxu0 0.0
        %1047 = vmatprep.subr.mxu0 0.0
        %1048 = vmatpush1.msra.mxu0 0.0
        %1049 = vmatprep.subr.mxu0 0.0
        %1050 = vmatpush1.msra.mxu0 0.0
        %1051 = vmatprep.subr.mxu0 0.0
        %1052 = vmatpush1.msra.mxu0 0.0
        %1053 = vmatprep.subr.mxu0 0.0
        %1054 = vmatpush1.msra.mxu0 0.0
        %1055 = vmatprep.subr.mxu0 0.0
        %1056 = vmatpush1.msra.mxu0 0.0
        %1057 = vmatprep.subr.mxu0 0.0
        %1058 = vmatpush1.msra.mxu0 0.0
        %1059 = vmatprep.subr.mxu0 0.0
        %1060 = vmatpush1.msra.mxu0 0.0
        %1061 = vmatprep.subr.mxu0 0.0
        %1062 = vmatpush1.msra.mxu0 0.0
        %1063 = vmatprep.subr.mxu0 0.0
        %1064 = vmatpush1.msra.mxu0 0.0
        %1065 = vmatprep.subr.mxu0 0.0
        %1066 = vmatpush1.msra.mxu0 %v1033
        %1067 = vmatprep.subr.mxu0 0.0
        %1068 = vmatpush2.msra.mxu0 0.0
        %1069 = vmatprep.subr.mxu0 0.0
        %1070 = vmatpush2.msra.mxu0 0.0
        %1071 = vmatprep.subr.mxu0 0.0
        %1072 = vmatpush2.msra.mxu0 0.0
        %1073 = vmatprep.subr.mxu0 0.0
        %1074 = vmatpush2.msra.mxu0 0.0
        %1075 = vmatprep.subr.mxu0 0.0
        %1076 = vmatpush2.msra.mxu0 0.0
        %1077 = vmatprep.subr.mxu0 0.0
        %1078 = vmatpush2.msra.mxu0 0.0
        %1079 = vmatprep.subr.mxu0 0.0
        %1080 = vmatpush2.msra.mxu0 0.0
        %1081 = vmatprep.subr.mxu0 0.0
        %1082 = vmatpush2.msra.mxu0 0.0
        %1083 = vmatprep.subr.mxu0 0.0
        %1084 = vmatpush2.msra.mxu0 0.0
        %1085 = vmatprep.subr.mxu0 0.0
        %1086 = vmatpush2.msra.mxu0 0.0
        %1087 = vmatprep.subr.mxu0 0.0
        %1088 = vmatpush2.msra.mxu0 0.0
        %1089 = vmatprep.subr.mxu0 0.0
        %1090 = vmatpush2.msra.mxu0 0.0
        %1091 = vmatprep.subr.mxu0 0.0
        %1092 = vmatpush2.msra.mxu0 0.0
        %1093 = vmatprep.subr.mxu0 0.0
        %1094 = vmatpush2.msra.mxu0 0.0
        %1095 = vmatprep.subr.mxu0 0.0
        %1096 = vmatpush2.msra.mxu0 0.0
        %1097 = vmatprep.subr.mxu0 0.0
        %1098 = vmatpush2.msra.mxu0 0.0
        %1099 = vmatprep.mubr.f32.mxu0 0.0
        %1100 = vmatmul.mubr.f32.gmra.mxu0 %v264
        %v1101 = vpop.f32.mrf.mxu0
        %v1102 = vadd.f32 %v247, %v1101
        %v1103 = vpop.f32.mrf.mxu0
        %1104 = vdwg.mxu0
        %vm1105 = vcmp.gt.f32.partialorder %v1102, 0.0
        %v1106 = vmul.f32 %v1102, 0.1
        %v1107 = vsel %vm1105, %v1102, %v1106
        %v1109 = vsel %vm342, %v1107, 0
        %1111 = vmatprep.subr.mxu0 0.0
        %1112 = vmatpush1.msra.mxu0 0.0
        %1113 = vmatprep.subr.mxu0 0.0
        %1114 = vmatpush1.msra.mxu0 0.0
        %1115 = vmatprep.subr.mxu0 0.0
        %1116 = vmatpush1.msra.mxu0 0.0
        %1117 = vmatprep.subr.mxu0 0.0
        %1118 = vmatpush1.msra.mxu0 0.0
        %1119 = vmatprep.subr.mxu0 0.0
        %1120 = vmatpush1.msra.mxu0 0.0
        %1121 = vmatprep.subr.mxu0 0.0
        %1122 = vmatpush1.msra.mxu0 0.0
        %1123 = vmatprep.subr.mxu0 0.0
        %1124 = vmatpush1.msra.mxu0 0.0
        %1125 = vmatprep.subr.mxu0 0.0
        %1126 = vmatpush1.msra.mxu0 0.0
        %1127 = vmatprep.subr.mxu0 0.0
        %1128 = vmatpush1.msra.mxu0 0.0
        %1129 = vmatprep.subr.mxu0 0.0
        %1130 = vmatpush1.msra.mxu0 0.0
        %1131 = vmatprep.subr.mxu0 0.0
        %1132 = vmatpush1.msra.mxu0 0.0
        %1133 = vmatprep.subr.mxu0 0.0
        %1134 = vmatpush1.msra.mxu0 0.0
        %1135 = vmatprep.subr.mxu0 0.0
        %1136 = vmatpush1.msra.mxu0 0.0
        %1137 = vmatprep.subr.mxu0 0.0
        %1138 = vmatpush1.msra.mxu0 0.0
        %1139 = vmatprep.subr.mxu0 0.0
        %1140 = vmatpush1.msra.mxu0 %v238
        %1141 = vmatprep.subr.mxu0 0.0
        %1142 = vmatpush1.msra.mxu0 %v237
        %1143 = vmatprep.subr.mxu0 0.0
        %1144 = vmatpush2.msra.mxu0 0.0
        %1145 = vmatprep.subr.mxu0 0.0
        %1146 = vmatpush2.msra.mxu0 0.0
        %1147 = vmatprep.subr.mxu0 0.0
        %1148 = vmatpush2.msra.mxu0 0.0
        %1149 = vmatprep.subr.mxu0 0.0
        %1150 = vmatpush2.msra.mxu0 0.0
        %1151 = vmatprep.subr.mxu0 0.0
        %1152 = vmatpush2.msra.mxu0 0.0
        %1153 = vmatprep.subr.mxu0 0.0
        %1154 = vmatpush2.msra.mxu0 0.0
        %1155 = vmatprep.subr.mxu0 0.0
        %1156 = vmatpush2.msra.mxu0 0.0
        %1157 = vmatprep.subr.mxu0 0.0
        %1158 = vmatpush2.msra.mxu0 0.0
        %1159 = vmatprep.subr.mxu0 0.0
        %1160 = vmatpush2.msra.mxu0 0.0
        %1161 = vmatprep.subr.mxu0 0.0
        %1162 = vmatpush2.msra.mxu0 0.0
        %1163 = vmatprep.subr.mxu0 0.0
        %1164 = vmatpush2.msra.mxu0 0.0
        %1165 = vmatprep.subr.mxu0 0.0
        %1166 = vmatpush2.msra.mxu0 0.0
        %1167 = vmatprep.subr.mxu0 0.0
        %1168 = vmatpush2.msra.mxu0 0.0
        %1169 = vmatprep.subr.mxu0 0.0
        %1170 = vmatpush2.msra.mxu0 0.0
        %1171 = vmatprep.subr.mxu0 0.0
        %1172 = vmatpush2.msra.mxu0 0.0
        %1173 = vmatprep.subr.mxu0 0.0
        %1174 = vmatpush2.msra.mxu0 0.0
        %1175 = vmatprep.mubr.f32.mxu0 0.0
        %1176 = vmatmul.mubr.f32.gmra.mxu0 %v1109
        %v1177 = vpop.f32.mrf.mxu0
        %v1178 = vadd.f32 0.0, %v1177
        %v1179 = vpop.f32.mrf.mxu0
        %1180 = vdwg.mxu0
        %v1183 = vunpack.c.l.s4 1966171168
        %v1184 = vunpack.c.0.s8 %v1183
        %v1185 = vlaneseq
        %v1186 = vshrl.u32 %v1185, 7
        %v1187 = vsub.s32 %v1184, %v1186
        %v1188 = vrot.slane %v1178, %v1187
        %v1189 = vcombine.high %v1188, %v1188
        %v1191 = vunpack.c.l.s4 1966171168
        %v1192 = vunpack.c.0.s8 %v1191
        %v1193 = vlaneseq
        %v1194 = vshrl.u32 %v1193, 7
        %v1195 = vsub.s32 %v1192, %v1194
        %v1196 = vrot.slane %v1188, %v1195
        %v1198 = vunpack.c.l.s4 1966171168
        %v1199 = vunpack.c.0.s8 %v1198
        %v1200 = vlaneseq
        %v1201 = vshrl.u32 %v1200, 7
        %v1202 = vsub.s32 %v1199, %v1201
        %v1203 = vrot.slane %v1189, %v1202
        %1206 = vst.msk [vmem:[%s233 + $0x8] sm:$0x1] %vm441, %v1196
        %1207 = vst.msk [vmem:[%s233 + $0x28] sm:$0x1] %vm441, %v1203
        %1208 = vst.msk [vmem:[%s233 + $0x9] sm:$0x1] %vm441, %v1196
        %1209 = vst.msk [vmem:[%s233 + $0x29] sm:$0x1] %vm441, %v1203
        %v1210 = vld [vmem:[%s209 + $0x5] sm:$0x1]
        %v1211 = vld [vmem:[%s209 + $0x15] sm:$0x1]
        %v1212 = vld [vmem:[%s209 + $0x25] sm:$0x1]
        %v1213 = vld [vmem:[%s209 + $0x35] sm:$0x1]
        %v1218 = vrot.slane %v1211, 7
        %v1219 = vsel %vm254, %v1218, %v1210
        %v1220 = vrot.slane %v1212, 6
        %v1221 = vsel %vm257, %v1220, %v1219
        %v1222 = vrot.slane %v1213, 5
        %v1223 = vsel %vm260, %v1222, %v1221
        %v1224 = vsel %vm266, %v1223, 0
        %1226 = vmatprep.subr.mxu0 0.0
        %1227 = vmatpush1.msra.mxu0 0.0
        %1228 = vmatprep.subr.mxu0 0.0
        %1229 = vmatpush1.msra.mxu0 0.0
        %1230 = vmatprep.subr.mxu0 0.0
        %1231 = vmatpush1.msra.mxu0 0.0
        %1232 = vmatprep.subr.mxu0 0.0
        %1233 = vmatpush1.msra.mxu0 0.0
        %1234 = vmatprep.subr.mxu0 0.0
        %1235 = vmatpush1.msra.mxu0 0.0
        %1236 = vmatprep.subr.mxu0 0.0
        %1237 = vmatpush1.msra.mxu0 0.0
        %1238 = vmatprep.subr.mxu0 0.0
        %1239 = vmatpush1.msra.mxu0 0.0
        %1240 = vmatprep.subr.mxu0 0.0
        %1241 = vmatpush1.msra.mxu0 0.0
        %1242 = vmatprep.subr.mxu0 0.0
        %1243 = vmatpush1.msra.mxu0 0.0
        %1244 = vmatprep.subr.mxu0 0.0
        %1245 = vmatpush1.msra.mxu0 0.0
        %1246 = vmatprep.subr.mxu0 0.0
        %1247 = vmatpush1.msra.mxu0 0.0
        %1248 = vmatprep.subr.mxu0 0.0
        %1249 = vmatpush1.msra.mxu0 0.0
        %1250 = vmatprep.subr.mxu0 0.0
        %1251 = vmatpush1.msra.mxu0 0.0
        %1252 = vmatprep.subr.mxu0 0.0
        %1253 = vmatpush1.msra.mxu0 0.0
        %1254 = vmatprep.subr.mxu0 0.0
        %1255 = vmatpush1.msra.mxu0 0.0
        %1256 = vmatprep.subr.mxu0 0.0
        %1257 = vmatpush1.msra.mxu0 %v1224
        %1258 = vmatprep.subr.mxu0 0.0
        %1259 = vmatpush2.msra.mxu0 0.0
        %1260 = vmatprep.subr.mxu0 0.0
        %1261 = vmatpush2.msra.mxu0 0.0
        %1262 = vmatprep.subr.mxu0 0.0
        %1263 = vmatpush2.msra.mxu0 0.0
        %1264 = vmatprep.subr.mxu0 0.0
        %1265 = vmatpush2.msra.mxu0 0.0
        %1266 = vmatprep.subr.mxu0 0.0
        %1267 = vmatpush2.msra.mxu0 0.0
        %1268 = vmatprep.subr.mxu0 0.0
        %1269 = vmatpush2.msra.mxu0 0.0
        %1270 = vmatprep.subr.mxu0 0.0
        %1271 = vmatpush2.msra.mxu0 0.0
        %1272 = vmatprep.subr.mxu0 0.0
        %1273 = vmatpush2.msra.mxu0 0.0
        %1274 = vmatprep.subr.mxu0 0.0
        %1275 = vmatpush2.msra.mxu0 0.0
        %1276 = vmatprep.subr.mxu0 0.0
        %1277 = vmatpush2.msra.mxu0 0.0
        %1278 = vmatprep.subr.mxu0 0.0
        %1279 = vmatpush2.msra.mxu0 0.0
        %1280 = vmatprep.subr.mxu0 0.0
        %1281 = vmatpush2.msra.mxu0 0.0
        %1282 = vmatprep.subr.mxu0 0.0
        %1283 = vmatpush2.msra.mxu0 0.0
        %1284 = vmatprep.subr.mxu0 0.0
        %1285 = vmatpush2.msra.mxu0 0.0
        %1286 = vmatprep.subr.mxu0 0.0
        %1287 = vmatpush2.msra.mxu0 0.0
        %1288 = vmatprep.subr.mxu0 0.0
        %1289 = vmatpush2.msra.mxu0 0.0
        %1290 = vmatprep.mubr.f32.mxu0 0.0
        %1291 = vmatmul.mubr.f32.gmra.mxu0 %v264
        %v1292 = vpop.f32.mrf.mxu0
        %v1293 = vadd.f32 %v247, %v1292
        %v1294 = vpop.f32.mrf.mxu0
        %1295 = vdwg.mxu0
        %vm1296 = vcmp.gt.f32.partialorder %v1293, 0.0
        %v1297 = vmul.f32 %v1293, 0.1
        %v1298 = vsel %vm1296, %v1293, %v1297
        %v1300 = vsel %vm342, %v1298, 0
        %1302 = vmatprep.subr.mxu0 0.0
        %1303 = vmatpush1.msra.mxu0 0.0
        %1304 = vmatprep.subr.mxu0 0.0
        %1305 = vmatpush1.msra.mxu0 0.0
        %1306 = vmatprep.subr.mxu0 0.0
        %1307 = vmatpush1.msra.mxu0 0.0
        %1308 = vmatprep.subr.mxu0 0.0
        %1309 = vmatpush1.msra.mxu0 0.0
        %1310 = vmatprep.subr.mxu0 0.0
        %1311 = vmatpush1.msra.mxu0 0.0
        %1312 = vmatprep.subr.mxu0 0.0
        %1313 = vmatpush1.msra.mxu0 0.0
        %1314 = vmatprep.subr.mxu0 0.0
        %1315 = vmatpush1.msra.mxu0 0.0
        %1316 = vmatprep.subr.mxu0 0.0
        %1317 = vmatpush1.msra.mxu0 0.0
        %1318 = vmatprep.subr.mxu0 0.0
        %1319 = vmatpush1.msra.mxu0 0.0
        %1320 = vmatprep.subr.mxu0 0.0
        %1321 = vmatpush1.msra.mxu0 0.0
        %1322 = vmatprep.subr.mxu0 0.0
        %1323 = vmatpush1.msra.mxu0 0.0
        %1324 = vmatprep.subr.mxu0 0.0
        %1325 = vmatpush1.msra.mxu0 0.0
        %1326 = vmatprep.subr.mxu0 0.0
        %1327 = vmatpush1.msra.mxu0 0.0
        %1328 = vmatprep.subr.mxu0 0.0
        %1329 = vmatpush1.msra.mxu0 0.0
        %1330 = vmatprep.subr.mxu0 0.0
        %1331 = vmatpush1.msra.mxu0 %v238
        %1332 = vmatprep.subr.mxu0 0.0
        %1333 = vmatpush1.msra.mxu0 %v237
        %1334 = vmatprep.subr.mxu0 0.0
        %1335 = vmatpush2.msra.mxu0 0.0
        %1336 = vmatprep.subr.mxu0 0.0
        %1337 = vmatpush2.msra.mxu0 0.0
        %1338 = vmatprep.subr.mxu0 0.0
        %1339 = vmatpush2.msra.mxu0 0.0
        %1340 = vmatprep.subr.mxu0 0.0
        %1341 = vmatpush2.msra.mxu0 0.0
        %1342 = vmatprep.subr.mxu0 0.0
        %1343 = vmatpush2.msra.mxu0 0.0
        %1344 = vmatprep.subr.mxu0 0.0
        %1345 = vmatpush2.msra.mxu0 0.0
        %1346 = vmatprep.subr.mxu0 0.0
        %1347 = vmatpush2.msra.mxu0 0.0
        %1348 = vmatprep.subr.mxu0 0.0
        %1349 = vmatpush2.msra.mxu0 0.0
        %1350 = vmatprep.subr.mxu0 0.0
        %1351 = vmatpush2.msra.mxu0 0.0
        %1352 = vmatprep.subr.mxu0 0.0
        %1353 = vmatpush2.msra.mxu0 0.0
        %1354 = vmatprep.subr.mxu0 0.0
        %1355 = vmatpush2.msra.mxu0 0.0
        %1356 = vmatprep.subr.mxu0 0.0
        %1357 = vmatpush2.msra.mxu0 0.0
        %1358 = vmatprep.subr.mxu0 0.0
        %1359 = vmatpush2.msra.mxu0 0.0
        %1360 = vmatprep.subr.mxu0 0.0
        %1361 = vmatpush2.msra.mxu0 0.0
        %1362 = vmatprep.subr.mxu0 0.0
        %1363 = vmatpush2.msra.mxu0 0.0
        %1364 = vmatprep.subr.mxu0 0.0
        %1365 = vmatpush2.msra.mxu0 0.0
        %1366 = vmatprep.mubr.f32.mxu0 0.0
        %1367 = vmatmul.mubr.f32.gmra.mxu0 %v1300
        %v1368 = vpop.f32.mrf.mxu0
        %v1369 = vadd.f32 0.0, %v1368
        %v1370 = vpop.f32.mrf.mxu0
        %1371 = vdwg.mxu0
        %v1374 = vunpack.c.l.s4 1966171168
        %v1375 = vunpack.c.0.s8 %v1374
        %v1376 = vlaneseq
        %v1377 = vshrl.u32 %v1376, 7
        %v1378 = vsub.s32 %v1375, %v1377
        %v1379 = vrot.slane %v1369, %v1378
        %v1380 = vcombine.high %v1379, %v1379
        %v1382 = vunpack.c.l.s4 1966171168
        %v1383 = vunpack.c.0.s8 %v1382
        %v1384 = vlaneseq
        %v1385 = vshrl.u32 %v1384, 7
        %v1386 = vsub.s32 %v1383, %v1385
        %v1387 = vrot.slane %v1379, %v1386
        %v1389 = vunpack.c.l.s4 1966171168
        %v1390 = vunpack.c.0.s8 %v1389
        %v1391 = vlaneseq
        %v1392 = vshrl.u32 %v1391, 7
        %v1393 = vsub.s32 %v1390, %v1392
        %v1394 = vrot.slane %v1380, %v1393
        %1397 = vst.msk [vmem:[%s233 + $0xa] sm:$0x1] %vm441, %v1387
        %1398 = vst.msk [vmem:[%s233 + $0x2a] sm:$0x1] %vm441, %v1394
        %1399 = vst.msk [vmem:[%s233 + $0xb] sm:$0x1] %vm441, %v1387
        %1400 = vst.msk [vmem:[%s233 + $0x2b] sm:$0x1] %vm441, %v1394
        %v1401 = vld [vmem:[%s209 + $0x6] sm:$0x1]
        %v1402 = vld [vmem:[%s209 + $0x16] sm:$0x1]
        %v1403 = vld [vmem:[%s209 + $0x26] sm:$0x1]
        %v1404 = vld [vmem:[%s209 + $0x36] sm:$0x1]
        %v1409 = vrot.slane %v1402, 7
        %v1410 = vsel %vm254, %v1409, %v1401
        %v1411 = vrot.slane %v1403, 6
        %v1412 = vsel %vm257, %v1411, %v1410
        %v1413 = vrot.slane %v1404, 5
        %v1414 = vsel %vm260, %v1413, %v1412
        %v1415 = vsel %vm266, %v1414, 0
        %1417 = vmatprep.subr.mxu0 0.0
        %1418 = vmatpush1.msra.mxu0 0.0
        %1419 = vmatprep.subr.mxu0 0.0
        %1420 = vmatpush1.msra.mxu0 0.0
        %1421 = vmatprep.subr.mxu0 0.0
        %1422 = vmatpush1.msra.mxu0 0.0
        %1423 = vmatprep.subr.mxu0 0.0
        %1424 = vmatpush1.msra.mxu0 0.0
        %1425 = vmatprep.subr.mxu0 0.0
        %1426 = vmatpush1.msra.mxu0 0.0
        %1427 = vmatprep.subr.mxu0 0.0
        %1428 = vmatpush1.msra.mxu0 0.0
        %1429 = vmatprep.subr.mxu0 0.0
        %1430 = vmatpush1.msra.mxu0 0.0
        %1431 = vmatprep.subr.mxu0 0.0
        %1432 = vmatpush1.msra.mxu0 0.0
        %1433 = vmatprep.subr.mxu0 0.0
        %1434 = vmatpush1.msra.mxu0 0.0
        %1435 = vmatprep.subr.mxu0 0.0
        %1436 = vmatpush1.msra.mxu0 0.0
        %1437 = vmatprep.subr.mxu0 0.0
        %1438 = vmatpush1.msra.mxu0 0.0
        %1439 = vmatprep.subr.mxu0 0.0
        %1440 = vmatpush1.msra.mxu0 0.0
        %1441 = vmatprep.subr.mxu0 0.0
        %1442 = vmatpush1.msra.mxu0 0.0
        %1443 = vmatprep.subr.mxu0 0.0
        %1444 = vmatpush1.msra.mxu0 0.0
        %1445 = vmatprep.subr.mxu0 0.0
        %1446 = vmatpush1.msra.mxu0 0.0
        %1447 = vmatprep.subr.mxu0 0.0
        %1448 = vmatpush1.msra.mxu0 %v1415
        %1449 = vmatprep.subr.mxu0 0.0
        %1450 = vmatpush2.msra.mxu0 0.0
        %1451 = vmatprep.subr.mxu0 0.0
        %1452 = vmatpush2.msra.mxu0 0.0
        %1453 = vmatprep.subr.mxu0 0.0
        %1454 = vmatpush2.msra.mxu0 0.0
        %1455 = vmatprep.subr.mxu0 0.0
        %1456 = vmatpush2.msra.mxu0 0.0
        %1457 = vmatprep.subr.mxu0 0.0
        %1458 = vmatpush2.msra.mxu0 0.0
        %1459 = vmatprep.subr.mxu0 0.0
        %1460 = vmatpush2.msra.mxu0 0.0
        %1461 = vmatprep.subr.mxu0 0.0
        %1462 = vmatpush2.msra.mxu0 0.0
        %1463 = vmatprep.subr.mxu0 0.0
        %1464 = vmatpush2.msra.mxu0 0.0
        %1465 = vmatprep.subr.mxu0 0.0
        %1466 = vmatpush2.msra.mxu0 0.0
        %1467 = vmatprep.subr.mxu0 0.0
        %1468 = vmatpush2.msra.mxu0 0.0
        %1469 = vmatprep.subr.mxu0 0.0
        %1470 = vmatpush2.msra.mxu0 0.0
        %1471 = vmatprep.subr.mxu0 0.0
        %1472 = vmatpush2.msra.mxu0 0.0
        %1473 = vmatprep.subr.mxu0 0.0
        %1474 = vmatpush2.msra.mxu0 0.0
        %1475 = vmatprep.subr.mxu0 0.0
        %1476 = vmatpush2.msra.mxu0 0.0
        %1477 = vmatprep.subr.mxu0 0.0
        %1478 = vmatpush2.msra.mxu0 0.0
        %1479 = vmatprep.subr.mxu0 0.0
        %1480 = vmatpush2.msra.mxu0 0.0
        %1481 = vmatprep.mubr.f32.mxu0 0.0
        %1482 = vmatmul.mubr.f32.gmra.mxu0 %v264
        %v1483 = vpop.f32.mrf.mxu0
        %v1484 = vadd.f32 %v247, %v1483
        %v1485 = vpop.f32.mrf.mxu0
        %1486 = vdwg.mxu0
        %vm1487 = vcmp.gt.f32.partialorder %v1484, 0.0
        %v1488 = vmul.f32 %v1484, 0.1
        %v1489 = vsel %vm1487, %v1484, %v1488
        %v1491 = vsel %vm342, %v1489, 0
        %1493 = vmatprep.subr.mxu0 0.0
        %1494 = vmatpush1.msra.mxu0 0.0
        %1495 = vmatprep.subr.mxu0 0.0
        %1496 = vmatpush1.msra.mxu0 0.0
        %1497 = vmatprep.subr.mxu0 0.0
        %1498 = vmatpush1.msra.mxu0 0.0
        %1499 = vmatprep.subr.mxu0 0.0
        %1500 = vmatpush1.msra.mxu0 0.0
        %1501 = vmatprep.subr.mxu0 0.0
        %1502 = vmatpush1.msra.mxu0 0.0
        %1503 = vmatprep.subr.mxu0 0.0
        %1504 = vmatpush1.msra.mxu0 0.0
        %1505 = vmatprep.subr.mxu0 0.0
        %1506 = vmatpush1.msra.mxu0 0.0
        %1507 = vmatprep.subr.mxu0 0.0
        %1508 = vmatpush1.msra.mxu0 0.0
        %1509 = vmatprep.subr.mxu0 0.0
        %1510 = vmatpush1.msra.mxu0 0.0
        %1511 = vmatprep.subr.mxu0 0.0
        %1512 = vmatpush1.msra.mxu0 0.0
        %1513 = vmatprep.subr.mxu0 0.0
        %1514 = vmatpush1.msra.mxu0 0.0
        %1515 = vmatprep.subr.mxu0 0.0
        %1516 = vmatpush1.msra.mxu0 0.0
        %1517 = vmatprep.subr.mxu0 0.0
        %1518 = vmatpush1.msra.mxu0 0.0
        %1519 = vmatprep.subr.mxu0 0.0
        %1520 = vmatpush1.msra.mxu0 0.0
        %1521 = vmatprep.subr.mxu0 0.0
        %1522 = vmatpush1.msra.mxu0 %v238
        %1523 = vmatprep.subr.mxu0 0.0
        %1524 = vmatpush1.msra.mxu0 %v237
        %1525 = vmatprep.subr.mxu0 0.0
        %1526 = vmatpush2.msra.mxu0 0.0
        %1527 = vmatprep.subr.mxu0 0.0
        %1528 = vmatpush2.msra.mxu0 0.0
        %1529 = vmatprep.subr.mxu0 0.0
        %1530 = vmatpush2.msra.mxu0 0.0
        %1531 = vmatprep.subr.mxu0 0.0
        %1532 = vmatpush2.msra.mxu0 0.0
        %1533 = vmatprep.subr.mxu0 0.0
        %1534 = vmatpush2.msra.mxu0 0.0
        %1535 = vmatprep.subr.mxu0 0.0
        %1536 = vmatpush2.msra.mxu0 0.0
        %1537 = vmatprep.subr.mxu0 0.0
        %1538 = vmatpush2.msra.mxu0 0.0
        %1539 = vmatprep.subr.mxu0 0.0
        %1540 = vmatpush2.msra.mxu0 0.0
        %1541 = vmatprep.subr.mxu0 0.0
        %1542 = vmatpush2.msra.mxu0 0.0
        %1543 = vmatprep.subr.mxu0 0.0
        %1544 = vmatpush2.msra.mxu0 0.0
        %1545 = vmatprep.subr.mxu0 0.0
        %1546 = vmatpush2.msra.mxu0 0.0
        %1547 = vmatprep.subr.mxu0 0.0
        %1548 = vmatpush2.msra.mxu0 0.0
        %1549 = vmatprep.subr.mxu0 0.0
        %1550 = vmatpush2.msra.mxu0 0.0
        %1551 = vmatprep.subr.mxu0 0.0
        %1552 = vmatpush2.msra.mxu0 0.0
        %1553 = vmatprep.subr.mxu0 0.0
        %1554 = vmatpush2.msra.mxu0 0.0
        %1555 = vmatprep.subr.mxu0 0.0
        %1556 = vmatpush2.msra.mxu0 0.0
        %1557 = vmatprep.mubr.f32.mxu0 0.0
        %1558 = vmatmul.mubr.f32.gmra.mxu0 %v1491
        %v1559 = vpop.f32.mrf.mxu0
        %v1560 = vadd.f32 0.0, %v1559
        %v1561 = vpop.f32.mrf.mxu0
        %1562 = vdwg.mxu0
        %v1565 = vunpack.c.l.s4 1966171168
        %v1566 = vunpack.c.0.s8 %v1565
        %v1567 = vlaneseq
        %v1568 = vshrl.u32 %v1567, 7
        %v1569 = vsub.s32 %v1566, %v1568
        %v1570 = vrot.slane %v1560, %v1569
        %v1571 = vcombine.high %v1570, %v1570
        %v1573 = vunpack.c.l.s4 1966171168
        %v1574 = vunpack.c.0.s8 %v1573
        %v1575 = vlaneseq
        %v1576 = vshrl.u32 %v1575, 7
        %v1577 = vsub.s32 %v1574, %v1576
        %v1578 = vrot.slane %v1570, %v1577
        %v1580 = vunpack.c.l.s4 1966171168
        %v1581 = vunpack.c.0.s8 %v1580
        %v1582 = vlaneseq
        %v1583 = vshrl.u32 %v1582, 7
        %v1584 = vsub.s32 %v1581, %v1583
        %v1585 = vrot.slane %v1571, %v1584
        %1588 = vst.msk [vmem:[%s233 + $0xc] sm:$0x1] %vm441, %v1578
        %1589 = vst.msk [vmem:[%s233 + $0x2c] sm:$0x1] %vm441, %v1585
        %1590 = vst.msk [vmem:[%s233 + $0xd] sm:$0x1] %vm441, %v1578
        %1591 = vst.msk [vmem:[%s233 + $0x2d] sm:$0x1] %vm441, %v1585
        %v1592 = vld [vmem:[%s209 + $0x7] sm:$0x1]
        %v1593 = vld [vmem:[%s209 + $0x17] sm:$0x1]
        %v1594 = vld [vmem:[%s209 + $0x27] sm:$0x1]
        %v1595 = vld [vmem:[%s209 + $0x37] sm:$0x1]
        %v1600 = vrot.slane %v1593, 7
        %v1601 = vsel %vm254, %v1600, %v1592
        %v1602 = vrot.slane %v1594, 6
        %v1603 = vsel %vm257, %v1602, %v1601
        %v1604 = vrot.slane %v1595, 5
        %v1605 = vsel %vm260, %v1604, %v1603
        %v1606 = vsel %vm266, %v1605, 0
        %1608 = vmatprep.subr.mxu0 0.0
        %1609 = vmatpush1.msra.mxu0 0.0
        %1610 = vmatprep.subr.mxu0 0.0
        %1611 = vmatpush1.msra.mxu0 0.0
        %1612 = vmatprep.subr.mxu0 0.0
        %1613 = vmatpush1.msra.mxu0 0.0
        %1614 = vmatprep.subr.mxu0 0.0
        %1615 = vmatpush1.msra.mxu0 0.0
        %1616 = vmatprep.subr.mxu0 0.0
        %1617 = vmatpush1.msra.mxu0 0.0
        %1618 = vmatprep.subr.mxu0 0.0
        %1619 = vmatpush1.msra.mxu0 0.0
        %1620 = vmatprep.subr.mxu0 0.0
        %1621 = vmatpush1.msra.mxu0 0.0
        %1622 = vmatprep.subr.mxu0 0.0
        %1623 = vmatpush1.msra.mxu0 0.0
        %1624 = vmatprep.subr.mxu0 0.0
        %1625 = vmatpush1.msra.mxu0 0.0
        %1626 = vmatprep.subr.mxu0 0.0
        %1627 = vmatpush1.msra.mxu0 0.0
        %1628 = vmatprep.subr.mxu0 0.0
        %1629 = vmatpush1.msra.mxu0 0.0
        %1630 = vmatprep.subr.mxu0 0.0
        %1631 = vmatpush1.msra.mxu0 0.0
        %1632 = vmatprep.subr.mxu0 0.0
        %1633 = vmatpush1.msra.mxu0 0.0
        %1634 = vmatprep.subr.mxu0 0.0
        %1635 = vmatpush1.msra.mxu0 0.0
        %1636 = vmatprep.subr.mxu0 0.0
        %1637 = vmatpush1.msra.mxu0 0.0
        %1638 = vmatprep.subr.mxu0 0.0
        %1639 = vmatpush1.msra.mxu0 %v1606
        %1640 = vmatprep.subr.mxu0 0.0
        %1641 = vmatpush2.msra.mxu0 0.0
        %1642 = vmatprep.subr.mxu0 0.0
        %1643 = vmatpush2.msra.mxu0 0.0
        %1644 = vmatprep.subr.mxu0 0.0
        %1645 = vmatpush2.msra.mxu0 0.0
        %1646 = vmatprep.subr.mxu0 0.0
        %1647 = vmatpush2.msra.mxu0 0.0
        %1648 = vmatprep.subr.mxu0 0.0
        %1649 = vmatpush2.msra.mxu0 0.0
        %1650 = vmatprep.subr.mxu0 0.0
        %1651 = vmatpush2.msra.mxu0 0.0
        %1652 = vmatprep.subr.mxu0 0.0
        %1653 = vmatpush2.msra.mxu0 0.0
        %1654 = vmatprep.subr.mxu0 0.0
        %1655 = vmatpush2.msra.mxu0 0.0
        %1656 = vmatprep.subr.mxu0 0.0
        %1657 = vmatpush2.msra.mxu0 0.0
        %1658 = vmatprep.subr.mxu0 0.0
        %1659 = vmatpush2.msra.mxu0 0.0
        %1660 = vmatprep.subr.mxu0 0.0
        %1661 = vmatpush2.msra.mxu0 0.0
        %1662 = vmatprep.subr.mxu0 0.0
        %1663 = vmatpush2.msra.mxu0 0.0
        %1664 = vmatprep.subr.mxu0 0.0
        %1665 = vmatpush2.msra.mxu0 0.0
        %1666 = vmatprep.subr.mxu0 0.0
        %1667 = vmatpush2.msra.mxu0 0.0
        %1668 = vmatprep.subr.mxu0 0.0
        %1669 = vmatpush2.msra.mxu0 0.0
        %1670 = vmatprep.subr.mxu0 0.0
        %1671 = vmatpush2.msra.mxu0 0.0
        %1672 = vmatprep.mubr.f32.mxu0 0.0
        %1673 = vmatmul.mubr.f32.gmra.mxu0 %v264
        %v1674 = vpop.f32.mrf.mxu0
        %v1675 = vadd.f32 %v247, %v1674
        %v1676 = vpop.f32.mrf.mxu0
        %1677 = vdwg.mxu0
        %vm1678 = vcmp.gt.f32.partialorder %v1675, 0.0
        %v1679 = vmul.f32 %v1675, 0.1
        %v1680 = vsel %vm1678, %v1675, %v1679
        %v1682 = vsel %vm342, %v1680, 0
        %1684 = vmatprep.subr.mxu0 0.0
        %1685 = vmatpush1.msra.mxu0 0.0
        %1686 = vmatprep.subr.mxu0 0.0
        %1687 = vmatpush1.msra.mxu0 0.0
        %1688 = vmatprep.subr.mxu0 0.0
        %1689 = vmatpush1.msra.mxu0 0.0
        %1690 = vmatprep.subr.mxu0 0.0
        %1691 = vmatpush1.msra.mxu0 0.0
        %1692 = vmatprep.subr.mxu0 0.0
        %1693 = vmatpush1.msra.mxu0 0.0
        %1694 = vmatprep.subr.mxu0 0.0
        %1695 = vmatpush1.msra.mxu0 0.0
        %1696 = vmatprep.subr.mxu0 0.0
        %1697 = vmatpush1.msra.mxu0 0.0
        %1698 = vmatprep.subr.mxu0 0.0
        %1699 = vmatpush1.msra.mxu0 0.0
        %1700 = vmatprep.subr.mxu0 0.0
        %1701 = vmatpush1.msra.mxu0 0.0
        %1702 = vmatprep.subr.mxu0 0.0
        %1703 = vmatpush1.msra.mxu0 0.0
        %1704 = vmatprep.subr.mxu0 0.0
        %1705 = vmatpush1.msra.mxu0 0.0
        %1706 = vmatprep.subr.mxu0 0.0
        %1707 = vmatpush1.msra.mxu0 0.0
        %1708 = vmatprep.subr.mxu0 0.0
        %1709 = vmatpush1.msra.mxu0 0.0
        %1710 = vmatprep.subr.mxu0 0.0
        %1711 = vmatpush1.msra.mxu0 0.0
        %1712 = vmatprep.subr.mxu0 0.0
        %1713 = vmatpush1.msra.mxu0 %v238
        %1714 = vmatprep.subr.mxu0 0.0
        %1715 = vmatpush1.msra.mxu0 %v237
        %1716 = vmatprep.subr.mxu0 0.0
        %1717 = vmatpush2.msra.mxu0 0.0
        %1718 = vmatprep.subr.mxu0 0.0
        %1719 = vmatpush2.msra.mxu0 0.0
        %1720 = vmatprep.subr.mxu0 0.0
        %1721 = vmatpush2.msra.mxu0 0.0
        %1722 = vmatprep.subr.mxu0 0.0
        %1723 = vmatpush2.msra.mxu0 0.0
        %1724 = vmatprep.subr.mxu0 0.0
        %1725 = vmatpush2.msra.mxu0 0.0
        %1726 = vmatprep.subr.mxu0 0.0
        %1727 = vmatpush2.msra.mxu0 0.0
        %1728 = vmatprep.subr.mxu0 0.0
        %1729 = vmatpush2.msra.mxu0 0.0
        %1730 = vmatprep.subr.mxu0 0.0
        %1731 = vmatpush2.msra.mxu0 0.0
        %1732 = vmatprep.subr.mxu0 0.0
        %1733 = vmatpush2.msra.mxu0 0.0
        %1734 = vmatprep.subr.mxu0 0.0
        %1735 = vmatpush2.msra.mxu0 0.0
        %1736 = vmatprep.subr.mxu0 0.0
        %1737 = vmatpush2.msra.mxu0 0.0
        %1738 = vmatprep.subr.mxu0 0.0
        %1739 = vmatpush2.msra.mxu0 0.0
        %1740 = vmatprep.subr.mxu0 0.0
        %1741 = vmatpush2.msra.mxu0 0.0
        %1742 = vmatprep.subr.mxu0 0.0
        %1743 = vmatpush2.msra.mxu0 0.0
        %1744 = vmatprep.subr.mxu0 0.0
        %1745 = vmatpush2.msra.mxu0 0.0
        %1746 = vmatprep.subr.mxu0 0.0
        %1747 = vmatpush2.msra.mxu0 0.0
        %1748 = vmatprep.mubr.f32.mxu0 0.0
        %1749 = vmatmul.mubr.f32.gmra.mxu0 %v1682
        %v1750 = vpop.f32.mrf.mxu0
        %v1751 = vadd.f32 0.0, %v1750
        %v1752 = vpop.f32.mrf.mxu0
        %1753 = vdwg.mxu0
        %v1756 = vunpack.c.l.s4 1966171168
        %v1757 = vunpack.c.0.s8 %v1756
        %v1758 = vlaneseq
        %v1759 = vshrl.u32 %v1758, 7
        %v1760 = vsub.s32 %v1757, %v1759
        %v1761 = vrot.slane %v1751, %v1760
        %v1762 = vcombine.high %v1761, %v1761
        %v1764 = vunpack.c.l.s4 1966171168
        %v1765 = vunpack.c.0.s8 %v1764
        %v1766 = vlaneseq
        %v1767 = vshrl.u32 %v1766, 7
        %v1768 = vsub.s32 %v1765, %v1767
        %v1769 = vrot.slane %v1761, %v1768
        %v1771 = vunpack.c.l.s4 1966171168
        %v1772 = vunpack.c.0.s8 %v1771
        %v1773 = vlaneseq
        %v1774 = vshrl.u32 %v1773, 7
        %v1775 = vsub.s32 %v1772, %v1774
        %v1776 = vrot.slane %v1762, %v1775
        %1779 = vst.msk [vmem:[%s233 + $0xe] sm:$0x1] %vm441, %v1769
        %1780 = vst.msk [vmem:[%s233 + $0x2e] sm:$0x1] %vm441, %v1776
        %1781 = vst.msk [vmem:[%s233 + $0xf] sm:$0x1] %vm441, %v1769
        %1782 = vst.msk [vmem:[%s233 + $0x2f] sm:$0x1] %vm441, %v1776
        %v1783 = vld [vmem:[%s209 + $0x8] sm:$0x1]
        %v1784 = vld [vmem:[%s209 + $0x18] sm:$0x1]
        %v1785 = vld [vmem:[%s209 + $0x28] sm:$0x1]
        %v1786 = vld [vmem:[%s209 + $0x38] sm:$0x1]
        %v1791 = vrot.slane %v1784, 7
        %v1792 = vsel %vm254, %v1791, %v1783
        %v1793 = vrot.slane %v1785, 6
        %v1794 = vsel %vm257, %v1793, %v1792
        %v1795 = vrot.slane %v1786, 5
        %v1796 = vsel %vm260, %v1795, %v1794
        %v1797 = vsel %vm266, %v1796, 0
        %1799 = vmatprep.subr.mxu0 0.0
        %1800 = vmatpush1.msra.mxu0 0.0
        %1801 = vmatprep.subr.mxu0 0.0
        %1802 = vmatpush1.msra.mxu0 0.0
        %1803 = vmatprep.subr.mxu0 0.0
        %1804 = vmatpush1.msra.mxu0 0.0
        %1805 = vmatprep.subr.mxu0 0.0
        %1806 = vmatpush1.msra.mxu0 0.0
        %1807 = vmatprep.subr.mxu0 0.0
        %1808 = vmatpush1.msra.mxu0 0.0
        %1809 = vmatprep.subr.mxu0 0.0
        %1810 = vmatpush1.msra.mxu0 0.0
        %1811 = vmatprep.subr.mxu0 0.0
        %1812 = vmatpush1.msra.mxu0 0.0
        %1813 = vmatprep.subr.mxu0 0.0
        %1814 = vmatpush1.msra.mxu0 0.0
        %1815 = vmatprep.subr.mxu0 0.0
        %1816 = vmatpush1.msra.mxu0 0.0
        %1817 = vmatprep.subr.mxu0 0.0
        %1818 = vmatpush1.msra.mxu0 0.0
        %1819 = vmatprep.subr.mxu0 0.0
        %1820 = vmatpush1.msra.mxu0 0.0
        %1821 = vmatprep.subr.mxu0 0.0
        %1822 = vmatpush1.msra.mxu0 0.0
        %1823 = vmatprep.subr.mxu0 0.0
        %1824 = vmatpush1.msra.mxu0 0.0
        %1825 = vmatprep.subr.mxu0 0.0
        %1826 = vmatpush1.msra.mxu0 0.0
        %1827 = vmatprep.subr.mxu0 0.0
        %1828 = vmatpush1.msra.mxu0 0.0
        %1829 = vmatprep.subr.mxu0 0.0
        %1830 = vmatpush1.msra.mxu0 %v1797
        %1831 = vmatprep.subr.mxu0 0.0
        %1832 = vmatpush2.msra.mxu0 0.0
        %1833 = vmatprep.subr.mxu0 0.0
        %1834 = vmatpush2.msra.mxu0 0.0
        %1835 = vmatprep.subr.mxu0 0.0
        %1836 = vmatpush2.msra.mxu0 0.0
        %1837 = vmatprep.subr.mxu0 0.0
        %1838 = vmatpush2.msra.mxu0 0.0
        %1839 = vmatprep.subr.mxu0 0.0
        %1840 = vmatpush2.msra.mxu0 0.0
        %1841 = vmatprep.subr.mxu0 0.0
        %1842 = vmatpush2.msra.mxu0 0.0
        %1843 = vmatprep.subr.mxu0 0.0
        %1844 = vmatpush2.msra.mxu0 0.0
        %1845 = vmatprep.subr.mxu0 0.0
        %1846 = vmatpush2.msra.mxu0 0.0
        %1847 = vmatprep.subr.mxu0 0.0
        %1848 = vmatpush2.msra.mxu0 0.0
        %1849 = vmatprep.subr.mxu0 0.0
        %1850 = vmatpush2.msra.mxu0 0.0
        %1851 = vmatprep.subr.mxu0 0.0
        %1852 = vmatpush2.msra.mxu0 0.0
        %1853 = vmatprep.subr.mxu0 0.0
        %1854 = vmatpush2.msra.mxu0 0.0
        %1855 = vmatprep.subr.mxu0 0.0
        %1856 = vmatpush2.msra.mxu0 0.0
        %1857 = vmatprep.subr.mxu0 0.0
        %1858 = vmatpush2.msra.mxu0 0.0
        %1859 = vmatprep.subr.mxu0 0.0
        %1860 = vmatpush2.msra.mxu0 0.0
        %1861 = vmatprep.subr.mxu0 0.0
        %1862 = vmatpush2.msra.mxu0 0.0
        %1863 = vmatprep.mubr.f32.mxu0 0.0
        %1864 = vmatmul.mubr.f32.gmra.mxu0 %v264
        %v1865 = vpop.f32.mrf.mxu0
        %v1866 = vadd.f32 %v247, %v1865
        %v1867 = vpop.f32.mrf.mxu0
        %1868 = vdwg.mxu0
        %vm1869 = vcmp.gt.f32.partialorder %v1866, 0.0
        %v1870 = vmul.f32 %v1866, 0.1
        %v1871 = vsel %vm1869, %v1866, %v1870
        %v1873 = vsel %vm342, %v1871, 0
        %1875 = vmatprep.subr.mxu0 0.0
        %1876 = vmatpush1.msra.mxu0 0.0
        %1877 = vmatprep.subr.mxu0 0.0
        %1878 = vmatpush1.msra.mxu0 0.0
        %1879 = vmatprep.subr.mxu0 0.0
        %1880 = vmatpush1.msra.mxu0 0.0
        %1881 = vmatprep.subr.mxu0 0.0
        %1882 = vmatpush1.msra.mxu0 0.0
        %1883 = vmatprep.subr.mxu0 0.0
        %1884 = vmatpush1.msra.mxu0 0.0
        %1885 = vmatprep.subr.mxu0 0.0
        %1886 = vmatpush1.msra.mxu0 0.0
        %1887 = vmatprep.subr.mxu0 0.0
        %1888 = vmatpush1.msra.mxu0 0.0
        %1889 = vmatprep.subr.mxu0 0.0
        %1890 = vmatpush1.msra.mxu0 0.0
        %1891 = vmatprep.subr.mxu0 0.0
        %1892 = vmatpush1.msra.mxu0 0.0
        %1893 = vmatprep.subr.mxu0 0.0
        %1894 = vmatpush1.msra.mxu0 0.0
        %1895 = vmatprep.subr.mxu0 0.0
        %1896 = vmatpush1.msra.mxu0 0.0
        %1897 = vmatprep.subr.mxu0 0.0
        %1898 = vmatpush1.msra.mxu0 0.0
        %1899 = vmatprep.subr.mxu0 0.0
        %1900 = vmatpush1.msra.mxu0 0.0
        %1901 = vmatprep.subr.mxu0 0.0
        %1902 = vmatpush1.msra.mxu0 0.0
        %1903 = vmatprep.subr.mxu0 0.0
        %1904 = vmatpush1.msra.mxu0 %v238
        %1905 = vmatprep.subr.mxu0 0.0
        %1906 = vmatpush1.msra.mxu0 %v237
        %1907 = vmatprep.subr.mxu0 0.0
        %1908 = vmatpush2.msra.mxu0 0.0
        %1909 = vmatprep.subr.mxu0 0.0
        %1910 = vmatpush2.msra.mxu0 0.0
        %1911 = vmatprep.subr.mxu0 0.0
        %1912 = vmatpush2.msra.mxu0 0.0
        %1913 = vmatprep.subr.mxu0 0.0
        %1914 = vmatpush2.msra.mxu0 0.0
        %1915 = vmatprep.subr.mxu0 0.0
        %1916 = vmatpush2.msra.mxu0 0.0
        %1917 = vmatprep.subr.mxu0 0.0
        %1918 = vmatpush2.msra.mxu0 0.0
        %1919 = vmatprep.subr.mxu0 0.0
        %1920 = vmatpush2.msra.mxu0 0.0
        %1921 = vmatprep.subr.mxu0 0.0
        %1922 = vmatpush2.msra.mxu0 0.0
        %1923 = vmatprep.subr.mxu0 0.0
        %1924 = vmatpush2.msra.mxu0 0.0
        %1925 = vmatprep.subr.mxu0 0.0
        %1926 = vmatpush2.msra.mxu0 0.0
        %1927 = vmatprep.subr.mxu0 0.0
        %1928 = vmatpush2.msra.mxu0 0.0
        %1929 = vmatprep.subr.mxu0 0.0
        %1930 = vmatpush2.msra.mxu0 0.0
        %1931 = vmatprep.subr.mxu0 0.0
        %1932 = vmatpush2.msra.mxu0 0.0
        %1933 = vmatprep.subr.mxu0 0.0
        %1934 = vmatpush2.msra.mxu0 0.0
        %1935 = vmatprep.subr.mxu0 0.0
        %1936 = vmatpush2.msra.mxu0 0.0
        %1937 = vmatprep.subr.mxu0 0.0
        %1938 = vmatpush2.msra.mxu0 0.0
        %1939 = vmatprep.mubr.f32.mxu0 0.0
        %1940 = vmatmul.mubr.f32.gmra.mxu0 %v1873
        %v1941 = vpop.f32.mrf.mxu0
        %v1942 = vadd.f32 0.0, %v1941
        %v1943 = vpop.f32.mrf.mxu0
        %1944 = vdwg.mxu0
        %v1947 = vunpack.c.l.s4 1966171168
        %v1948 = vunpack.c.0.s8 %v1947
        %v1949 = vlaneseq
        %v1950 = vshrl.u32 %v1949, 7
        %v1951 = vsub.s32 %v1948, %v1950
        %v1952 = vrot.slane %v1942, %v1951
        %v1953 = vcombine.high %v1952, %v1952
        %v1955 = vunpack.c.l.s4 1966171168
        %v1956 = vunpack.c.0.s8 %v1955
        %v1957 = vlaneseq
        %v1958 = vshrl.u32 %v1957, 7
        %v1959 = vsub.s32 %v1956, %v1958
        %v1960 = vrot.slane %v1952, %v1959
        %v1962 = vunpack.c.l.s4 1966171168
        %v1963 = vunpack.c.0.s8 %v1962
        %v1964 = vlaneseq
        %v1965 = vshrl.u32 %v1964, 7
        %v1966 = vsub.s32 %v1963, %v1965
        %v1967 = vrot.slane %v1953, %v1966
        %1970 = vst.msk [vmem:[%s233 + $0x10] sm:$0x1] %vm441, %v1960
        %1971 = vst.msk [vmem:[%s233 + $0x30] sm:$0x1] %vm441, %v1967
        %1972 = vst.msk [vmem:[%s233 + $0x11] sm:$0x1] %vm441, %v1960
        %1973 = vst.msk [vmem:[%s233 + $0x31] sm:$0x1] %vm441, %v1967
        %v1974 = vld [vmem:[%s209 + $0x9] sm:$0x1]
        %v1975 = vld [vmem:[%s209 + $0x19] sm:$0x1]
        %v1976 = vld [vmem:[%s209 + $0x29] sm:$0x1]
        %v1977 = vld [vmem:[%s209 + $0x39] sm:$0x1]
        %v1982 = vrot.slane %v1975, 7
        %v1983 = vsel %vm254, %v1982, %v1974
        %v1984 = vrot.slane %v1976, 6
        %v1985 = vsel %vm257, %v1984, %v1983
        %v1986 = vrot.slane %v1977, 5
        %v1987 = vsel %vm260, %v1986, %v1985
        %v1988 = vsel %vm266, %v1987, 0
        %1990 = vmatprep.subr.mxu0 0.0
        %1991 = vmatpush1.msra.mxu0 0.0
        %1992 = vmatprep.subr.mxu0 0.0
        %1993 = vmatpush1.msra.mxu0 0.0
        %1994 = vmatprep.subr.mxu0 0.0
        %1995 = vmatpush1.msra.mxu0 0.0
        %1996 = vmatprep.subr.mxu0 0.0
        %1997 = vmatpush1.msra.mxu0 0.0
        %1998 = vmatprep.subr.mxu0 0.0
        %1999 = vmatpush1.msra.mxu0 0.0
        %2000 = vmatprep.subr.mxu0 0.0
        %2001 = vmatpush1.msra.mxu0 0.0
        %2002 = vmatprep.subr.mxu0 0.0
        %2003 = vmatpush1.msra.mxu0 0.0
        %2004 = vmatprep.subr.mxu0 0.0
        %2005 = vmatpush1.msra.mxu0 0.0
        %2006 = vmatprep.subr.mxu0 0.0
        %2007 = vmatpush1.msra.mxu0 0.0
        %2008 = vmatprep.subr.mxu0 0.0
        %2009 = vmatpush1.msra.mxu0 0.0
        %2010 = vmatprep.subr.mxu0 0.0
        %2011 = vmatpush1.msra.mxu0 0.0
        %2012 = vmatprep.subr.mxu0 0.0
        %2013 = vmatpush1.msra.mxu0 0.0
        %2014 = vmatprep.subr.mxu0 0.0
        %2015 = vmatpush1.msra.mxu0 0.0
        %2016 = vmatprep.subr.mxu0 0.0
        %2017 = vmatpush1.msra.mxu0 0.0
        %2018 = vmatprep.subr.mxu0 0.0
        %2019 = vmatpush1.msra.mxu0 0.0
        %2020 = vmatprep.subr.mxu0 0.0
        %2021 = vmatpush1.msra.mxu0 %v1988
        %2022 = vmatprep.subr.mxu0 0.0
        %2023 = vmatpush2.msra.mxu0 0.0
        %2024 = vmatprep.subr.mxu0 0.0
        %2025 = vmatpush2.msra.mxu0 0.0
        %2026 = vmatprep.subr.mxu0 0.0
        %2027 = vmatpush2.msra.mxu0 0.0
        %2028 = vmatprep.subr.mxu0 0.0
        %2029 = vmatpush2.msra.mxu0 0.0
        %2030 = vmatprep.subr.mxu0 0.0
        %2031 = vmatpush2.msra.mxu0 0.0
        %2032 = vmatprep.subr.mxu0 0.0
        %2033 = vmatpush2.msra.mxu0 0.0
        %2034 = vmatprep.subr.mxu0 0.0
        %2035 = vmatpush2.msra.mxu0 0.0
        %2036 = vmatprep.subr.mxu0 0.0
        %2037 = vmatpush2.msra.mxu0 0.0
        %2038 = vmatprep.subr.mxu0 0.0
        %2039 = vmatpush2.msra.mxu0 0.0
        %2040 = vmatprep.subr.mxu0 0.0
        %2041 = vmatpush2.msra.mxu0 0.0
        %2042 = vmatprep.subr.mxu0 0.0
        %2043 = vmatpush2.msra.mxu0 0.0
        %2044 = vmatprep.subr.mxu0 0.0
        %2045 = vmatpush2.msra.mxu0 0.0
        %2046 = vmatprep.subr.mxu0 0.0
        %2047 = vmatpush2.msra.mxu0 0.0
        %2048 = vmatprep.subr.mxu0 0.0
        %2049 = vmatpush2.msra.mxu0 0.0
        %2050 = vmatprep.subr.mxu0 0.0
        %2051 = vmatpush2.msra.mxu0 0.0
        %2052 = vmatprep.subr.mxu0 0.0
        %2053 = vmatpush2.msra.mxu0 0.0
        %2054 = vmatprep.mubr.f32.mxu0 0.0
        %2055 = vmatmul.mubr.f32.gmra.mxu0 %v264
        %v2056 = vpop.f32.mrf.mxu0
        %v2057 = vadd.f32 %v247, %v2056
        %v2058 = vpop.f32.mrf.mxu0
        %2059 = vdwg.mxu0
        %vm2060 = vcmp.gt.f32.partialorder %v2057, 0.0
        %v2061 = vmul.f32 %v2057, 0.1
        %v2062 = vsel %vm2060, %v2057, %v2061
        %v2064 = vsel %vm342, %v2062, 0
        %2066 = vmatprep.subr.mxu0 0.0
        %2067 = vmatpush1.msra.mxu0 0.0
        %2068 = vmatprep.subr.mxu0 0.0
        %2069 = vmatpush1.msra.mxu0 0.0
        %2070 = vmatprep.subr.mxu0 0.0
        %2071 = vmatpush1.msra.mxu0 0.0
        %2072 = vmatprep.subr.mxu0 0.0
        %2073 = vmatpush1.msra.mxu0 0.0
        %2074 = vmatprep.subr.mxu0 0.0
        %2075 = vmatpush1.msra.mxu0 0.0
        %2076 = vmatprep.subr.mxu0 0.0
        %2077 = vmatpush1.msra.mxu0 0.0
        %2078 = vmatprep.subr.mxu0 0.0
        %2079 = vmatpush1.msra.mxu0 0.0
        %2080 = vmatprep.subr.mxu0 0.0
        %2081 = vmatpush1.msra.mxu0 0.0
        %2082 = vmatprep.subr.mxu0 0.0
        %2083 = vmatpush1.msra.mxu0 0.0
        %2084 = vmatprep.subr.mxu0 0.0
        %2085 = vmatpush1.msra.mxu0 0.0
        %2086 = vmatprep.subr.mxu0 0.0
        %2087 = vmatpush1.msra.mxu0 0.0
        %2088 = vmatprep.subr.mxu0 0.0
        %2089 = vmatpush1.msra.mxu0 0.0
        %2090 = vmatprep.subr.mxu0 0.0
        %2091 = vmatpush1.msra.mxu0 0.0
        %2092 = vmatprep.subr.mxu0 0.0
        %2093 = vmatpush1.msra.mxu0 0.0
        %2094 = vmatprep.subr.mxu0 0.0
        %2095 = vmatpush1.msra.mxu0 %v238
        %2096 = vmatprep.subr.mxu0 0.0
        %2097 = vmatpush1.msra.mxu0 %v237
        %2098 = vmatprep.subr.mxu0 0.0
        %2099 = vmatpush2.msra.mxu0 0.0
        %2100 = vmatprep.subr.mxu0 0.0
        %2101 = vmatpush2.msra.mxu0 0.0
        %2102 = vmatprep.subr.mxu0 0.0
        %2103 = vmatpush2.msra.mxu0 0.0
        %2104 = vmatprep.subr.mxu0 0.0
        %2105 = vmatpush2.msra.mxu0 0.0
        %2106 = vmatprep.subr.mxu0 0.0
        %2107 = vmatpush2.msra.mxu0 0.0
        %2108 = vmatprep.subr.mxu0 0.0
        %2109 = vmatpush2.msra.mxu0 0.0
        %2110 = vmatprep.subr.mxu0 0.0
        %2111 = vmatpush2.msra.mxu0 0.0
        %2112 = vmatprep.subr.mxu0 0.0
        %2113 = vmatpush2.msra.mxu0 0.0
        %2114 = vmatprep.subr.mxu0 0.0
        %2115 = vmatpush2.msra.mxu0 0.0
        %2116 = vmatprep.subr.mxu0 0.0
        %2117 = vmatpush2.msra.mxu0 0.0
        %2118 = vmatprep.subr.mxu0 0.0
        %2119 = vmatpush2.msra.mxu0 0.0
        %2120 = vmatprep.subr.mxu0 0.0
        %2121 = vmatpush2.msra.mxu0 0.0
        %2122 = vmatprep.subr.mxu0 0.0
        %2123 = vmatpush2.msra.mxu0 0.0
        %2124 = vmatprep.subr.mxu0 0.0
        %2125 = vmatpush2.msra.mxu0 0.0
        %2126 = vmatprep.subr.mxu0 0.0
        %2127 = vmatpush2.msra.mxu0 0.0
        %2128 = vmatprep.subr.mxu0 0.0
        %2129 = vmatpush2.msra.mxu0 0.0
        %2130 = vmatprep.mubr.f32.mxu0 0.0
        %2131 = vmatmul.mubr.f32.gmra.mxu0 %v2064
        %v2132 = vpop.f32.mrf.mxu0
        %v2133 = vadd.f32 0.0, %v2132
        %v2134 = vpop.f32.mrf.mxu0
        %2135 = vdwg.mxu0
        %v2138 = vunpack.c.l.s4 1966171168
        %v2139 = vunpack.c.0.s8 %v2138
        %v2140 = vlaneseq
        %v2141 = vshrl.u32 %v2140, 7
        %v2142 = vsub.s32 %v2139, %v2141
        %v2143 = vrot.slane %v2133, %v2142
        %v2144 = vcombine.high %v2143, %v2143
        %v2146 = vunpack.c.l.s4 1966171168
        %v2147 = vunpack.c.0.s8 %v2146
        %v2148 = vlaneseq
        %v2149 = vshrl.u32 %v2148, 7
        %v2150 = vsub.s32 %v2147, %v2149
        %v2151 = vrot.slane %v2143, %v2150
        %v2153 = vunpack.c.l.s4 1966171168
        %v2154 = vunpack.c.0.s8 %v2153
        %v2155 = vlaneseq
        %v2156 = vshrl.u32 %v2155, 7
        %v2157 = vsub.s32 %v2154, %v2156
        %v2158 = vrot.slane %v2144, %v2157
        %2161 = vst.msk [vmem:[%s233 + $0x12] sm:$0x1] %vm441, %v2151
        %2162 = vst.msk [vmem:[%s233 + $0x32] sm:$0x1] %vm441, %v2158
        %2163 = vst.msk [vmem:[%s233 + $0x13] sm:$0x1] %vm441, %v2151
        %2164 = vst.msk [vmem:[%s233 + $0x33] sm:$0x1] %vm441, %v2158
        %v2165 = vld [vmem:[%s209 + $0xa] sm:$0x1]
        %v2166 = vld [vmem:[%s209 + $0x1a] sm:$0x1]
        %v2167 = vld [vmem:[%s209 + $0x2a] sm:$0x1]
        %v2168 = vld [vmem:[%s209 + $0x3a] sm:$0x1]
        %v2173 = vrot.slane %v2166, 7
        %v2174 = vsel %vm254, %v2173, %v2165
        %v2175 = vrot.slane %v2167, 6
        %v2176 = vsel %vm257, %v2175, %v2174
        %v2177 = vrot.slane %v2168, 5
        %v2178 = vsel %vm260, %v2177, %v2176
        %v2179 = vsel %vm266, %v2178, 0
        %2181 = vmatprep.subr.mxu0 0.0
        %2182 = vmatpush1.msra.mxu0 0.0
        %2183 = vmatprep.subr.mxu0 0.0
        %2184 = vmatpush1.msra.mxu0 0.0
        %2185 = vmatprep.subr.mxu0 0.0
        %2186 = vmatpush1.msra.mxu0 0.0
        %2187 = vmatprep.subr.mxu0 0.0
        %2188 = vmatpush1.msra.mxu0 0.0
        %2189 = vmatprep.subr.mxu0 0.0
        %2190 = vmatpush1.msra.mxu0 0.0
        %2191 = vmatprep.subr.mxu0 0.0
        %2192 = vmatpush1.msra.mxu0 0.0
        %2193 = vmatprep.subr.mxu0 0.0
        %2194 = vmatpush1.msra.mxu0 0.0
        %2195 = vmatprep.subr.mxu0 0.0
        %2196 = vmatpush1.msra.mxu0 0.0
        %2197 = vmatprep.subr.mxu0 0.0
        %2198 = vmatpush1.msra.mxu0 0.0
        %2199 = vmatprep.subr.mxu0 0.0
        %2200 = vmatpush1.msra.mxu0 0.0
        %2201 = vmatprep.subr.mxu0 0.0
        %2202 = vmatpush1.msra.mxu0 0.0
        %2203 = vmatprep.subr.mxu0 0.0
        %2204 = vmatpush1.msra.mxu0 0.0
        %2205 = vmatprep.subr.mxu0 0.0
        %2206 = vmatpush1.msra.mxu0 0.0
        %2207 = vmatprep.subr.mxu0 0.0
        %2208 = vmatpush1.msra.mxu0 0.0
        %2209 = vmatprep.subr.mxu0 0.0
        %2210 = vmatpush1.msra.mxu0 0.0
        %2211 = vmatprep.subr.mxu0 0.0
        %2212 = vmatpush1.msra.mxu0 %v2179
        %2213 = vmatprep.subr.mxu0 0.0
        %2214 = vmatpush2.msra.mxu0 0.0
        %2215 = vmatprep.subr.mxu0 0.0
        %2216 = vmatpush2.msra.mxu0 0.0
        %2217 = vmatprep.subr.mxu0 0.0
        %2218 = vmatpush2.msra.mxu0 0.0
        %2219 = vmatprep.subr.mxu0 0.0
        %2220 = vmatpush2.msra.mxu0 0.0
        %2221 = vmatprep.subr.mxu0 0.0
        %2222 = vmatpush2.msra.mxu0 0.0
        %2223 = vmatprep.subr.mxu0 0.0
        %2224 = vmatpush2.msra.mxu0 0.0
        %2225 = vmatprep.subr.mxu0 0.0
        %2226 = vmatpush2.msra.mxu0 0.0
        %2227 = vmatprep.subr.mxu0 0.0
        %2228 = vmatpush2.msra.mxu0 0.0
        %2229 = vmatprep.subr.mxu0 0.0
        %2230 = vmatpush2.msra.mxu0 0.0
        %2231 = vmatprep.subr.mxu0 0.0
        %2232 = vmatpush2.msra.mxu0 0.0
        %2233 = vmatprep.subr.mxu0 0.0
        %2234 = vmatpush2.msra.mxu0 0.0
        %2235 = vmatprep.subr.mxu0 0.0
        %2236 = vmatpush2.msra.mxu0 0.0
        %2237 = vmatprep.subr.mxu0 0.0
        %2238 = vmatpush2.msra.mxu0 0.0
        %2239 = vmatprep.subr.mxu0 0.0
        %2240 = vmatpush2.msra.mxu0 0.0
        %2241 = vmatprep.subr.mxu0 0.0
        %2242 = vmatpush2.msra.mxu0 0.0
        %2243 = vmatprep.subr.mxu0 0.0
        %2244 = vmatpush2.msra.mxu0 0.0
        %2245 = vmatprep.mubr.f32.mxu0 0.0
        %2246 = vmatmul.mubr.f32.gmra.mxu0 %v264
        %v2247 = vpop.f32.mrf.mxu0
        %v2248 = vadd.f32 %v247, %v2247
        %v2249 = vpop.f32.mrf.mxu0
        %2250 = vdwg.mxu0
        %vm2251 = vcmp.gt.f32.partialorder %v2248, 0.0
        %v2252 = vmul.f32 %v2248, 0.1
        %v2253 = vsel %vm2251, %v2248, %v2252
        %v2255 = vsel %vm342, %v2253, 0
        %2257 = vmatprep.subr.mxu0 0.0
        %2258 = vmatpush1.msra.mxu0 0.0
        %2259 = vmatprep.subr.mxu0 0.0
        %2260 = vmatpush1.msra.mxu0 0.0
        %2261 = vmatprep.subr.mxu0 0.0
        %2262 = vmatpush1.msra.mxu0 0.0
        %2263 = vmatprep.subr.mxu0 0.0
        %2264 = vmatpush1.msra.mxu0 0.0
        %2265 = vmatprep.subr.mxu0 0.0
        %2266 = vmatpush1.msra.mxu0 0.0
        %2267 = vmatprep.subr.mxu0 0.0
        %2268 = vmatpush1.msra.mxu0 0.0
        %2269 = vmatprep.subr.mxu0 0.0
        %2270 = vmatpush1.msra.mxu0 0.0
        %2271 = vmatprep.subr.mxu0 0.0
        %2272 = vmatpush1.msra.mxu0 0.0
        %2273 = vmatprep.subr.mxu0 0.0
        %2274 = vmatpush1.msra.mxu0 0.0
        %2275 = vmatprep.subr.mxu0 0.0
        %2276 = vmatpush1.msra.mxu0 0.0
        %2277 = vmatprep.subr.mxu0 0.0
        %2278 = vmatpush1.msra.mxu0 0.0
        %2279 = vmatprep.subr.mxu0 0.0
        %2280 = vmatpush1.msra.mxu0 0.0
        %2281 = vmatprep.subr.mxu0 0.0
        %2282 = vmatpush1.msra.mxu0 0.0
        %2283 = vmatprep.subr.mxu0 0.0
        %2284 = vmatpush1.msra.mxu0 0.0
        %2285 = vmatprep.subr.mxu0 0.0
        %2286 = vmatpush1.msra.mxu0 %v238
        %2287 = vmatprep.subr.mxu0 0.0
        %2288 = vmatpush1.msra.mxu0 %v237
        %2289 = vmatprep.subr.mxu0 0.0
        %2290 = vmatpush2.msra.mxu0 0.0
        %2291 = vmatprep.subr.mxu0 0.0
        %2292 = vmatpush2.msra.mxu0 0.0
        %2293 = vmatprep.subr.mxu0 0.0
        %2294 = vmatpush2.msra.mxu0 0.0
        %2295 = vmatprep.subr.mxu0 0.0
        %2296 = vmatpush2.msra.mxu0 0.0
        %2297 = vmatprep.subr.mxu0 0.0
        %2298 = vmatpush2.msra.mxu0 0.0
        %2299 = vmatprep.subr.mxu0 0.0
        %2300 = vmatpush2.msra.mxu0 0.0
        %2301 = vmatprep.subr.mxu0 0.0
        %2302 = vmatpush2.msra.mxu0 0.0
        %2303 = vmatprep.subr.mxu0 0.0
        %2304 = vmatpush2.msra.mxu0 0.0
        %2305 = vmatprep.subr.mxu0 0.0
        %2306 = vmatpush2.msra.mxu0 0.0
        %2307 = vmatprep.subr.mxu0 0.0
        %2308 = vmatpush2.msra.mxu0 0.0
        %2309 = vmatprep.subr.mxu0 0.0
        %2310 = vmatpush2.msra.mxu0 0.0
        %2311 = vmatprep.subr.mxu0 0.0
        %2312 = vmatpush2.msra.mxu0 0.0
        %2313 = vmatprep.subr.mxu0 0.0
        %2314 = vmatpush2.msra.mxu0 0.0
        %2315 = vmatprep.subr.mxu0 0.0
        %2316 = vmatpush2.msra.mxu0 0.0
        %2317 = vmatprep.subr.mxu0 0.0
        %2318 = vmatpush2.msra.mxu0 0.0
        %2319 = vmatprep.subr.mxu0 0.0
        %2320 = vmatpush2.msra.mxu0 0.0
        %2321 = vmatprep.mubr.f32.mxu0 0.0
        %2322 = vmatmul.mubr.f32.gmra.mxu0 %v2255
        %v2323 = vpop.f32.mrf.mxu0
        %v2324 = vadd.f32 0.0, %v2323
        %v2325 = vpop.f32.mrf.mxu0
        %2326 = vdwg.mxu0
        %v2329 = vunpack.c.l.s4 1966171168
        %v2330 = vunpack.c.0.s8 %v2329
        %v2331 = vlaneseq
        %v2332 = vshrl.u32 %v2331, 7
        %v2333 = vsub.s32 %v2330, %v2332
        %v2334 = vrot.slane %v2324, %v2333
        %v2335 = vcombine.high %v2334, %v2334
        %v2337 = vunpack.c.l.s4 1966171168
        %v2338 = vunpack.c.0.s8 %v2337
        %v2339 = vlaneseq
        %v2340 = vshrl.u32 %v2339, 7
        %v2341 = vsub.s32 %v2338, %v2340
        %v2342 = vrot.slane %v2334, %v2341
        %v2344 = vunpack.c.l.s4 1966171168
        %v2345 = vunpack.c.0.s8 %v2344
        %v2346 = vlaneseq
        %v2347 = vshrl.u32 %v2346, 7
        %v2348 = vsub.s32 %v2345, %v2347
        %v2349 = vrot.slane %v2335, %v2348
        %2352 = vst.msk [vmem:[%s233 + $0x14] sm:$0x1] %vm441, %v2342
        %2353 = vst.msk [vmem:[%s233 + $0x34] sm:$0x1] %vm441, %v2349
        %2354 = vst.msk [vmem:[%s233 + $0x15] sm:$0x1] %vm441, %v2342
        %2355 = vst.msk [vmem:[%s233 + $0x35] sm:$0x1] %vm441, %v2349
        %v2356 = vld [vmem:[%s209 + $0xb] sm:$0x1]
        %v2357 = vld [vmem:[%s209 + $0x1b] sm:$0x1]
        %v2358 = vld [vmem:[%s209 + $0x2b] sm:$0x1]
        %v2359 = vld [vmem:[%s209 + $0x3b] sm:$0x1]
        %v2364 = vrot.slane %v2357, 7
        %v2365 = vsel %vm254, %v2364, %v2356
        %v2366 = vrot.slane %v2358, 6
        %v2367 = vsel %vm257, %v2366, %v2365
        %v2368 = vrot.slane %v2359, 5
        %v2369 = vsel %vm260, %v2368, %v2367
        %v2370 = vsel %vm266, %v2369, 0
        %2372 = vmatprep.subr.mxu0 0.0
        %2373 = vmatpush1.msra.mxu0 0.0
        %2374 = vmatprep.subr.mxu0 0.0
        %2375 = vmatpush1.msra.mxu0 0.0
        %2376 = vmatprep.subr.mxu0 0.0
        %2377 = vmatpush1.msra.mxu0 0.0
        %2378 = vmatprep.subr.mxu0 0.0
        %2379 = vmatpush1.msra.mxu0 0.0
        %2380 = vmatprep.subr.mxu0 0.0
        %2381 = vmatpush1.msra.mxu0 0.0
        %2382 = vmatprep.subr.mxu0 0.0
        %2383 = vmatpush1.msra.mxu0 0.0
        %2384 = vmatprep.subr.mxu0 0.0
        %2385 = vmatpush1.msra.mxu0 0.0
        %2386 = vmatprep.subr.mxu0 0.0
        %2387 = vmatpush1.msra.mxu0 0.0
        %2388 = vmatprep.subr.mxu0 0.0
        %2389 = vmatpush1.msra.mxu0 0.0
        %2390 = vmatprep.subr.mxu0 0.0
        %2391 = vmatpush1.msra.mxu0 0.0
        %2392 = vmatprep.subr.mxu0 0.0
        %2393 = vmatpush1.msra.mxu0 0.0
        %2394 = vmatprep.subr.mxu0 0.0
        %2395 = vmatpush1.msra.mxu0 0.0
        %2396 = vmatprep.subr.mxu0 0.0
        %2397 = vmatpush1.msra.mxu0 0.0
        %2398 = vmatprep.subr.mxu0 0.0
        %2399 = vmatpush1.msra.mxu0 0.0
        %2400 = vmatprep.subr.mxu0 0.0
        %2401 = vmatpush1.msra.mxu0 0.0
        %2402 = vmatprep.subr.mxu0 0.0
        %2403 = vmatpush1.msra.mxu0 %v2370
        %2404 = vmatprep.subr.mxu0 0.0
        %2405 = vmatpush2.msra.mxu0 0.0
        %2406 = vmatprep.subr.mxu0 0.0
        %2407 = vmatpush2.msra.mxu0 0.0
        %2408 = vmatprep.subr.mxu0 0.0
        %2409 = vmatpush2.msra.mxu0 0.0
        %2410 = vmatprep.subr.mxu0 0.0
        %2411 = vmatpush2.msra.mxu0 0.0
        %2412 = vmatprep.subr.mxu0 0.0
        %2413 = vmatpush2.msra.mxu0 0.0
        %2414 = vmatprep.subr.mxu0 0.0
        %2415 = vmatpush2.msra.mxu0 0.0
        %2416 = vmatprep.subr.mxu0 0.0
        %2417 = vmatpush2.msra.mxu0 0.0
        %2418 = vmatprep.subr.mxu0 0.0
        %2419 = vmatpush2.msra.mxu0 0.0
        %2420 = vmatprep.subr.mxu0 0.0
        %2421 = vmatpush2.msra.mxu0 0.0
        %2422 = vmatprep.subr.mxu0 0.0
        %2423 = vmatpush2.msra.mxu0 0.0
        %2424 = vmatprep.subr.mxu0 0.0
        %2425 = vmatpush2.msra.mxu0 0.0
        %2426 = vmatprep.subr.mxu0 0.0
        %2427 = vmatpush2.msra.mxu0 0.0
        %2428 = vmatprep.subr.mxu0 0.0
        %2429 = vmatpush2.msra.mxu0 0.0
        %2430 = vmatprep.subr.mxu0 0.0
        %2431 = vmatpush2.msra.mxu0 0.0
        %2432 = vmatprep.subr.mxu0 0.0
        %2433 = vmatpush2.msra.mxu0 0.0
        %2434 = vmatprep.subr.mxu0 0.0
        %2435 = vmatpush2.msra.mxu0 0.0
        %2436 = vmatprep.mubr.f32.mxu0 0.0
        %2437 = vmatmul.mubr.f32.gmra.mxu0 %v264
        %v2438 = vpop.f32.mrf.mxu0
        %v2439 = vadd.f32 %v247, %v2438
        %v2440 = vpop.f32.mrf.mxu0
        %2441 = vdwg.mxu0
        %vm2442 = vcmp.gt.f32.partialorder %v2439, 0.0
        %v2443 = vmul.f32 %v2439, 0.1
        %v2444 = vsel %vm2442, %v2439, %v2443
        %v2446 = vsel %vm342, %v2444, 0
        %2448 = vmatprep.subr.mxu0 0.0
        %2449 = vmatpush1.msra.mxu0 0.0
        %2450 = vmatprep.subr.mxu0 0.0
        %2451 = vmatpush1.msra.mxu0 0.0
        %2452 = vmatprep.subr.mxu0 0.0
        %2453 = vmatpush1.msra.mxu0 0.0
        %2454 = vmatprep.subr.mxu0 0.0
        %2455 = vmatpush1.msra.mxu0 0.0
        %2456 = vmatprep.subr.mxu0 0.0
        %2457 = vmatpush1.msra.mxu0 0.0
        %2458 = vmatprep.subr.mxu0 0.0
        %2459 = vmatpush1.msra.mxu0 0.0
        %2460 = vmatprep.subr.mxu0 0.0
        %2461 = vmatpush1.msra.mxu0 0.0
        %2462 = vmatprep.subr.mxu0 0.0
        %2463 = vmatpush1.msra.mxu0 0.0
        %2464 = vmatprep.subr.mxu0 0.0
        %2465 = vmatpush1.msra.mxu0 0.0
        %2466 = vmatprep.subr.mxu0 0.0
        %2467 = vmatpush1.msra.mxu0 0.0
        %2468 = vmatprep.subr.mxu0 0.0
        %2469 = vmatpush1.msra.mxu0 0.0
        %2470 = vmatprep.subr.mxu0 0.0
        %2471 = vmatpush1.msra.mxu0 0.0
        %2472 = vmatprep.subr.mxu0 0.0
        %2473 = vmatpush1.msra.mxu0 0.0
        %2474 = vmatprep.subr.mxu0 0.0
        %2475 = vmatpush1.msra.mxu0 0.0
        %2476 = vmatprep.subr.mxu0 0.0
        %2477 = vmatpush1.msra.mxu0 %v238
        %2478 = vmatprep.subr.mxu0 0.0
        %2479 = vmatpush1.msra.mxu0 %v237
        %2480 = vmatprep.subr.mxu0 0.0
        %2481 = vmatpush2.msra.mxu0 0.0
        %2482 = vmatprep.subr.mxu0 0.0
        %2483 = vmatpush2.msra.mxu0 0.0
        %2484 = vmatprep.subr.mxu0 0.0
        %2485 = vmatpush2.msra.mxu0 0.0
        %2486 = vmatprep.subr.mxu0 0.0
        %2487 = vmatpush2.msra.mxu0 0.0
        %2488 = vmatprep.subr.mxu0 0.0
        %2489 = vmatpush2.msra.mxu0 0.0
        %2490 = vmatprep.subr.mxu0 0.0
        %2491 = vmatpush2.msra.mxu0 0.0
        %2492 = vmatprep.subr.mxu0 0.0
        %2493 = vmatpush2.msra.mxu0 0.0
        %2494 = vmatprep.subr.mxu0 0.0
        %2495 = vmatpush2.msra.mxu0 0.0
        %2496 = vmatprep.subr.mxu0 0.0
        %2497 = vmatpush2.msra.mxu0 0.0
        %2498 = vmatprep.subr.mxu0 0.0
        %2499 = vmatpush2.msra.mxu0 0.0
        %2500 = vmatprep.subr.mxu0 0.0
        %2501 = vmatpush2.msra.mxu0 0.0
        %2502 = vmatprep.subr.mxu0 0.0
        %2503 = vmatpush2.msra.mxu0 0.0
        %2504 = vmatprep.subr.mxu0 0.0
        %2505 = vmatpush2.msra.mxu0 0.0
        %2506 = vmatprep.subr.mxu0 0.0
        %2507 = vmatpush2.msra.mxu0 0.0
        %2508 = vmatprep.subr.mxu0 0.0
        %2509 = vmatpush2.msra.mxu0 0.0
        %2510 = vmatprep.subr.mxu0 0.0
        %2511 = vmatpush2.msra.mxu0 0.0
        %2512 = vmatprep.mubr.f32.mxu0 0.0
        %2513 = vmatmul.mubr.f32.gmra.mxu0 %v2446
        %v2514 = vpop.f32.mrf.mxu0
        %v2515 = vadd.f32 0.0, %v2514
        %v2516 = vpop.f32.mrf.mxu0
        %2517 = vdwg.mxu0
        %v2520 = vunpack.c.l.s4 1966171168
        %v2521 = vunpack.c.0.s8 %v2520
        %v2522 = vlaneseq
        %v2523 = vshrl.u32 %v2522, 7
        %v2524 = vsub.s32 %v2521, %v2523
        %v2525 = vrot.slane %v2515, %v2524
        %v2526 = vcombine.high %v2525, %v2525
        %v2528 = vunpack.c.l.s4 1966171168
        %v2529 = vunpack.c.0.s8 %v2528
        %v2530 = vlaneseq
        %v2531 = vshrl.u32 %v2530, 7
        %v2532 = vsub.s32 %v2529, %v2531
        %v2533 = vrot.slane %v2525, %v2532
        %v2535 = vunpack.c.l.s4 1966171168
        %v2536 = vunpack.c.0.s8 %v2535
        %v2537 = vlaneseq
        %v2538 = vshrl.u32 %v2537, 7
        %v2539 = vsub.s32 %v2536, %v2538
        %v2540 = vrot.slane %v2526, %v2539
        %2543 = vst.msk [vmem:[%s233 + $0x16] sm:$0x1] %vm441, %v2533
        %2544 = vst.msk [vmem:[%s233 + $0x36] sm:$0x1] %vm441, %v2540
        %2545 = vst.msk [vmem:[%s233 + $0x17] sm:$0x1] %vm441, %v2533
        %2546 = vst.msk [vmem:[%s233 + $0x37] sm:$0x1] %vm441, %v2540
        %v2547 = vld [vmem:[%s209 + $0xc] sm:$0x1]
        %v2548 = vld [vmem:[%s209 + $0x1c] sm:$0x1]
        %v2549 = vld [vmem:[%s209 + $0x2c] sm:$0x1]
        %v2550 = vld [vmem:[%s209 + $0x3c] sm:$0x1]
        %v2555 = vrot.slane %v2548, 7
        %v2556 = vsel %vm254, %v2555, %v2547
        %v2557 = vrot.slane %v2549, 6
        %v2558 = vsel %vm257, %v2557, %v2556
        %v2559 = vrot.slane %v2550, 5
        %v2560 = vsel %vm260, %v2559, %v2558
        %v2561 = vsel %vm266, %v2560, 0
        %2563 = vmatprep.subr.mxu0 0.0
        %2564 = vmatpush1.msra.mxu0 0.0
        %2565 = vmatprep.subr.mxu0 0.0
        %2566 = vmatpush1.msra.mxu0 0.0
        %2567 = vmatprep.subr.mxu0 0.0
        %2568 = vmatpush1.msra.mxu0 0.0
        %2569 = vmatprep.subr.mxu0 0.0
        %2570 = vmatpush1.msra.mxu0 0.0
        %2571 = vmatprep.subr.mxu0 0.0
        %2572 = vmatpush1.msra.mxu0 0.0
        %2573 = vmatprep.subr.mxu0 0.0
        %2574 = vmatpush1.msra.mxu0 0.0
        %2575 = vmatprep.subr.mxu0 0.0
        %2576 = vmatpush1.msra.mxu0 0.0
        %2577 = vmatprep.subr.mxu0 0.0
        %2578 = vmatpush1.msra.mxu0 0.0
        %2579 = vmatprep.subr.mxu0 0.0
        %2580 = vmatpush1.msra.mxu0 0.0
        %2581 = vmatprep.subr.mxu0 0.0
        %2582 = vmatpush1.msra.mxu0 0.0
        %2583 = vmatprep.subr.mxu0 0.0
        %2584 = vmatpush1.msra.mxu0 0.0
        %2585 = vmatprep.subr.mxu0 0.0
        %2586 = vmatpush1.msra.mxu0 0.0
        %2587 = vmatprep.subr.mxu0 0.0
        %2588 = vmatpush1.msra.mxu0 0.0
        %2589 = vmatprep.subr.mxu0 0.0
        %2590 = vmatpush1.msra.mxu0 0.0
        %2591 = vmatprep.subr.mxu0 0.0
        %2592 = vmatpush1.msra.mxu0 0.0
        %2593 = vmatprep.subr.mxu0 0.0
        %2594 = vmatpush1.msra.mxu0 %v2561
        %2595 = vmatprep.subr.mxu0 0.0
        %2596 = vmatpush2.msra.mxu0 0.0
        %2597 = vmatprep.subr.mxu0 0.0
        %2598 = vmatpush2.msra.mxu0 0.0
        %2599 = vmatprep.subr.mxu0 0.0
        %2600 = vmatpush2.msra.mxu0 0.0
        %2601 = vmatprep.subr.mxu0 0.0
        %2602 = vmatpush2.msra.mxu0 0.0
        %2603 = vmatprep.subr.mxu0 0.0
        %2604 = vmatpush2.msra.mxu0 0.0
        %2605 = vmatprep.subr.mxu0 0.0
        %2606 = vmatpush2.msra.mxu0 0.0
        %2607 = vmatprep.subr.mxu0 0.0
        %2608 = vmatpush2.msra.mxu0 0.0
        %2609 = vmatprep.subr.mxu0 0.0
        %2610 = vmatpush2.msra.mxu0 0.0
        %2611 = vmatprep.subr.mxu0 0.0
        %2612 = vmatpush2.msra.mxu0 0.0
        %2613 = vmatprep.subr.mxu0 0.0
        %2614 = vmatpush2.msra.mxu0 0.0
        %2615 = vmatprep.subr.mxu0 0.0
        %2616 = vmatpush2.msra.mxu0 0.0
        %2617 = vmatprep.subr.mxu0 0.0
        %2618 = vmatpush2.msra.mxu0 0.0
        %2619 = vmatprep.subr.mxu0 0.0
        %2620 = vmatpush2.msra.mxu0 0.0
        %2621 = vmatprep.subr.mxu0 0.0
        %2622 = vmatpush2.msra.mxu0 0.0
        %2623 = vmatprep.subr.mxu0 0.0
        %2624 = vmatpush2.msra.mxu0 0.0
        %2625 = vmatprep.subr.mxu0 0.0
        %2626 = vmatpush2.msra.mxu0 0.0
        %2627 = vmatprep.mubr.f32.mxu0 0.0
        %2628 = vmatmul.mubr.f32.gmra.mxu0 %v264
        %v2629 = vpop.f32.mrf.mxu0
        %v2630 = vadd.f32 %v247, %v2629
        %v2631 = vpop.f32.mrf.mxu0
        %2632 = vdwg.mxu0
        %vm2633 = vcmp.gt.f32.partialorder %v2630, 0.0
        %v2634 = vmul.f32 %v2630, 0.1
        %v2635 = vsel %vm2633, %v2630, %v2634
        %v2637 = vsel %vm342, %v2635, 0
        %2639 = vmatprep.subr.mxu0 0.0
        %2640 = vmatpush1.msra.mxu0 0.0
        %2641 = vmatprep.subr.mxu0 0.0
        %2642 = vmatpush1.msra.mxu0 0.0
        %2643 = vmatprep.subr.mxu0 0.0
        %2644 = vmatpush1.msra.mxu0 0.0
        %2645 = vmatprep.subr.mxu0 0.0
        %2646 = vmatpush1.msra.mxu0 0.0
        %2647 = vmatprep.subr.mxu0 0.0
        %2648 = vmatpush1.msra.mxu0 0.0
        %2649 = vmatprep.subr.mxu0 0.0
        %2650 = vmatpush1.msra.mxu0 0.0
        %2651 = vmatprep.subr.mxu0 0.0
        %2652 = vmatpush1.msra.mxu0 0.0
        %2653 = vmatprep.subr.mxu0 0.0
        %2654 = vmatpush1.msra.mxu0 0.0
        %2655 = vmatprep.subr.mxu0 0.0
        %2656 = vmatpush1.msra.mxu0 0.0
        %2657 = vmatprep.subr.mxu0 0.0
        %2658 = vmatpush1.msra.mxu0 0.0
        %2659 = vmatprep.subr.mxu0 0.0
        %2660 = vmatpush1.msra.mxu0 0.0
        %2661 = vmatprep.subr.mxu0 0.0
        %2662 = vmatpush1.msra.mxu0 0.0
        %2663 = vmatprep.subr.mxu0 0.0
        %2664 = vmatpush1.msra.mxu0 0.0
        %2665 = vmatprep.subr.mxu0 0.0
        %2666 = vmatpush1.msra.mxu0 0.0
        %2667 = vmatprep.subr.mxu0 0.0
        %2668 = vmatpush1.msra.mxu0 %v238
        %2669 = vmatprep.subr.mxu0 0.0
        %2670 = vmatpush1.msra.mxu0 %v237
        %2671 = vmatprep.subr.mxu0 0.0
        %2672 = vmatpush2.msra.mxu0 0.0
        %2673 = vmatprep.subr.mxu0 0.0
        %2674 = vmatpush2.msra.mxu0 0.0
        %2675 = vmatprep.subr.mxu0 0.0
        %2676 = vmatpush2.msra.mxu0 0.0
        %2677 = vmatprep.subr.mxu0 0.0
        %2678 = vmatpush2.msra.mxu0 0.0
        %2679 = vmatprep.subr.mxu0 0.0
        %2680 = vmatpush2.msra.mxu0 0.0
        %2681 = vmatprep.subr.mxu0 0.0
        %2682 = vmatpush2.msra.mxu0 0.0
        %2683 = vmatprep.subr.mxu0 0.0
        %2684 = vmatpush2.msra.mxu0 0.0
        %2685 = vmatprep.subr.mxu0 0.0
        %2686 = vmatpush2.msra.mxu0 0.0
        %2687 = vmatprep.subr.mxu0 0.0
        %2688 = vmatpush2.msra.mxu0 0.0
        %2689 = vmatprep.subr.mxu0 0.0
        %2690 = vmatpush2.msra.mxu0 0.0
        %2691 = vmatprep.subr.mxu0 0.0
        %2692 = vmatpush2.msra.mxu0 0.0
        %2693 = vmatprep.subr.mxu0 0.0
        %2694 = vmatpush2.msra.mxu0 0.0
        %2695 = vmatprep.subr.mxu0 0.0
        %2696 = vmatpush2.msra.mxu0 0.0
        %2697 = vmatprep.subr.mxu0 0.0
        %2698 = vmatpush2.msra.mxu0 0.0
        %2699 = vmatprep.subr.mxu0 0.0
        %2700 = vmatpush2.msra.mxu0 0.0
        %2701 = vmatprep.subr.mxu0 0.0
        %2702 = vmatpush2.msra.mxu0 0.0
        %2703 = vmatprep.mubr.f32.mxu0 0.0
        %2704 = vmatmul.mubr.f32.gmra.mxu0 %v2637
        %v2705 = vpop.f32.mrf.mxu0
        %v2706 = vadd.f32 0.0, %v2705
        %v2707 = vpop.f32.mrf.mxu0
        %2708 = vdwg.mxu0
        %v2711 = vunpack.c.l.s4 1966171168
        %v2712 = vunpack.c.0.s8 %v2711
        %v2713 = vlaneseq
        %v2714 = vshrl.u32 %v2713, 7
        %v2715 = vsub.s32 %v2712, %v2714
        %v2716 = vrot.slane %v2706, %v2715
        %v2717 = vcombine.high %v2716, %v2716
        %v2719 = vunpack.c.l.s4 1966171168
        %v2720 = vunpack.c.0.s8 %v2719
        %v2721 = vlaneseq
        %v2722 = vshrl.u32 %v2721, 7
        %v2723 = vsub.s32 %v2720, %v2722
        %v2724 = vrot.slane %v2716, %v2723
        %v2726 = vunpack.c.l.s4 1966171168
        %v2727 = vunpack.c.0.s8 %v2726
        %v2728 = vlaneseq
        %v2729 = vshrl.u32 %v2728, 7
        %v2730 = vsub.s32 %v2727, %v2729
        %v2731 = vrot.slane %v2717, %v2730
        %2734 = vst.msk [vmem:[%s233 + $0x18] sm:$0x1] %vm441, %v2724
        %2735 = vst.msk [vmem:[%s233 + $0x38] sm:$0x1] %vm441, %v2731
        %2736 = vst.msk [vmem:[%s233 + $0x19] sm:$0x1] %vm441, %v2724
        %2737 = vst.msk [vmem:[%s233 + $0x39] sm:$0x1] %vm441, %v2731
        %v2738 = vld [vmem:[%s209 + $0xd] sm:$0x1]
        %v2739 = vld [vmem:[%s209 + $0x1d] sm:$0x1]
        %v2740 = vld [vmem:[%s209 + $0x2d] sm:$0x1]
        %v2741 = vld [vmem:[%s209 + $0x3d] sm:$0x1]
        %v2746 = vrot.slane %v2739, 7
        %v2747 = vsel %vm254, %v2746, %v2738
        %v2748 = vrot.slane %v2740, 6
        %v2749 = vsel %vm257, %v2748, %v2747
        %v2750 = vrot.slane %v2741, 5
        %v2751 = vsel %vm260, %v2750, %v2749
        %v2752 = vsel %vm266, %v2751, 0
        %2754 = vmatprep.subr.mxu0 0.0
        %2755 = vmatpush1.msra.mxu0 0.0
        %2756 = vmatprep.subr.mxu0 0.0
        %2757 = vmatpush1.msra.mxu0 0.0
        %2758 = vmatprep.subr.mxu0 0.0
        %2759 = vmatpush1.msra.mxu0 0.0
        %2760 = vmatprep.subr.mxu0 0.0
        %2761 = vmatpush1.msra.mxu0 0.0
        %2762 = vmatprep.subr.mxu0 0.0
        %2763 = vmatpush1.msra.mxu0 0.0
        %2764 = vmatprep.subr.mxu0 0.0
        %2765 = vmatpush1.msra.mxu0 0.0
        %2766 = vmatprep.subr.mxu0 0.0
        %2767 = vmatpush1.msra.mxu0 0.0
        %2768 = vmatprep.subr.mxu0 0.0
        %2769 = vmatpush1.msra.mxu0 0.0
        %2770 = vmatprep.subr.mxu0 0.0
        %2771 = vmatpush1.msra.mxu0 0.0
        %2772 = vmatprep.subr.mxu0 0.0
        %2773 = vmatpush1.msra.mxu0 0.0
        %2774 = vmatprep.subr.mxu0 0.0
        %2775 = vmatpush1.msra.mxu0 0.0
        %2776 = vmatprep.subr.mxu0 0.0
        %2777 = vmatpush1.msra.mxu0 0.0
        %2778 = vmatprep.subr.mxu0 0.0
        %2779 = vmatpush1.msra.mxu0 0.0
        %2780 = vmatprep.subr.mxu0 0.0
        %2781 = vmatpush1.msra.mxu0 0.0
        %2782 = vmatprep.subr.mxu0 0.0
        %2783 = vmatpush1.msra.mxu0 0.0
        %2784 = vmatprep.subr.mxu0 0.0
        %2785 = vmatpush1.msra.mxu0 %v2752
        %2786 = vmatprep.subr.mxu0 0.0
        %2787 = vmatpush2.msra.mxu0 0.0
        %2788 = vmatprep.subr.mxu0 0.0
        %2789 = vmatpush2.msra.mxu0 0.0
        %2790 = vmatprep.subr.mxu0 0.0
        %2791 = vmatpush2.msra.mxu0 0.0
        %2792 = vmatprep.subr.mxu0 0.0
        %2793 = vmatpush2.msra.mxu0 0.0
        %2794 = vmatprep.subr.mxu0 0.0
        %2795 = vmatpush2.msra.mxu0 0.0
        %2796 = vmatprep.subr.mxu0 0.0
        %2797 = vmatpush2.msra.mxu0 0.0
        %2798 = vmatprep.subr.mxu0 0.0
        %2799 = vmatpush2.msra.mxu0 0.0
        %2800 = vmatprep.subr.mxu0 0.0
        %2801 = vmatpush2.msra.mxu0 0.0
        %2802 = vmatprep.subr.mxu0 0.0
        %2803 = vmatpush2.msra.mxu0 0.0
        %2804 = vmatprep.subr.mxu0 0.0
        %2805 = vmatpush2.msra.mxu0 0.0
        %2806 = vmatprep.subr.mxu0 0.0
        %2807 = vmatpush2.msra.mxu0 0.0
        %2808 = vmatprep.subr.mxu0 0.0
        %2809 = vmatpush2.msra.mxu0 0.0
        %2810 = vmatprep.subr.mxu0 0.0
        %2811 = vmatpush2.msra.mxu0 0.0
        %2812 = vmatprep.subr.mxu0 0.0
        %2813 = vmatpush2.msra.mxu0 0.0
        %2814 = vmatprep.subr.mxu0 0.0
        %2815 = vmatpush2.msra.mxu0 0.0
        %2816 = vmatprep.subr.mxu0 0.0
        %2817 = vmatpush2.msra.mxu0 0.0
        %2818 = vmatprep.mubr.f32.mxu0 0.0
        %2819 = vmatmul.mubr.f32.gmra.mxu0 %v264
        %v2820 = vpop.f32.mrf.mxu0
        %v2821 = vadd.f32 %v247, %v2820
        %v2822 = vpop.f32.mrf.mxu0
        %2823 = vdwg.mxu0
        %vm2824 = vcmp.gt.f32.partialorder %v2821, 0.0
        %v2825 = vmul.f32 %v2821, 0.1
        %v2826 = vsel %vm2824, %v2821, %v2825
        %v2828 = vsel %vm342, %v2826, 0
        %2830 = vmatprep.subr.mxu0 0.0
        %2831 = vmatpush1.msra.mxu0 0.0
        %2832 = vmatprep.subr.mxu0 0.0
        %2833 = vmatpush1.msra.mxu0 0.0
        %2834 = vmatprep.subr.mxu0 0.0
        %2835 = vmatpush1.msra.mxu0 0.0
        %2836 = vmatprep.subr.mxu0 0.0
        %2837 = vmatpush1.msra.mxu0 0.0
        %2838 = vmatprep.subr.mxu0 0.0
        %2839 = vmatpush1.msra.mxu0 0.0
        %2840 = vmatprep.subr.mxu0 0.0
        %2841 = vmatpush1.msra.mxu0 0.0
        %2842 = vmatprep.subr.mxu0 0.0
        %2843 = vmatpush1.msra.mxu0 0.0
        %2844 = vmatprep.subr.mxu0 0.0
        %2845 = vmatpush1.msra.mxu0 0.0
        %2846 = vmatprep.subr.mxu0 0.0
        %2847 = vmatpush1.msra.mxu0 0.0
        %2848 = vmatprep.subr.mxu0 0.0
        %2849 = vmatpush1.msra.mxu0 0.0
        %2850 = vmatprep.subr.mxu0 0.0
        %2851 = vmatpush1.msra.mxu0 0.0
        %2852 = vmatprep.subr.mxu0 0.0
        %2853 = vmatpush1.msra.mxu0 0.0
        %2854 = vmatprep.subr.mxu0 0.0
        %2855 = vmatpush1.msra.mxu0 0.0
        %2856 = vmatprep.subr.mxu0 0.0
        %2857 = vmatpush1.msra.mxu0 0.0
        %2858 = vmatprep.subr.mxu0 0.0
        %2859 = vmatpush1.msra.mxu0 %v238
        %2860 = vmatprep.subr.mxu0 0.0
        %2861 = vmatpush1.msra.mxu0 %v237
        %2862 = vmatprep.subr.mxu0 0.0
        %2863 = vmatpush2.msra.mxu0 0.0
        %2864 = vmatprep.subr.mxu0 0.0
        %2865 = vmatpush2.msra.mxu0 0.0
        %2866 = vmatprep.subr.mxu0 0.0
        %2867 = vmatpush2.msra.mxu0 0.0
        %2868 = vmatprep.subr.mxu0 0.0
        %2869 = vmatpush2.msra.mxu0 0.0
        %2870 = vmatprep.subr.mxu0 0.0
        %2871 = vmatpush2.msra.mxu0 0.0
        %2872 = vmatprep.subr.mxu0 0.0
        %2873 = vmatpush2.msra.mxu0 0.0
        %2874 = vmatprep.subr.mxu0 0.0
        %2875 = vmatpush2.msra.mxu0 0.0
        %2876 = vmatprep.subr.mxu0 0.0
        %2877 = vmatpush2.msra.mxu0 0.0
        %2878 = vmatprep.subr.mxu0 0.0
        %2879 = vmatpush2.msra.mxu0 0.0
        %2880 = vmatprep.subr.mxu0 0.0
        %2881 = vmatpush2.msra.mxu0 0.0
        %2882 = vmatprep.subr.mxu0 0.0
        %2883 = vmatpush2.msra.mxu0 0.0
        %2884 = vmatprep.subr.mxu0 0.0
        %2885 = vmatpush2.msra.mxu0 0.0
        %2886 = vmatprep.subr.mxu0 0.0
        %2887 = vmatpush2.msra.mxu0 0.0
        %2888 = vmatprep.subr.mxu0 0.0
        %2889 = vmatpush2.msra.mxu0 0.0
        %2890 = vmatprep.subr.mxu0 0.0
        %2891 = vmatpush2.msra.mxu0 0.0
        %2892 = vmatprep.subr.mxu0 0.0
        %2893 = vmatpush2.msra.mxu0 0.0
        %2894 = vmatprep.mubr.f32.mxu0 0.0
        %2895 = vmatmul.mubr.f32.gmra.mxu0 %v2828
        %v2896 = vpop.f32.mrf.mxu0
        %v2897 = vadd.f32 0.0, %v2896
        %v2898 = vpop.f32.mrf.mxu0
        %2899 = vdwg.mxu0
        %v2902 = vunpack.c.l.s4 1966171168
        %v2903 = vunpack.c.0.s8 %v2902
        %v2904 = vlaneseq
        %v2905 = vshrl.u32 %v2904, 7
        %v2906 = vsub.s32 %v2903, %v2905
        %v2907 = vrot.slane %v2897, %v2906
        %v2908 = vcombine.high %v2907, %v2907
        %v2910 = vunpack.c.l.s4 1966171168
        %v2911 = vunpack.c.0.s8 %v2910
        %v2912 = vlaneseq
        %v2913 = vshrl.u32 %v2912, 7
        %v2914 = vsub.s32 %v2911, %v2913
        %v2915 = vrot.slane %v2907, %v2914
        %v2917 = vunpack.c.l.s4 1966171168
        %v2918 = vunpack.c.0.s8 %v2917
        %v2919 = vlaneseq
        %v2920 = vshrl.u32 %v2919, 7
        %v2921 = vsub.s32 %v2918, %v2920
        %v2922 = vrot.slane %v2908, %v2921
        %2925 = vst.msk [vmem:[%s233 + $0x1a] sm:$0x1] %vm441, %v2915
        %2926 = vst.msk [vmem:[%s233 + $0x3a] sm:$0x1] %vm441, %v2922
        %2927 = vst.msk [vmem:[%s233 + $0x1b] sm:$0x1] %vm441, %v2915
        %2928 = vst.msk [vmem:[%s233 + $0x3b] sm:$0x1] %vm441, %v2922
        %v2929 = vld [vmem:[%s209 + $0xe] sm:$0x1]
        %v2930 = vld [vmem:[%s209 + $0x1e] sm:$0x1]
        %v2931 = vld [vmem:[%s209 + $0x2e] sm:$0x1]
        %v2932 = vld [vmem:[%s209 + $0x3e] sm:$0x1]
        %v2937 = vrot.slane %v2930, 7
        %v2938 = vsel %vm254, %v2937, %v2929
        %v2939 = vrot.slane %v2931, 6
        %v2940 = vsel %vm257, %v2939, %v2938
        %v2941 = vrot.slane %v2932, 5
        %v2942 = vsel %vm260, %v2941, %v2940
        %v2943 = vsel %vm266, %v2942, 0
        %2945 = vmatprep.subr.mxu0 0.0
        %2946 = vmatpush1.msra.mxu0 0.0
        %2947 = vmatprep.subr.mxu0 0.0
        %2948 = vmatpush1.msra.mxu0 0.0
        %2949 = vmatprep.subr.mxu0 0.0
        %2950 = vmatpush1.msra.mxu0 0.0
        %2951 = vmatprep.subr.mxu0 0.0
        %2952 = vmatpush1.msra.mxu0 0.0
        %2953 = vmatprep.subr.mxu0 0.0
        %2954 = vmatpush1.msra.mxu0 0.0
        %2955 = vmatprep.subr.mxu0 0.0
        %2956 = vmatpush1.msra.mxu0 0.0
        %2957 = vmatprep.subr.mxu0 0.0
        %2958 = vmatpush1.msra.mxu0 0.0
        %2959 = vmatprep.subr.mxu0 0.0
        %2960 = vmatpush1.msra.mxu0 0.0
        %2961 = vmatprep.subr.mxu0 0.0
        %2962 = vmatpush1.msra.mxu0 0.0
        %2963 = vmatprep.subr.mxu0 0.0
        %2964 = vmatpush1.msra.mxu0 0.0
        %2965 = vmatprep.subr.mxu0 0.0
        %2966 = vmatpush1.msra.mxu0 0.0
        %2967 = vmatprep.subr.mxu0 0.0
        %2968 = vmatpush1.msra.mxu0 0.0
        %2969 = vmatprep.subr.mxu0 0.0
        %2970 = vmatpush1.msra.mxu0 0.0
        %2971 = vmatprep.subr.mxu0 0.0
        %2972 = vmatpush1.msra.mxu0 0.0
        %2973 = vmatprep.subr.mxu0 0.0
        %2974 = vmatpush1.msra.mxu0 0.0
        %2975 = vmatprep.subr.mxu0 0.0
        %2976 = vmatpush1.msra.mxu0 %v2943
        %2977 = vmatprep.subr.mxu0 0.0
        %2978 = vmatpush2.msra.mxu0 0.0
        %2979 = vmatprep.subr.mxu0 0.0
        %2980 = vmatpush2.msra.mxu0 0.0
        %2981 = vmatprep.subr.mxu0 0.0
        %2982 = vmatpush2.msra.mxu0 0.0
        %2983 = vmatprep.subr.mxu0 0.0
        %2984 = vmatpush2.msra.mxu0 0.0
        %2985 = vmatprep.subr.mxu0 0.0
        %2986 = vmatpush2.msra.mxu0 0.0
        %2987 = vmatprep.subr.mxu0 0.0
        %2988 = vmatpush2.msra.mxu0 0.0
        %2989 = vmatprep.subr.mxu0 0.0
        %2990 = vmatpush2.msra.mxu0 0.0
        %2991 = vmatprep.subr.mxu0 0.0
        %2992 = vmatpush2.msra.mxu0 0.0
        %2993 = vmatprep.subr.mxu0 0.0
        %2994 = vmatpush2.msra.mxu0 0.0
        %2995 = vmatprep.subr.mxu0 0.0
        %2996 = vmatpush2.msra.mxu0 0.0
        %2997 = vmatprep.subr.mxu0 0.0
        %2998 = vmatpush2.msra.mxu0 0.0
        %2999 = vmatprep.subr.mxu0 0.0
        %3000 = vmatpush2.msra.mxu0 0.0
        %3001 = vmatprep.subr.mxu0 0.0
        %3002 = vmatpush2.msra.mxu0 0.0
        %3003 = vmatprep.subr.mxu0 0.0
        %3004 = vmatpush2.msra.mxu0 0.0
        %3005 = vmatprep.subr.mxu0 0.0
        %3006 = vmatpush2.msra.mxu0 0.0
        %3007 = vmatprep.subr.mxu0 0.0
        %3008 = vmatpush2.msra.mxu0 0.0
        %3009 = vmatprep.mubr.f32.mxu0 0.0
        %3010 = vmatmul.mubr.f32.gmra.mxu0 %v264
        %v3011 = vpop.f32.mrf.mxu0
        %v3012 = vadd.f32 %v247, %v3011
        %v3013 = vpop.f32.mrf.mxu0
        %3014 = vdwg.mxu0
        %vm3015 = vcmp.gt.f32.partialorder %v3012, 0.0
        %v3016 = vmul.f32 %v3012, 0.1
        %v3017 = vsel %vm3015, %v3012, %v3016
        %v3019 = vsel %vm342, %v3017, 0
        %3021 = vmatprep.subr.mxu0 0.0
        %3022 = vmatpush1.msra.mxu0 0.0
        %3023 = vmatprep.subr.mxu0 0.0
        %3024 = vmatpush1.msra.mxu0 0.0
        %3025 = vmatprep.subr.mxu0 0.0
        %3026 = vmatpush1.msra.mxu0 0.0
        %3027 = vmatprep.subr.mxu0 0.0
        %3028 = vmatpush1.msra.mxu0 0.0
        %3029 = vmatprep.subr.mxu0 0.0
        %3030 = vmatpush1.msra.mxu0 0.0
        %3031 = vmatprep.subr.mxu0 0.0
        %3032 = vmatpush1.msra.mxu0 0.0
        %3033 = vmatprep.subr.mxu0 0.0
        %3034 = vmatpush1.msra.mxu0 0.0
        %3035 = vmatprep.subr.mxu0 0.0
        %3036 = vmatpush1.msra.mxu0 0.0
        %3037 = vmatprep.subr.mxu0 0.0
        %3038 = vmatpush1.msra.mxu0 0.0
        %3039 = vmatprep.subr.mxu0 0.0
        %3040 = vmatpush1.msra.mxu0 0.0
        %3041 = vmatprep.subr.mxu0 0.0
        %3042 = vmatpush1.msra.mxu0 0.0
        %3043 = vmatprep.subr.mxu0 0.0
        %3044 = vmatpush1.msra.mxu0 0.0
        %3045 = vmatprep.subr.mxu0 0.0
        %3046 = vmatpush1.msra.mxu0 0.0
        %3047 = vmatprep.subr.mxu0 0.0
        %3048 = vmatpush1.msra.mxu0 0.0
        %3049 = vmatprep.subr.mxu0 0.0
        %3050 = vmatpush1.msra.mxu0 %v238
        %3051 = vmatprep.subr.mxu0 0.0
        %3052 = vmatpush1.msra.mxu0 %v237
        %3053 = vmatprep.subr.mxu0 0.0
        %3054 = vmatpush2.msra.mxu0 0.0
        %3055 = vmatprep.subr.mxu0 0.0
        %3056 = vmatpush2.msra.mxu0 0.0
        %3057 = vmatprep.subr.mxu0 0.0
        %3058 = vmatpush2.msra.mxu0 0.0
        %3059 = vmatprep.subr.mxu0 0.0
        %3060 = vmatpush2.msra.mxu0 0.0
        %3061 = vmatprep.subr.mxu0 0.0
        %3062 = vmatpush2.msra.mxu0 0.0
        %3063 = vmatprep.subr.mxu0 0.0
        %3064 = vmatpush2.msra.mxu0 0.0
        %3065 = vmatprep.subr.mxu0 0.0
        %3066 = vmatpush2.msra.mxu0 0.0
        %3067 = vmatprep.subr.mxu0 0.0
        %3068 = vmatpush2.msra.mxu0 0.0
        %3069 = vmatprep.subr.mxu0 0.0
        %3070 = vmatpush2.msra.mxu0 0.0
        %3071 = vmatprep.subr.mxu0 0.0
        %3072 = vmatpush2.msra.mxu0 0.0
        %3073 = vmatprep.subr.mxu0 0.0
        %3074 = vmatpush2.msra.mxu0 0.0
        %3075 = vmatprep.subr.mxu0 0.0
        %3076 = vmatpush2.msra.mxu0 0.0
        %3077 = vmatprep.subr.mxu0 0.0
        %3078 = vmatpush2.msra.mxu0 0.0
        %3079 = vmatprep.subr.mxu0 0.0
        %3080 = vmatpush2.msra.mxu0 0.0
        %3081 = vmatprep.subr.mxu0 0.0
        %3082 = vmatpush2.msra.mxu0 0.0
        %3083 = vmatprep.subr.mxu0 0.0
        %3084 = vmatpush2.msra.mxu0 0.0
        %3085 = vmatprep.mubr.f32.mxu0 0.0
        %3086 = vmatmul.mubr.f32.gmra.mxu0 %v3019
        %v3087 = vpop.f32.mrf.mxu0
        %v3088 = vadd.f32 0.0, %v3087
        %v3089 = vpop.f32.mrf.mxu0
        %3090 = vdwg.mxu0
        %v3093 = vunpack.c.l.s4 1966171168
        %v3094 = vunpack.c.0.s8 %v3093
        %v3095 = vlaneseq
        %v3096 = vshrl.u32 %v3095, 7
        %v3097 = vsub.s32 %v3094, %v3096
        %v3098 = vrot.slane %v3088, %v3097
        %v3099 = vcombine.high %v3098, %v3098
        %v3101 = vunpack.c.l.s4 1966171168
        %v3102 = vunpack.c.0.s8 %v3101
        %v3103 = vlaneseq
        %v3104 = vshrl.u32 %v3103, 7
        %v3105 = vsub.s32 %v3102, %v3104
        %v3106 = vrot.slane %v3098, %v3105
        %v3108 = vunpack.c.l.s4 1966171168
        %v3109 = vunpack.c.0.s8 %v3108
        %v3110 = vlaneseq
        %v3111 = vshrl.u32 %v3110, 7
        %v3112 = vsub.s32 %v3109, %v3111
        %v3113 = vrot.slane %v3099, %v3112
        %3116 = vst.msk [vmem:[%s233 + $0x1c] sm:$0x1] %vm441, %v3106
        %3117 = vst.msk [vmem:[%s233 + $0x3c] sm:$0x1] %vm441, %v3113
        %3118 = vst.msk [vmem:[%s233 + $0x1d] sm:$0x1] %vm441, %v3106
        %3119 = vst.msk [vmem:[%s233 + $0x3d] sm:$0x1] %vm441, %v3113
        %v3120 = vld [vmem:[%s209 + $0xf] sm:$0x1]
        %v3121 = vld [vmem:[%s209 + $0x1f] sm:$0x1]
        %v3122 = vld [vmem:[%s209 + $0x2f] sm:$0x1]
        %v3123 = vld [vmem:[%s209 + $0x3f] sm:$0x1]
        %v3128 = vrot.slane %v3121, 7
        %v3129 = vsel %vm254, %v3128, %v3120
        %v3130 = vrot.slane %v3122, 6
        %v3131 = vsel %vm257, %v3130, %v3129
        %v3132 = vrot.slane %v3123, 5
        %v3133 = vsel %vm260, %v3132, %v3131
        %v3134 = vsel %vm266, %v3133, 0
        %3136 = vmatprep.subr.mxu0 0.0
        %3137 = vmatpush1.msra.mxu0 0.0
        %3138 = vmatprep.subr.mxu0 0.0
        %3139 = vmatpush1.msra.mxu0 0.0
        %3140 = vmatprep.subr.mxu0 0.0
        %3141 = vmatpush1.msra.mxu0 0.0
        %3142 = vmatprep.subr.mxu0 0.0
        %3143 = vmatpush1.msra.mxu0 0.0
        %3144 = vmatprep.subr.mxu0 0.0
        %3145 = vmatpush1.msra.mxu0 0.0
        %3146 = vmatprep.subr.mxu0 0.0
        %3147 = vmatpush1.msra.mxu0 0.0
        %3148 = vmatprep.subr.mxu0 0.0
        %3149 = vmatpush1.msra.mxu0 0.0
        %3150 = vmatprep.subr.mxu0 0.0
        %3151 = vmatpush1.msra.mxu0 0.0
        %3152 = vmatprep.subr.mxu0 0.0
        %3153 = vmatpush1.msra.mxu0 0.0
        %3154 = vmatprep.subr.mxu0 0.0
        %3155 = vmatpush1.msra.mxu0 0.0
        %3156 = vmatprep.subr.mxu0 0.0
        %3157 = vmatpush1.msra.mxu0 0.0
        %3158 = vmatprep.subr.mxu0 0.0
        %3159 = vmatpush1.msra.mxu0 0.0
        %3160 = vmatprep.subr.mxu0 0.0
        %3161 = vmatpush1.msra.mxu0 0.0
        %3162 = vmatprep.subr.mxu0 0.0
        %3163 = vmatpush1.msra.mxu0 0.0
        %3164 = vmatprep.subr.mxu0 0.0
        %3165 = vmatpush1.msra.mxu0 0.0
        %3166 = vmatprep.subr.mxu0 0.0
        %3167 = vmatpush1.msra.mxu0 %v3134
        %3168 = vmatprep.subr.mxu0 0.0
        %3169 = vmatpush2.msra.mxu0 0.0
        %3170 = vmatprep.subr.mxu0 0.0
        %3171 = vmatpush2.msra.mxu0 0.0
        %3172 = vmatprep.subr.mxu0 0.0
        %3173 = vmatpush2.msra.mxu0 0.0
        %3174 = vmatprep.subr.mxu0 0.0
        %3175 = vmatpush2.msra.mxu0 0.0
        %3176 = vmatprep.subr.mxu0 0.0
        %3177 = vmatpush2.msra.mxu0 0.0
        %3178 = vmatprep.subr.mxu0 0.0
        %3179 = vmatpush2.msra.mxu0 0.0
        %3180 = vmatprep.subr.mxu0 0.0
        %3181 = vmatpush2.msra.mxu0 0.0
        %3182 = vmatprep.subr.mxu0 0.0
        %3183 = vmatpush2.msra.mxu0 0.0
        %3184 = vmatprep.subr.mxu0 0.0
        %3185 = vmatpush2.msra.mxu0 0.0
        %3186 = vmatprep.subr.mxu0 0.0
        %3187 = vmatpush2.msra.mxu0 0.0
        %3188 = vmatprep.subr.mxu0 0.0
        %3189 = vmatpush2.msra.mxu0 0.0
        %3190 = vmatprep.subr.mxu0 0.0
        %3191 = vmatpush2.msra.mxu0 0.0
        %3192 = vmatprep.subr.mxu0 0.0
        %3193 = vmatpush2.msra.mxu0 0.0
        %3194 = vmatprep.subr.mxu0 0.0
        %3195 = vmatpush2.msra.mxu0 0.0
        %3196 = vmatprep.subr.mxu0 0.0
        %3197 = vmatpush2.msra.mxu0 0.0
        %3198 = vmatprep.subr.mxu0 0.0
        %3199 = vmatpush2.msra.mxu0 0.0
        %3200 = vmatprep.mubr.f32.mxu0 0.0
        %3201 = vmatmul.mubr.f32.gmra.mxu0 %v264
        %v3202 = vpop.f32.mrf.mxu0
        %v3203 = vadd.f32 %v247, %v3202
        %v3204 = vpop.f32.mrf.mxu0
        %3205 = vdwg.mxu0
        %vm3206 = vcmp.gt.f32.partialorder %v3203, 0.0
        %v3207 = vmul.f32 %v3203, 0.1
        %v3208 = vsel %vm3206, %v3203, %v3207
        %v3210 = vsel %vm342, %v3208, 0
        %3212 = vmatprep.subr.mxu0 0.0
        %3213 = vmatpush1.msra.mxu0 0.0
        %3214 = vmatprep.subr.mxu0 0.0
        %3215 = vmatpush1.msra.mxu0 0.0
        %3216 = vmatprep.subr.mxu0 0.0
        %3217 = vmatpush1.msra.mxu0 0.0
        %3218 = vmatprep.subr.mxu0 0.0
        %3219 = vmatpush1.msra.mxu0 0.0
        %3220 = vmatprep.subr.mxu0 0.0
        %3221 = vmatpush1.msra.mxu0 0.0
        %3222 = vmatprep.subr.mxu0 0.0
        %3223 = vmatpush1.msra.mxu0 0.0
        %3224 = vmatprep.subr.mxu0 0.0
        %3225 = vmatpush1.msra.mxu0 0.0
        %3226 = vmatprep.subr.mxu0 0.0
        %3227 = vmatpush1.msra.mxu0 0.0
        %3228 = vmatprep.subr.mxu0 0.0
        %3229 = vmatpush1.msra.mxu0 0.0
        %3230 = vmatprep.subr.mxu0 0.0
        %3231 = vmatpush1.msra.mxu0 0.0
        %3232 = vmatprep.subr.mxu0 0.0
        %3233 = vmatpush1.msra.mxu0 0.0
        %3234 = vmatprep.subr.mxu0 0.0
        %3235 = vmatpush1.msra.mxu0 0.0
        %3236 = vmatprep.subr.mxu0 0.0
        %3237 = vmatpush1.msra.mxu0 0.0
        %3238 = vmatprep.subr.mxu0 0.0
        %3239 = vmatpush1.msra.mxu0 0.0
        %3240 = vmatprep.subr.mxu0 0.0
        %3241 = vmatpush1.msra.mxu0 %v238
        %3242 = vmatprep.subr.mxu0 0.0
        %3243 = vmatpush1.msra.mxu0 %v237
        %3244 = vmatprep.subr.mxu0 0.0
        %3245 = vmatpush2.msra.mxu0 0.0
        %3246 = vmatprep.subr.mxu0 0.0
        %3247 = vmatpush2.msra.mxu0 0.0
        %3248 = vmatprep.subr.mxu0 0.0
        %3249 = vmatpush2.msra.mxu0 0.0
        %3250 = vmatprep.subr.mxu0 0.0
        %3251 = vmatpush2.msra.mxu0 0.0
        %3252 = vmatprep.subr.mxu0 0.0
        %3253 = vmatpush2.msra.mxu0 0.0
        %3254 = vmatprep.subr.mxu0 0.0
        %3255 = vmatpush2.msra.mxu0 0.0
        %3256 = vmatprep.subr.mxu0 0.0
        %3257 = vmatpush2.msra.mxu0 0.0
        %3258 = vmatprep.subr.mxu0 0.0
        %3259 = vmatpush2.msra.mxu0 0.0
        %3260 = vmatprep.subr.mxu0 0.0
        %3261 = vmatpush2.msra.mxu0 0.0
        %3262 = vmatprep.subr.mxu0 0.0
        %3263 = vmatpush2.msra.mxu0 0.0
        %3264 = vmatprep.subr.mxu0 0.0
        %3265 = vmatpush2.msra.mxu0 0.0
        %3266 = vmatprep.subr.mxu0 0.0
        %3267 = vmatpush2.msra.mxu0 0.0
        %3268 = vmatprep.subr.mxu0 0.0
        %3269 = vmatpush2.msra.mxu0 0.0
        %3270 = vmatprep.subr.mxu0 0.0
        %3271 = vmatpush2.msra.mxu0 0.0
        %3272 = vmatprep.subr.mxu0 0.0
        %3273 = vmatpush2.msra.mxu0 0.0
        %3274 = vmatprep.subr.mxu0 0.0
        %3275 = vmatpush2.msra.mxu0 0.0
        %3276 = vmatprep.mubr.f32.mxu0 0.0
        %3277 = vmatmul.mubr.f32.gmra.mxu0 %v3210
        %v3278 = vpop.f32.mrf.mxu0
        %v3279 = vadd.f32 0.0, %v3278
        %v3280 = vpop.f32.mrf.mxu0
        %3281 = vdwg.mxu0
        %v3284 = vunpack.c.l.s4 1966171168
        %v3285 = vunpack.c.0.s8 %v3284
        %v3286 = vlaneseq
        %v3287 = vshrl.u32 %v3286, 7
        %v3288 = vsub.s32 %v3285, %v3287
        %v3289 = vrot.slane %v3279, %v3288
        %v3290 = vcombine.high %v3289, %v3289
        %v3292 = vunpack.c.l.s4 1966171168
        %v3293 = vunpack.c.0.s8 %v3292
        %v3294 = vlaneseq
        %v3295 = vshrl.u32 %v3294, 7
        %v3296 = vsub.s32 %v3293, %v3295
        %v3297 = vrot.slane %v3289, %v3296
        %v3299 = vunpack.c.l.s4 1966171168
        %v3300 = vunpack.c.0.s8 %v3299
        %v3301 = vlaneseq
        %v3302 = vshrl.u32 %v3301, 7
        %v3303 = vsub.s32 %v3300, %v3302
        %v3304 = vrot.slane %v3290, %v3303
        %3307 = vst.msk [vmem:[%s233 + $0x1e] sm:$0x1] %vm441, %v3297
        %3308 = vst.msk [vmem:[%s233 + $0x3e] sm:$0x1] %vm441, %v3304
        %3309 = vst.msk [vmem:[%s233 + $0x1f] sm:$0x1] %vm441, %v3297
        %3310 = vst.msk [vmem:[%s233 + $0x3f] sm:$0x1] %vm441, %v3304
        %s3311 = sand.u32 %s134, 1
        %s3312 = scalar_lea.sflag [#allocation4], %s3311
        %s3313 = sand.u32 %s134, 1
        %s3314 = smul.addr %s3313, 64
        %s3315 = scalar_lea.vmem [#allocation5], %s3314
        // Predicated region
        $region41: #{upsample_modules_forward.1} parent=35 // pred_check
          %p3316 = pneg %p144
        $region42: #{upsample_modules_forward.1} parent=35 // pred_check_branch
          %3318 = sbr.rel (%p3316) target = $region44
        $region43: #{upsample_modules_forward.1} parent=35 // pred_region
          %s3319 = smul.u32 4, %s26
          %s3321 = ssub.s32 1024, 1024
          %3322 = vsyncadd %s3312, %s3321
          %s3323 = smul.addr %s25, 8
          %s3324 = sadd.s32 %s3319, %s3323
          %s3325 = smul.addr %s3324, 128
          %s3326 = scalar_lea.hbm %s4, %s3325
          %s3327 = sshll.u32 %s3315, 4
          %s3328 = int_to_ptr.vmem [resolvable:$true] %s3327
          %3333 = dma.vmem_to_hbm [thread:$0]  %s3328, 1024, %s3326, %s3312, 128, 128, 8
        $region44: #{upsample_modules_forward.1} parent=35 // pred_fallthru
          _
      $region36: #{upsample_modules_forward.1} parent=5 // pred_fallthru
        _
      %p3334 = scmp.le.s32.totalorder 2, %s16
      // Predicated region
      $region45: #{upsample_modules_forward.1} parent=5 // pred_check
        %p3335 = pneg %p3334
      $region46: #{upsample_modules_forward.1} parent=5 // pred_check_branch
        %3337 = sbr.rel (%p3335) target = $region48
      $region47: #{upsample_modules_forward.1} parent=5 // pred_region
        %s3338 = ssub.s32 %s16, 2
        // Predicated region
        $region49: #{upsample_modules_forward.1} parent=47 // pred_check
          %p3339 = pneg %p150
        $region50: #{upsample_modules_forward.1} parent=47 // pred_check_branch
          %3341 = sbr.rel (%p3339) target = $region52
        $region51: #{upsample_modules_forward.1} parent=47 // pred_region
          %s3342 = sand.u32 %s135, 1
          %s3343 = scalar_lea.sflag [#allocation4], %s3342
          %s3344 = sand.u32 %s135, 1
          %s3345 = smul.addr %s3344, 64
          %s3346 = scalar_lea.vmem [#allocation5], %s3345
          %3347 = dma.done %s3343, 1024
        $region52: #{upsample_modules_forward.1} parent=47 // pred_fallthru
          _
      $region48: #{upsample_modules_forward.1} parent=5 // pred_fallthru
        _
    $region6: #{upsample_modules_forward.1} parent=1 // loop_footer
      %s20 = sadd.s32 1, %s16
    $region7: #{upsample_modules_forward.1} parent=1 // loop_footer_branch
      %15 = sbr.rel target = $region3
    $region8: #{upsample_modules_forward.1} parent=1 // loop_exit
      _
    %3348 = vsyncpa [#allocation3], 1
    %s3349 = scalar_lea.sflag [#allocation3], 1
    %3350 = vsyncpa %s3349, 1
    %3351 = vsyncpa [#allocation4], 1
    %s3352 = scalar_lea.sflag [#allocation4], 1
    %3353 = vsyncpa %s3352, 1

</llo_original>
